<compile_context>
chip_gen: v5e
topology: v5e:2x2
jax: 0.10.0
libtpu: 0.0.40
codegen_flags: <defaults>
</compile_context>

<pallas_src>
import functools
import math

import jax
import jax.numpy as jnp
from jax import lax
from jax.experimental import pallas as pl
from jax.experimental.pallas import tpu as pltpu

_F32 = jnp.float32
_BF16 = jnp.bfloat16
_NEG = -1e30

_PARALLEL_1D = pltpu.CompilerParams(dimension_semantics=("parallel",))


def _round_up(x, m):
    return ((x + m - 1) // m) * m


def _row_tile(n):
    """Largest power-of-two row tile (<=512) dividing n; full block otherwise."""
    if n % 8 != 0:
        return n
    return math.gcd(n, 512)


def _tiled_spec(shape, tile, axis):
    blk = list(shape)
    blk[axis] = tile
    nd = len(shape)

    def imap(i, _axis=axis, _nd=nd):
        idx = [0] * _nd
        idx[_axis] = i
        return tuple(idx)

    return pl.BlockSpec(tuple(blk), imap)


def _rep_spec(shape):
    nd = len(shape)
    return pl.BlockSpec(tuple(shape), lambda i, _nd=nd: (0,) * _nd)


# --------------------------- in-kernel helpers --------------------------------

def _mm(x_f32, w_ref, b_ref):
    """bf16 MXU matmul with f32 accumulation:  x @ W + b."""
    return (jnp.dot(x_f32.astype(_BF16), w_ref[...],
                    preferred_element_type=_F32) + b_ref[...])


def _aggregate(get_k, get_v, q, cur_L, scale):
    """QIMIA bank aggregation for one row tile.

    Softmax over the first cur_L (static) layer slots of the key bank against
    the block's learned query, then a weighted sum of the value bank.
    TODO(synk): aggregation rule assumed (QIMIA_Sequential source unavailable).
    """
    logits = [jnp.sum(get_k(l) * q, axis=-1, keepdims=True) * scale
              for l in range(cur_L)]                          # each (RT, 1)
    m = logits[0]
    for c in logits[1:]:
        m = jnp.maximum(m, c)
    exps = [jnp.exp(c - m) for c in logits]
    denom = exps[0]
    for e in exps[1:]:
        denom = denom + e
    inv = pl.reciprocal(denom, approx=True)
    acc = (exps[0] * inv) * get_v(0)
    for l in range(1, cur_L):
        acc = acc + (exps[l] * inv) * get_v(l)
    return acc                                                # (RT, E) f32


# --------------------------- Pallas kernels ------------------------------------

def _init_embed_kernel(x_ref, wv_ref, bv_ref, wk_ref, bk_ref, v_ref, k_ref):
    # Patch embedding: shares one activation load for the value and key heads.
    x = x_ref[...]
    v_ref[...] = _mm(x, wv_ref, bv_ref)
    k_ref[...] = _mm(x, wk_ref, bk_ref)


def _linear_kernel(x_ref, w_ref, b_ref, o_ref):
    o_ref[...] = _mm(x_ref[...], w_ref, b_ref)


def _agg_linear_kernel(kbank_ref, vbank_ref, q_ref, w_ref, b_ref, o_ref, *,
                       cur_L, scale):
    # QIMIA aggregation fused with the following linear (classifier head L0).
    A = _aggregate(lambda l: kbank_ref[l], lambda l: vbank_ref[l],
                   q_ref[...], cur_L, scale)
    o_ref[...] = _mm(A, w_ref, b_ref)


def _attention_block_kernel(kbank_ref, vbank_ref, q_ref,
                            wqkv_ref, bqkv_ref, wo_ref, bo_ref,
                            ak_ref, wk_ref, bk_ref,
                            av_ref, wv_ref, bv_ref,
                            key_ref, val_ref, *,
                            cur_L, agg_scale, num_heads, head_dim,
                            seq_real, attn_scale, need_mask):
    """Whole AttentionBlock for one batch element, entirely in VMEM.

    aggregation -> QKV in-proj -> per-head softmax attention (padded keys
    masked) -> out-proj -> PReLU -> key/value output projections.
    """
    A = _aggregate(lambda l: kbank_ref[l, 0], lambda l: vbank_ref[l, 0],
                   q_ref[...], cur_L, agg_scale)              # (T_pad, E) f32
    qkv = _mm(A, wqkv_ref, bqkv_ref)                          # (T_pad, 3E) f32

    E = num_heads * head_dim
    t_pad = qkv.shape[0]
    if need_mask:
        col = lax.broadcasted_iota(jnp.int32, (t_pad, t_pad), 1)
        key_mask = jnp.where(col < seq_real, 0.0, _NEG).astype(_F32)

    outs = []
    for h in range(num_heads):                                # static lane slices
        lo = h * head_dim
        qh = qkv[:, lo:lo + head_dim].astype(_BF16)
        kh = qkv[:, E + lo:E + lo + head_dim].astype(_BF16)
        vh = qkv[:, 2 * E + lo:2 * E + lo + head_dim].astype(_BF16)
        s = lax.dot_general(qh, kh, (((1,), (1,)), ((), ())),
                            preferred_element_type=_F32) * attn_scale
        if need_mask:
            s = s + key_mask
        m = jnp.max(s, axis=-1, keepdims=True)
        p = jnp.exp(s - m)
        p = p * pl.reciprocal(jnp.sum(p, axis=-1, keepdims=True), approx=True)
        outs.append(jnp.dot(p.astype(_BF16), vh, preferred_element_type=_F32))
    o = jnp.concatenate(outs, axis=-1)                        # (T_pad, E)

    oo = _mm(o, wo_ref, bo_ref)                               # out-proj
    hk = jnp.where(oo >= 0.0, oo, oo * ak_ref[...])           # PReLU (f32 math)
    hv = jnp.where(oo >= 0.0, oo, oo * av_ref[...])
    key_ref[0] = _mm(hk, wk_ref, bk_ref)
    val_ref[0] = _mm(hv, wv_ref, bv_ref)


def _ff_block_kernel(kbank_ref, vbank_ref, q_ref, w0_ref, b0_ref,
                     va_ref, vb_ref, ka_ref, kb_ref,
                     wv_ref, bvv_ref, wk_ref, bkk_ref,
                     key_ref, val_ref, *, cur_L, scale):
    # Whole FF_Block fused: aggregation -> L0 -> PSeLU -> value/key projections.
    A = _aggregate(lambda l: kbank_ref[l], lambda l: vbank_ref[l],
                   q_ref[...], cur_L, scale)
    h = _mm(A, w0_ref, b0_ref)                                # (RT, F) f32
    hv = jax.nn.sigmoid(h * va_ref[...] + vb_ref[...]) * h    # PSeLU, f32 math
    hk = jax.nn.sigmoid(h * ka_ref[...] + kb_ref[...]) * h
    val_ref[...] = _mm(hv, wv_ref, bvv_ref)
    key_ref[...] = _mm(hk, wk_ref, bkk_ref)


# --------------------------- kernel wrappers ------------------------------------

def init_embed(xp, Wv, bv, Wk, bk):
    n, pd = xp.shape
    E, kd = Wv.shape[1], Wk.shape[1]
    t = _row_tile(n)
    return pl.pallas_call(
        _init_embed_kernel,
        grid=(n // t,),
        in_specs=[_tiled_spec((n, pd), t, 0),
                  _rep_spec((pd, E)), _rep_spec((1, E)),
                  _rep_spec((pd, kd)), _rep_spec((1, kd))],
        out_specs=(_tiled_spec((n, E), t, 0), _tiled_spec((n, kd), t, 0)),
        out_shape=(jax.ShapeDtypeStruct((n, E), _F32),
                   jax.ShapeDtypeStruct((n, kd), _F32)),
        compiler_params=_PARALLEL_1D,
    )(xp, Wv, bv.reshape(1, E), Wk, bk.reshape(1, kd))


def linear(x, w, b):
    n, din = x.shape
    dout = w.shape[1]
    t = _row_tile(n)
    return pl.pallas_call(
        _linear_kernel,
        grid=(n // t,),
        in_specs=[_tiled_spec((n, din), t, 0),
                  _rep_spec((din, dout)), _rep_spec((1, dout))],
        out_specs=_tiled_spec((n, dout), t, 0),
        out_shape=jax.ShapeDtypeStruct((n, dout), _F32),
        compiler_params=_PARALLEL_1D,
    )(x, w, b.reshape(1, dout))


def agg_linear(k_bank, v_bank, query, w, b, cur_L):
    """Bank aggregation fused with a linear layer (used by the classifier head)."""
    L_max, n, kd = k_bank.shape
    E = v_bank.shape[-1]
    dout = w.shape[1]
    t = _row_tile(n)
    kern = functools.partial(_agg_linear_kernel, cur_L=cur_L,
                             scale=1.0 / math.sqrt(kd))
    return pl.pallas_call(
        kern,
        grid=(n // t,),
        # Only the live cur_L layer slots are DMA'd (leading block dim).
        in_specs=[pl.BlockSpec((cur_L, t, kd), lambda i: (0, i, 0)),
                  pl.BlockSpec((cur_L, t, E), lambda i: (0, i, 0)),
                  _rep_spec((1, kd)),
                  _rep_spec((E, dout)), _rep_spec((1, dout))],
        out_specs=_tiled_spec((n, dout), t, 0),
        out_shape=jax.ShapeDtypeStruct((n, dout), _F32),
        compiler_params=_PARALLEL_1D,
    )(k_bank, v_bank, query.reshape(1, kd), w, b.reshape(1, dout))


def attention_block(k_bank, v_bank, query, p, cur_L, B, T_pad, T, num_heads):
    """One fused pallas_call for the whole AttentionBlock (grid over batch)."""
    L_max, N, kd = k_bank.shape
    E = v_bank.shape[-1]
    assert E % num_heads == 0
    dh = E // num_heads

    kb = k_bank.reshape(L_max, B, T_pad, kd)                  # free reshapes
    vb = v_bank.reshape(L_max, B, T_pad, E)

    kern = functools.partial(
        _attention_block_kernel,
        cur_L=cur_L, agg_scale=1.0 / math.sqrt(kd),
        num_heads=num_heads, head_dim=dh,
        seq_real=T, attn_scale=1.0 / math.sqrt(dh),
        need_mask=(T_pad > T))

    nkey, nval = pl.pallas_call(
        kern,
        grid=(B,),
        in_specs=[
            # live layer slots only; one batch element per grid step
            pl.BlockSpec((cur_L, 1, T_pad, kd), lambda b: (0, b, 0, 0)),
            pl.BlockSpec((cur_L, 1, T_pad, E), lambda b: (0, b, 0, 0)),
            _rep_spec((1, kd)),
            _rep_spec((E, 3 * E)), _rep_spec((1, 3 * E)),
            _rep_spec((E, E)), _rep_spec((1, E)),
            _rep_spec((1, E)), _rep_spec((E, kd)), _rep_spec((1, kd)),
            _rep_spec((1, E)), _rep_spec((E, E)), _rep_spec((1, E)),
        ],
        out_specs=(pl.BlockSpec((1, T_pad, kd), lambda b: (b, 0, 0)),
                   pl.BlockSpec((1, T_pad, E), lambda b: (b, 0, 0))),
        out_shape=(jax.ShapeDtypeStruct((B, T_pad, kd), _F32),
                   jax.ShapeDtypeStruct((B, T_pad, E), _F32)),
        compiler_params=_PARALLEL_1D,
    )(kb, vb, query.reshape(1, kd),
      p["Wqkv"], p["bqkv"].reshape(1, 3 * E),
      p["Wo"], p["bo"].reshape(1, E),
      p["key_act_a"].reshape(1, E), p["Wk_out"], p["bk_out"].reshape(1, kd),
      p["value_act_a"].reshape(1, E), p["Wv_out"], p["bv_out"].reshape(1, E))

    return nkey.reshape(N, kd), nval.reshape(N, E)            # free reshapes


def ff_block(k_bank, v_bank, query, p, cur_L):
    """One fused pallas_call for the whole FF_Block (row-tiled over tokens)."""
    L_max, n, kd = k_bank.shape
    E = v_bank.shape[-1]
    F = p["W0"].shape[1]
    t = _row_tile(n)
    kern = functools.partial(_ff_block_kernel, cur_L=cur_L,
                             scale=1.0 / math.sqrt(kd))
    return pl.pallas_call(
        kern,
        grid=(n // t,),
        in_specs=[pl.BlockSpec((cur_L, t, kd), lambda i: (0, i, 0)),
                  pl.BlockSpec((cur_L, t, E), lambda i: (0, i, 0)),
                  _rep_spec((1, kd)),
                  _rep_spec((E, F)), _rep_spec((1, F)),
                  _rep_spec((1, F)), _rep_spec((1, F)),
                  _rep_spec((1, F)), _rep_spec((1, F)),
                  _rep_spec((F, E)), _rep_spec((1, E)),
                  _rep_spec((F, kd)), _rep_spec((1, kd))],
        out_specs=(_tiled_spec((n, kd), t, 0), _tiled_spec((n, E), t, 0)),
        out_shape=(jax.ShapeDtypeStruct((n, kd), _F32),
                   jax.ShapeDtypeStruct((n, E), _F32)),
        compiler_params=_PARALLEL_1D,
    )(k_bank, v_bank, query.reshape(1, kd),
      p["W0"], p["b0"].reshape(1, F),
      p["v_a"].reshape(1, F), p["v_b"].reshape(1, F),
      p["k_a"].reshape(1, F), p["k_b"].reshape(1, F),
      p["Wv"], p["bv"].reshape(1, E),
      p["Wk"], p["bk"].reshape(1, kd))


# --------------------------- model forward --------------------------------------

def qimia_vit_forward(params, x, cfg):
    B, C, Himg, Wimg = x.shape
    ps = cfg["patch_size"]
    E = cfg["embed_dim"]
    kd = cfg["key_dim"]
    H = cfg["num_heads"]
    num_layers = cfg["num_layers"]

    P = (Himg // ps) * (Wimg // ps)
    T = P + 1
    T_pad = _round_up(T, 8)              # pad tokens once; padded keys masked in MHA
    N = B * T_pad
    L_max = 2 + 2 * num_layers
    patch_dim = C * ps * ps

    # chop_to_patches + reshape in the reference is a flat reinterpretation of
    # the contiguous NCHW buffer (no spatial permute) -> plain reshape.
    xp = x.reshape(B * P, patch_dim)

    init = params["init"]
    vals, keys = init_embed(xp, init["Wpv"], init["bpv"], init["Wpk"], init["bpk"])
    vals = vals.reshape(B, P, E)
    keys = keys.reshape(B, P, kd)

    # token 0 = cls token, tokens 1..P = patches, [T, T_pad) = zero padding.
    tok_v = jnp.zeros((B, T_pad, E), _F32)
    tok_v = tok_v.at[:, 0, :].set(jnp.broadcast_to(init["cls_v"].reshape(1, E), (B, E)))
    tok_v = tok_v.at[:, 1:T, :].set(vals)
    tok_k = jnp.zeros((B, T_pad, kd), _F32)
    tok_k = tok_k.at[:, 0, :].set(jnp.broadcast_to(init["cls_k"].reshape(1, kd), (B, kd)))
    tok_k = tok_k.at[:, 1:T, :].set(keys)

    pe_v = jnp.zeros((T_pad, E), _F32).at[:T].set(init["pos_v"][0, :T])
    pe_k = jnp.zeros((T_pad, kd), _F32).at[:T].set(init["pos_k"][0, :T])
    pe_v = jnp.broadcast_to(pe_v[None], (B, T_pad, E))
    pe_k = jnp.broadcast_to(pe_k[None], (B, T_pad, kd))

    # Preallocated layer-major banks (L_max, N, dim): in-place slot writes under
    # jit, no O(L^2) concatenation.  Unwritten slots are never read because the
    # aggregation kernels only DMA / loop over the first cur_L (static) slots.
    k_bank = jnp.zeros((L_max, N, kd), _F32)
    v_bank = jnp.zeros((L_max, N, E), _F32)
    k_bank = k_bank.at[0].set(tok_k.reshape(N, kd)).at[1].set(pe_k.reshape(N, kd))
    v_bank = v_bank.at[0].set(tok_v.reshape(N, E)).at[1].set(pe_v.reshape(N, E))

    cur_L = 2
    for lp in params["layers"]:
        # --- AttentionBlock: one fully fused kernel per layer ---
        nkey, nval = attention_block(k_bank, v_bank, lp["attn_query"],
                                     lp["attn"], cur_L, B, T_pad, T, H)
        k_bank = k_bank.at[cur_L].set(nkey)
        v_bank = v_bank.at[cur_L].set(nval)
        cur_L += 1

        # --- FF_Block: one fully fused kernel per layer ---
        nkey, nval = ff_block(k_bank, v_bank, lp["ff_query"], lp["ff"], cur_L)
        k_bank = k_bank.at[cur_L].set(nkey)
        v_bank = v_bank.at[cur_L].set(nval)
        cur_L += 1

    # VisionOutput: select the last *real* token per batch BEFORE aggregating.
    op = params["out"]
    k_last = k_bank.reshape(L_max, B, T_pad, kd)[:, :, T - 1, :]   # (L_max, B, kd)
    v_last = v_bank.reshape(L_max, B, T_pad, E)[:, :, T - 1, :]    # (L_max, B, E)
    h = agg_linear(k_last, v_last, op["query"], op["W0"], op["b0"], L_max)
    # TODO(synk): exact (erf) GELU applied in plain JAX between the two Pallas
    #             kernels (not relying on erf lowering inside Mosaic); output
    #             head is only (B, hidden) so this is negligible.
    h = jax.nn.gelu(h, approximate=False)
    return linear(h, op["W1"], op["b1"])


# --------------------------- parameter init --------------------------------------

def init_params(key, cfg):
    E, kd = cfg["embed_dim"], cfg["key_dim"]
    ps, img = cfg["patch_size"], cfg["image_size"]
    F, H0 = cfg["ff_hidden"], cfg["out_hidden"]
    C_out, num_layers = cfg["num_classes"], cfg["num_layers"]
    P = (img // ps) ** 2
    T = P + 1
    patch_dim = 3 * ps ** 2

    ks = iter(jax.random.split(key, 16 + 16 * num_layers))
    nk = lambda: next(ks)

    def dense(din, dout):                      # weights stored bf16 for the MXU
        return (0.02 * jax.random.normal(nk(), (din, dout), _F32)).astype(_BF16)

    def zeros(d):
        return jnp.zeros((d,), _F32)

    params = {
        "init": {
            "Wpv": dense(patch_dim, E), "bpv": zeros(E),
            "Wpk": dense(patch_dim, kd), "bpk": zeros(kd),
            "pos_v": jax.random.normal(nk(), (1, T, E), _F32),
            "pos_k": jax.random.normal(nk(), (1, T, kd), _F32),
            "cls_v": jax.random.normal(nk(), (1, 1, E), _F32),
            "cls_k": jax.random.normal(nk(), (1, 1, kd), _F32),
        },
        "layers": [],
    }
    for _ in range(num_layers):
        attn = {
            "Wqkv": dense(E, 3 * E), "bqkv": zeros(3 * E),     # fused in-proj
            "Wo": dense(E, E), "bo": zeros(E),
            "key_act_a": jnp.full((E,), 0.25, _F32),           # nn.PReLU init
            "Wk_out": dense(E, kd), "bk_out": zeros(kd),
            "value_act_a": jnp.full((E,), 0.25, _F32),
            "Wv_out": dense(E, E), "bv_out": zeros(E),
        }
        ff = {
            "W0": dense(E, F), "b0": zeros(F),
            "v_a": jnp.ones((F,), _F32), "v_b": jnp.zeros((F,), _F32),   # PSeLU
            "k_a": jnp.ones((F,), _F32), "k_b": jnp.zeros((F,), _F32),
            "Wv": dense(F, E), "bv": zeros(E),
            "Wk": dense(F, kd), "bk": zeros(kd),
        }
        params["layers"].append({
            "attn_query": jax.random.normal(nk(), (kd,), _F32),
            "attn": attn,
            "ff_query": jax.random.normal(nk(), (kd,), _F32),
            "ff": ff,
        })
    params["out"] = {
        "query": jax.random.normal(nk(), (kd,), _F32),
        "W0": dense(E, H0), "b0": zeros(H0),
        "W1": dense(H0, C_out), "b1": zeros(C_out),
    }
    return params


# --------------------------- demo -------------------------------------------------

if __name__ == "__main__":
    root = jax.random.PRNGKey(0)
    pkey, xkey = jax.random.split(root)

    cfg = dict(
        image_size=16, patch_size=8,          # 4 patches -> 5 tokens
        embed_dim=32, key_dim=16,
        num_heads=4, num_layers=2,
        ff_hidden=64, out_hidden=64, num_classes=10,
    )
    B, C = 2, 3                               # module fixes patch_dim = 3 * ps**2

    params = init_params(pkey, cfg)
    x = jax.random.normal(xkey, (B, C, cfg["image_size"], cfg["image_size"]), _F32)

    fwd = jax.jit(lambda p, inp: qimia_vit_forward(p, inp, cfg))
    out = jax.block_until_ready(fwd(params, x))
    assert out.shape == (B, cfg["num_classes"]), out.shape
    print("KERNEL_OK")
</pallas_src>

<mosaic_0001>
module attributes {stable_mosaic.version = 11 : i64} {
  func.func @_init_embed_kernel(%arg0: i32, %arg1: memref<8x192xf32, #tpu.memory_space<vmem>>, %arg2: memref<192x32xbf16, #tpu.memory_space<vmem>>, %arg3: memref<1x32xf32, #tpu.memory_space<vmem>>, %arg4: memref<192x16xbf16, #tpu.memory_space<vmem>>, %arg5: memref<1x16xf32, #tpu.memory_space<vmem>>, %arg6: memref<8x32xf32, #tpu.memory_space<vmem>>, %arg7: memref<8x16xf32, #tpu.memory_space<vmem>>) attributes {dimension_semantics = [#tpu.dimension_semantics<parallel>], iteration_bounds = array<i64: 1>, scalar_prefetch = 0 : i64, scratch_operands = 0 : i64, tpu.core_type = #tpu.core_type<tc>, window_params = [{transform_indices = @transform_0, window_bounds = array<i64: 8, 192>}, {pipeline_mode = #tpu.pipeline_mode<synchronous>, transform_indices = @transform_1, window_bounds = array<i64: 192, 32>}, {pipeline_mode = #tpu.pipeline_mode<synchronous>, transform_indices = @transform_2, window_bounds = array<i64: 1, 32>}, {pipeline_mode = #tpu.pipeline_mode<synchronous>, transform_indices = @transform_3, window_bounds = array<i64: 192, 16>}, {pipeline_mode = #tpu.pipeline_mode<synchronous>, transform_indices = @transform_4, window_bounds = array<i64: 1, 16>}, {transform_indices = @transform_5, window_bounds = array<i64: 8, 32>}, {transform_indices = @transform_6, window_bounds = array<i64: 8, 16>}]} {
    %c0 = arith.constant 0 : index
    %c0_0 = arith.constant 0 : index
    %0 = vector.load %arg1[%c0, %c0_0] : memref<8x192xf32, #tpu.memory_space<vmem>>, vector<8x192xf32>
    %1 = arith.truncf %0 : vector<8x192xf32> to vector<8x192xbf16>
    %c0_1 = arith.constant 0 : index
    %c0_2 = arith.constant 0 : index
    %2 = vector.load %arg2[%c0_1, %c0_2] : memref<192x32xbf16, #tpu.memory_space<vmem>>, vector<192x32xbf16>
    %cst = arith.constant dense<0.000000e+00> : vector<8x32xf32>
    %3 = tpu.matmul %1, %2, %cst {dimension_numbers = #tpu.dot_dimension_numbers<[1], [0], [0], [1], [0, 0, 1, 1], [], []>} : vector<8x192xbf16>, vector<192x32xbf16>, vector<8x32xf32> -> vector<8x32xf32>
    %c0_3 = arith.constant 0 : index
    %c0_4 = arith.constant 0 : index
    %4 = vector.load %arg3[%c0_3, %c0_4] : memref<1x32xf32, #tpu.memory_space<vmem>>, vector<1x32xf32>
    %5 = vector.broadcast %4 : vector<1x32xf32> to vector<8x32xf32>
    %6 = arith.addf %3, %5 : vector<8x32xf32>
    %c0_5 = arith.constant 0 : index
    %c0_6 = arith.constant 0 : index
    %7 = vector.load %arg6[%c0_5, %c0_6] : memref<8x32xf32, #tpu.memory_space<vmem>>, vector<8x32xf32>
    tpu.vector_store %arg6[%c0_5, %c0_6], %6 {strides = array<i32>} : memref<8x32xf32, #tpu.memory_space<vmem>>, vector<8x32xf32>,
    %8 = arith.truncf %0 : vector<8x192xf32> to vector<8x192xbf16>
    %c0_7 = arith.constant 0 : index
    %c0_8 = arith.constant 0 : index
    %9 = vector.load %arg4[%c0_7, %c0_8] : memref<192x16xbf16, #tpu.memory_space<vmem>>, vector<192x16xbf16>
    %cst_9 = arith.constant dense<0.000000e+00> : vector<8x16xf32>
    %10 = tpu.matmul %8, %9, %cst_9 {dimension_numbers = #tpu.dot_dimension_numbers<[1], [0], [0], [1], [0, 0, 1, 1], [], []>} : vector<8x192xbf16>, vector<192x16xbf16>, vector<8x16xf32> -> vector<8x16xf32>
    %c0_10 = arith.constant 0 : index
    %c0_11 = arith.constant 0 : index
    %11 = vector.load %arg5[%c0_10, %c0_11] : memref<1x16xf32, #tpu.memory_space<vmem>>, vector<1x16xf32>
    %12 = vector.broadcast %11 : vector<1x16xf32> to vector<8x16xf32>
    %13 = arith.addf %10, %12 : vector<8x16xf32>
    %c0_12 = arith.constant 0 : index
    %c0_13 = arith.constant 0 : index
    %14 = vector.load %arg7[%c0_12, %c0_13] : memref<8x16xf32, #tpu.memory_space<vmem>>, vector<8x16xf32>
    tpu.vector_store %arg7[%c0_12, %c0_13], %13 {strides = array<i32>} : memref<8x16xf32, #tpu.memory_space<vmem>>, vector<8x16xf32>,
    return
  }
  func.func @transform_0(%arg0: i32) -> (i32, i32) {
    %c0_i32 = arith.constant 0 : i32
    %c0_i32_0 = arith.constant 0 : i32
    return %arg0, %c0_i32 : i32, i32
  }
  func.func @transform_1(%arg0: i32) -> (i32, i32) {
    %c0_i32 = arith.constant 0 : i32
    %c0_i32_0 = arith.constant 0 : i32
    %c0_i32_1 = arith.constant 0 : i32
    return %c0_i32, %c0_i32_0 : i32, i32
  }
  func.func @transform_2(%arg0: i32) -> (i32, i32) {
    %c0_i32 = arith.constant 0 : i32
    %c0_i32_0 = arith.constant 0 : i32
    %c0_i32_1 = arith.constant 0 : i32
    return %c0_i32, %c0_i32_0 : i32, i32
  }
  func.func @transform_3(%arg0: i32) -> (i32, i32) {
    %c0_i32 = arith.constant 0 : i32
    %c0_i32_0 = arith.constant 0 : i32
    %c0_i32_1 = arith.constant 0 : i32
    return %c0_i32, %c0_i32_0 : i32, i32
  }
  func.func @transform_4(%arg0: i32) -> (i32, i32) {
    %c0_i32 = arith.constant 0 : i32
    %c0_i32_0 = arith.constant 0 : i32
    %c0_i32_1 = arith.constant 0 : i32
    return %c0_i32, %c0_i32_0 : i32, i32
  }
  func.func @transform_5(%arg0: i32) -> (i32, i32) {
    %c0_i32 = arith.constant 0 : i32
    %c0_i32_0 = arith.constant 0 : i32
    return %arg0, %c0_i32 : i32, i32
  }
  func.func @transform_6(%arg0: i32) -> (i32, i32) {
    %c0_i32 = arith.constant 0 : i32
    %c0_i32_0 = arith.constant 0 : i32
    return %arg0, %c0_i32 : i32, i32
  }
}

module attributes {stable_mosaic.version = 11 : i64} {
  func.func @_attention_block_kernel(%arg0: i32, %arg1: memref<2x1x8x16xf32, #tpu.memory_space<vmem>>, %arg2: memref<2x1x8x32xf32, #tpu.memory_space<vmem>>, %arg3: memref<1x16xf32, #tpu.memory_space<vmem>>, %arg4: memref<32x96xbf16, #tpu.memory_space<vmem>>, %arg5: memref<1x96xf32, #tpu.memory_space<vmem>>, %arg6: memref<32x32xbf16, #tpu.memory_space<vmem>>, %arg7: memref<1x32xf32, #tpu.memory_space<vmem>>, %arg8: memref<1x32xf32, #tpu.memory_space<vmem>>, %arg9: memref<32x16xbf16, #tpu.memory_space<vmem>>, %arg10: memref<1x16xf32, #tpu.memory_space<vmem>>, %arg11: memref<1x32xf32, #tpu.memory_space<vmem>>, %arg12: memref<32x32xbf16, #tpu.memory_space<vmem>>, %arg13: memref<1x32xf32, #tpu.memory_space<vmem>>, %arg14: memref<1x8x16xf32, #tpu.memory_space<vmem>>, %arg15: memref<1x8x32xf32, #tpu.memory_space<vmem>>) attributes {dimension_semantics = [#tpu.dimension_semantics<parallel>], iteration_bounds = array<i64: 2>, scalar_prefetch = 0 : i64, scratch_operands = 0 : i64, tpu.core_type = #tpu.core_type<tc>, window_params = [{transform_indices = @transform_0, window_bounds = array<i64: 2, 1, 8, 16>}, {transform_indices = @transform_1, window_bounds = array<i64: 2, 1, 8, 32>}, {pipeline_mode = #tpu.pipeline_mode<synchronous>, transform_indices = @transform_2, window_bounds = array<i64: 1, 16>}, {pipeline_mode = #tpu.pipeline_mode<synchronous>, transform_indices = @transform_3, window_bounds = array<i64: 32, 96>}, {pipeline_mode = #tpu.pipeline_mode<synchronous>, transform_indices = @transform_4, window_bounds = array<i64: 1, 96>}, {pipeline_mode = #tpu.pipeline_mode<synchronous>, transform_indices = @transform_5, window_bounds = array<i64: 32, 32>}, {pipeline_mode = #tpu.pipeline_mode<synchronous>, transform_indices = @transform_6, window_bounds = array<i64: 1, 32>}, {pipeline_mode = #tpu.pipeline_mode<synchronous>, transform_indices = @transform_7, window_bounds = array<i64: 1, 32>}, {pipeline_mode = #tpu.pipeline_mode<synchronous>, transform_indices = @transform_8, window_bounds = array<i64: 32, 16>}, {pipeline_mode = #tpu.pipeline_mode<synchronous>, transform_indices = @transform_9, window_bounds = array<i64: 1, 16>}, {pipeline_mode = #tpu.pipeline_mode<synchronous>, transform_indices = @transform_10, window_bounds = array<i64: 1, 32>}, {pipeline_mode = #tpu.pipeline_mode<synchronous>, transform_indices = @transform_11, window_bounds = array<i64: 32, 32>}, {pipeline_mode = #tpu.pipeline_mode<synchronous>, transform_indices = @transform_12, window_bounds = array<i64: 1, 32>}, {transform_indices = @transform_13, window_bounds = array<i64: 1, 8, 16>}, {transform_indices = @transform_14, window_bounds = array<i64: 1, 8, 32>}]} {
    %c0 = arith.constant 0 : index
    %c0_0 = arith.constant 0 : index
    %0 = vector.load %arg3[%c0, %c0_0] : memref<1x16xf32, #tpu.memory_space<vmem>>, vector<1x16xf32>
    %c0_1 = arith.constant 0 : index
    %c0_2 = arith.constant 0 : index
    %c0_3 = arith.constant 0 : index
    %c0_4 = arith.constant 0 : index
    %1 = vector.load %arg1[%c0_1, %c0_2, %c0_3, %c0_4] : memref<2x1x8x16xf32, #tpu.memory_space<vmem>>, vector<1x1x8x16xf32>
    %2 = vector.shape_cast %1 : vector<1x1x8x16xf32> to vector<8x16xf32>
    %3 = vector.broadcast %0 : vector<1x16xf32> to vector<8x16xf32>
    %4 = arith.mulf %2, %3 : vector<8x16xf32>
    %cst = arith.constant dense<0.000000e+00> : vector<8xf32>
    %5 = vector.multi_reduction <add>, %4, %cst [1] : vector<8x16xf32> to vector<8xf32>
    %6 = vector.shape_cast %5 : vector<8xf32> to vector<8x1xf32>
    %cst_5 = arith.constant 2.500000e-01 : f32
    %7 = vector.broadcast %cst_5 : f32 to vector<8x1xf32>
    %8 = arith.mulf %6, %7 : vector<8x1xf32>
    %c1 = arith.constant 1 : index
    %c0_6 = arith.constant 0 : index
    %c0_7 = arith.constant 0 : index
    %c0_8 = arith.constant 0 : index
    %9 = vector.load %arg1[%c1, %c0_6, %c0_7, %c0_8] : memref<2x1x8x16xf32, #tpu.memory_space<vmem>>, vector<1x1x8x16xf32>
    %10 = vector.shape_cast %9 : vector<1x1x8x16xf32> to vector<8x16xf32>
    %11 = vector.broadcast %0 : vector<1x16xf32> to vector<8x16xf32>
    %12 = arith.mulf %10, %11 : vector<8x16xf32>
    %cst_9 = arith.constant dense<0.000000e+00> : vector<8xf32>
    %13 = vector.multi_reduction <add>, %12, %cst_9 [1] : vector<8x16xf32> to vector<8xf32>
    %14 = vector.shape_cast %13 : vector<8xf32> to vector<8x1xf32>
    %cst_10 = arith.constant 2.500000e-01 : f32
    %15 = vector.broadcast %cst_10 : f32 to vector<8x1xf32>
    %16 = arith.mulf %14, %15 : vector<8x1xf32>
    %17 = arith.maximumf %8, %16 : vector<8x1xf32>
    %18 = arith.subf %8, %17 : vector<8x1xf32>
    %19 = math.exp %18 : vector<8x1xf32>
    %20 = arith.subf %16, %17 : vector<8x1xf32>
    %21 = math.exp %20 : vector<8x1xf32>
    %22 = arith.addf %19, %21 : vector<8x1xf32>
    %23 = tpu.reciprocal %22 {approx = true} : vector<8x1xf32> -> vector<8x1xf32>
    %24 = arith.mulf %19, %23 : vector<8x1xf32>
    %c0_11 = arith.constant 0 : index
    %c0_12 = arith.constant 0 : index
    %c0_13 = arith.constant 0 : index
    %c0_14 = arith.constant 0 : index
    %25 = vector.load %arg2[%c0_11, %c0_12, %c0_13, %c0_14] : memref<2x1x8x32xf32, #tpu.memory_space<vmem>>, vector<1x1x8x32xf32>
    %26 = vector.shape_cast %25 : vector<1x1x8x32xf32> to vector<8x32xf32>
    %27 = vector.broadcast %24 : vector<8x1xf32> to vector<8x32xf32>
    %28 = arith.mulf %27, %26 : vector<8x32xf32>
    %29 = arith.mulf %21, %23 : vector<8x1xf32>
    %c1_15 = arith.constant 1 : index
    %c0_16 = arith.constant 0 : index
    %c0_17 = arith.constant 0 : index
    %c0_18 = arith.constant 0 : index
    %30 = vector.load %arg2[%c1_15, %c0_16, %c0_17, %c0_18] : memref<2x1x8x32xf32, #tpu.memory_space<vmem>>, vector<1x1x8x32xf32>
    %31 = vector.shape_cast %30 : vector<1x1x8x32xf32> to vector<8x32xf32>
    %32 = vector.broadcast %29 : vector<8x1xf32> to vector<8x32xf32>
    %33 = arith.mulf %32, %31 : vector<8x32xf32>
    %34 = arith.addf %28, %33 : vector<8x32xf32>
    %35 = arith.truncf %34 : vector<8x32xf32> to vector<8x32xbf16>
    %c0_19 = arith.constant 0 : index
    %c0_20 = arith.constant 0 : index
    %36 = vector.load %arg4[%c0_19, %c0_20] : memref<32x96xbf16, #tpu.memory_space<vmem>>, vector<32x96xbf16>
    %cst_21 = arith.constant dense<0.000000e+00> : vector<8x96xf32>
    %37 = tpu.matmul %35, %36, %cst_21 {dimension_numbers = #tpu.dot_dimension_numbers<[1], [0], [0], [1], [0, 0, 1, 1], [], []>} : vector<8x32xbf16>, vector<32x96xbf16>, vector<8x96xf32> -> vector<8x96xf32>
    %c0_22 = arith.constant 0 : index
    %c0_23 = arith.constant 0 : index
    %38 = vector.load %arg5[%c0_22, %c0_23] : memref<1x96xf32, #tpu.memory_space<vmem>>, vector<1x96xf32>
    %39 = vector.broadcast %38 : vector<1x96xf32> to vector<8x96xf32>
    %40 = arith.addf %37, %39 : vector<8x96xf32>
    %41 = tpu.iota {dimensions = array<i32: 1>} : vector<8x8xi32>
    %c5_i32 = arith.constant 5 : i32
    %42 = vector.broadcast %c5_i32 : i32 to vector<8x8xi32>
    %43 = arith.cmpi slt, %41, %42 : vector<8x8xi32>
    %cst_24 = arith.constant 0.000000e+00 : f32
    %cst_25 = arith.constant -1.000000e+30 : f32
    %44 = vector.broadcast %cst_24 : f32 to vector<8x8xf32>
    %45 = vector.broadcast %cst_25 : f32 to vector<8x8xf32>
    %46 = arith.select %43, %44, %45 : vector<8x8xi1>, vector<8x8xf32>
    %47 = vector.extract_strided_slice %40 {offsets = [0, 0], sizes = [8, 8], strides = [1, 1]} : vector<8x96xf32> to vector<8x8xf32>
    %48 = arith.truncf %47 : vector<8x8xf32> to vector<8x8xbf16>
    %49 = vector.extract_strided_slice %40 {offsets = [0, 32], sizes = [8, 8], strides = [1, 1]} : vector<8x96xf32> to vector<8x8xf32>
    %50 = arith.truncf %49 : vector<8x8xf32> to vector<8x8xbf16>
    %51 = vector.extract_strided_slice %40 {offsets = [0, 64], sizes = [8, 8], strides = [1, 1]} : vector<8x96xf32> to vector<8x8xf32>
    %52 = arith.truncf %51 : vector<8x8xf32> to vector<8x8xbf16>
    %cst_26 = arith.constant dense<0.000000e+00> : vector<8x8xf32>
    %53 = tpu.matmul %48, %50, %cst_26 {dimension_numbers = #tpu.dot_dimension_numbers<[1], [1], [0], [0], [0, 0, 1, 0], [], []>} : vector<8x8xbf16>, vector<8x8xbf16>, vector<8x8xf32> -> vector<8x8xf32>
    %cst_27 = arith.constant 0.353553385 : f32
    %54 = vector.broadcast %cst_27 : f32 to vector<8x8xf32>
    %55 = arith.mulf %53, %54 : vector<8x8xf32>
    %56 = arith.addf %55, %46 : vector<8x8xf32>
    %cst_28 = arith.constant dense<0xFF800000> : vector<8xf32>
    %57 = vector.multi_reduction <maximumf>, %56, %cst_28 [1] : vector<8x8xf32> to vector<8xf32>
    %58 = vector.shape_cast %57 : vector<8xf32> to vector<8x1xf32>
    %59 = vector.broadcast %58 : vector<8x1xf32> to vector<8x8xf32>
    %60 = arith.subf %56, %59 : vector<8x8xf32>
    %61 = math.exp %60 : vector<8x8xf32>
    %cst_29 = arith.constant dense<0.000000e+00> : vector<8xf32>
    %62 = vector.multi_reduction <add>, %61, %cst_29 [1] : vector<8x8xf32> to vector<8xf32>
    %63 = vector.shape_cast %62 : vector<8xf32> to vector<8x1xf32>
    %64 = tpu.reciprocal %63 {approx = true} : vector<8x1xf32> -> vector<8x1xf32>
    %65 = vector.broadcast %64 : vector<8x1xf32> to vector<8x8xf32>
    %66 = arith.mulf %61, %65 : vector<8x8xf32>
    %67 = arith.truncf %66 : vector<8x8xf32> to vector<8x8xbf16>
    %cst_30 = arith.constant dense<0.000000e+00> : vector<8x8xf32>
    %68 = tpu.matmul %67, %52, %cst_30 {dimension_numbers = #tpu.dot_dimension_numbers<[1], [0], [0], [1], [0, 0, 1, 1], [], []>} : vector<8x8xbf16>, vector<8x8xbf16>, vector<8x8xf32> -> vector<8x8xf32>
    %69 = vector.extract_strided_slice %40 {offsets = [0, 8], sizes = [8, 8], strides = [1, 1]} : vector<8x96xf32> to vector<8x8xf32>
    %70 = arith.truncf %69 : vector<8x8xf32> to vector<8x8xbf16>
    %71 = vector.extract_strided_slice %40 {offsets = [0, 40], sizes = [8, 8], strides = [1, 1]} : vector<8x96xf32> to vector<8x8xf32>
    %72 = arith.truncf %71 : vector<8x8xf32> to vector<8x8xbf16>
    %73 = vector.extract_strided_slice %40 {offsets = [0, 72], sizes = [8, 8], strides = [1, 1]} : vector<8x96xf32> to vector<8x8xf32>
    %74 = arith.truncf %73 : vector<8x8xf32> to vector<8x8xbf16>
    %cst_31 = arith.constant dense<0.000000e+00> : vector<8x8xf32>
    %75 = tpu.matmul %70, %72, %cst_31 {dimension_numbers = #tpu.dot_dimension_numbers<[1], [1], [0], [0], [0, 0, 1, 0], [], []>} : vector<8x8xbf16>, vector<8x8xbf16>, vector<8x8xf32> -> vector<8x8xf32>
    %cst_32 = arith.constant 0.353553385 : f32
    %76 = vector.broadcast %cst_32 : f32 to vector<8x8xf32>
    %77 = arith.mulf %75, %76 : vector<8x8xf32>
    %78 = arith.addf %77, %46 : vector<8x8xf32>
    %cst_33 = arith.constant dense<0xFF800000> : vector<8xf32>
    %79 = vector.multi_reduction <maximumf>, %78, %cst_33 [1] : vector<8x8xf32> to vector<8xf32>
    %80 = vector.shape_cast %79 : vector<8xf32> to vector<8x1xf32>
    %81 = vector.broadcast %80 : vector<8x1xf32> to vector<8x8xf32>
    %82 = arith.subf %78, %81 : vector<8x8xf32>
    %83 = math.exp %82 : vector<8x8xf32>
    %cst_34 = arith.constant dense<0.000000e+00> : vector<8xf32>
    %84 = vector.multi_reduction <add>, %83, %cst_34 [1] : vector<8x8xf32> to vector<8xf32>
    %85 = vector.shape_cast %84 : vector<8xf32> to vector<8x1xf32>
    %86 = tpu.reciprocal %85 {approx = true} : vector<8x1xf32> -> vector<8x1xf32>
    %87 = vector.broadcast %86 : vector<8x1xf32> to vector<8x8xf32>
    %88 = arith.mulf %83, %87 : vector<8x8xf32>
    %89 = arith.truncf %88 : vector<8x8xf32> to vector<8x8xbf16>
    %cst_35 = arith.constant dense<0.000000e+00> : vector<8x8xf32>
    %90 = tpu.matmul %89, %74, %cst_35 {dimension_numbers = #tpu.dot_dimension_numbers<[1], [0], [0], [1], [0, 0, 1, 1], [], []>} : vector<8x8xbf16>, vector<8x8xbf16>, vector<8x8xf32> -> vector<8x8xf32>
    %91 = vector.extract_strided_slice %40 {offsets = [0, 16], sizes = [8, 8], strides = [1, 1]} : vector<8x96xf32> to vector<8x8xf32>
    %92 = arith.truncf %91 : vector<8x8xf32> to vector<8x8xbf16>
    %93 = vector.extract_strided_slice %40 {offsets = [0, 48], sizes = [8, 8], strides = [1, 1]} : vector<8x96xf32> to vector<8x8xf32>
    %94 = arith.truncf %93 : vector<8x8xf32> to vector<8x8xbf16>
    %95 = vector.extract_strided_slice %40 {offsets = [0, 80], sizes = [8, 8], strides = [1, 1]} : vector<8x96xf32> to vector<8x8xf32>
    %96 = arith.truncf %95 : vector<8x8xf32> to vector<8x8xbf16>
    %cst_36 = arith.constant dense<0.000000e+00> : vector<8x8xf32>
    %97 = tpu.matmul %92, %94, %cst_36 {dimension_numbers = #tpu.dot_dimension_numbers<[1], [1], [0], [0], [0, 0, 1, 0], [], []>} : vector<8x8xbf16>, vector<8x8xbf16>, vector<8x8xf32> -> vector<8x8xf32>
    %cst_37 = arith.constant 0.353553385 : f32
    %98 = vector.broadcast %cst_37 : f32 to vector<8x8xf32>
    %99 = arith.mulf %97, %98 : vector<8x8xf32>
    %100 = arith.addf %99, %46 : vector<8x8xf32>
    %cst_38 = arith.constant dense<0xFF800000> : vector<8xf32>
    %101 = vector.multi_reduction <maximumf>, %100, %cst_38 [1] : vector<8x8xf32> to vector<8xf32>
    %102 = vector.shape_cast %101 : vector<8xf32> to vector<8x1xf32>
    %103 = vector.broadcast %102 : vector<8x1xf32> to vector<8x8xf32>
    %104 = arith.subf %100, %103 : vector<8x8xf32>
    %105 = math.exp %104 : vector<8x8xf32>
    %cst_39 = arith.constant dense<0.000000e+00> : vector<8xf32>
    %106 = vector.multi_reduction <add>, %105, %cst_39 [1] : vector<8x8xf32> to vector<8xf32>
    %107 = vector.shape_cast %106 : vector<8xf32> to vector<8x1xf32>
    %108 = tpu.reciprocal %107 {approx = true} : vector<8x1xf32> -> vector<8x1xf32>
    %109 = vector.broadcast %108 : vector<8x1xf32> to vector<8x8xf32>
    %110 = arith.mulf %105, %109 : vector<8x8xf32>
    %111 = arith.truncf %110 : vector<8x8xf32> to vector<8x8xbf16>
    %cst_40 = arith.constant dense<0.000000e+00> : vector<8x8xf32>
    %112 = tpu.matmul %111, %96, %cst_40 {dimension_numbers = #tpu.dot_dimension_numbers<[1], [0], [0], [1], [0, 0, 1, 1], [], []>} : vector<8x8xbf16>, vector<8x8xbf16>, vector<8x8xf32> -> vector<8x8xf32>
    %113 = vector.extract_strided_slice %40 {offsets = [0, 24], sizes = [8, 8], strides = [1, 1]} : vector<8x96xf32> to vector<8x8xf32>
    %114 = arith.truncf %113 : vector<8x8xf32> to vector<8x8xbf16>
    %115 = vector.extract_strided_slice %40 {offsets = [0, 56], sizes = [8, 8], strides = [1, 1]} : vector<8x96xf32> to vector<8x8xf32>
    %116 = arith.truncf %115 : vector<8x8xf32> to vector<8x8xbf16>
    %117 = vector.extract_strided_slice %40 {offsets = [0, 88], sizes = [8, 8], strides = [1, 1]} : vector<8x96xf32> to vector<8x8xf32>
    %118 = arith.truncf %117 : vector<8x8xf32> to vector<8x8xbf16>
    %cst_41 = arith.constant dense<0.000000e+00> : vector<8x8xf32>
    %119 = tpu.matmul %114, %116, %cst_41 {dimension_numbers = #tpu.dot_dimension_numbers<[1], [1], [0], [0], [0, 0, 1, 0], [], []>} : vector<8x8xbf16>, vector<8x8xbf16>, vector<8x8xf32> -> vector<8x8xf32>
    %cst_42 = arith.constant 0.353553385 : f32
    %120 = vector.broadcast %cst_42 : f32 to vector<8x8xf32>
    %121 = arith.mulf %119, %120 : vector<8x8xf32>
    %122 = arith.addf %121, %46 : vector<8x8xf32>
    %cst_43 = arith.constant dense<0xFF800000> : vector<8xf32>
    %123 = vector.multi_reduction <maximumf>, %122, %cst_43 [1] : vector<8x8xf32> to vector<8xf32>
    %124 = vector.shape_cast %123 : vector<8xf32> to vector<8x1xf32>
    %125 = vector.broadcast %124 : vector<8x1xf32> to vector<8x8xf32>
    %126 = arith.subf %122, %125 : vector<8x8xf32>
    %127 = math.exp %126 : vector<8x8xf32>
    %cst_44 = arith.constant dense<0.000000e+00> : vector<8xf32>
    %128 = vector.multi_reduction <add>, %127, %cst_44 [1] : vector<8x8xf32> to vector<8xf32>
    %129 = vector.shape_cast %128 : vector<8xf32> to vector<8x1xf32>
    %130 = tpu.reciprocal %129 {approx = true} : vector<8x1xf32> -> vector<8x1xf32>
    %131 = vector.broadcast %130 : vector<8x1xf32> to vector<8x8xf32>
    %132 = arith.mulf %127, %131 : vector<8x8xf32>
    %133 = arith.truncf %132 : vector<8x8xf32> to vector<8x8xbf16>
    %cst_45 = arith.constant dense<0.000000e+00> : vector<8x8xf32>
    %134 = tpu.matmul %133, %118, %cst_45 {dimension_numbers = #tpu.dot_dimension_numbers<[1], [0], [0], [1], [0, 0, 1, 1], [], []>} : vector<8x8xbf16>, vector<8x8xbf16>, vector<8x8xf32> -> vector<8x8xf32>
    %135 = tpu.concatenate %68, %90, %112, %134 in 1 : vector<8x8xf32>, vector<8x8xf32>, vector<8x8xf32>, vector<8x8xf32> -> vector<8x32xf32>
    %136 = arith.truncf %135 : vector<8x32xf32> to vector<8x32xbf16>
    %c0_46 = arith.constant 0 : index
    %c0_47 = arith.constant 0 : index
    %137 = vector.load %arg6[%c0_46, %c0_47] : memref<32x32xbf16, #tpu.memory_space<vmem>>, vector<32x32xbf16>
    %cst_48 = arith.constant dense<0.000000e+00> : vector<8x32xf32>
    %138 = tpu.matmul %136, %137, %cst_48 {dimension_numbers = #tpu.dot_dimension_numbers<[1], [0], [0], [1], [0, 0, 1, 1], [], []>} : vector<8x32xbf16>, vector<32x32xbf16>, vector<8x32xf32> -> vector<8x32xf32>
    %c0_49 = arith.constant 0 : index
    %c0_50 = arith.constant 0 : index
    %139 = vector.load %arg7[%c0_49, %c0_50] : memref<1x32xf32, #tpu.memory_space<vmem>>, vector<1x32xf32>
    %140 = vector.broadcast %139 : vector<1x32xf32> to vector<8x32xf32>
    %141 = arith.addf %138, %140 : vector<8x32xf32>
    %cst_51 = arith.constant 0.000000e+00 : f32
    %142 = vector.broadcast %cst_51 : f32 to vector<8x32xf32>
    %143 = arith.cmpf oge, %141, %142 : vector<8x32xf32>
    %c0_52 = arith.constant 0 : index
    %c0_53 = arith.constant 0 : index
    %144 = vector.load %arg8[%c0_52, %c0_53] : memref<1x32xf32, #tpu.memory_space<vmem>>, vector<1x32xf32>
    %145 = vector.broadcast %144 : vector<1x32xf32> to vector<8x32xf32>
    %146 = arith.mulf %141, %145 : vector<8x32xf32>
    %147 = arith.select %143, %141, %146 : vector<8x32xi1>, vector<8x32xf32>
    %cst_54 = arith.constant 0.000000e+00 : f32
    %148 = vector.broadcast %cst_54 : f32 to vector<8x32xf32>
    %149 = arith.cmpf oge, %141, %148 : vector<8x32xf32>
    %c0_55 = arith.constant 0 : index
    %c0_56 = arith.constant 0 : index
    %150 = vector.load %arg11[%c0_55, %c0_56] : memref<1x32xf32, #tpu.memory_space<vmem>>, vector<1x32xf32>
    %151 = vector.broadcast %150 : vector<1x32xf32> to vector<8x32xf32>
    %152 = arith.mulf %141, %151 : vector<8x32xf32>
    %153 = arith.select %149, %141, %152 : vector<8x32xi1>, vector<8x32xf32>
    %154 = arith.truncf %147 : vector<8x32xf32> to vector<8x32xbf16>
    %c0_57 = arith.constant 0 : index
    %c0_58 = arith.constant 0 : index
    %155 = vector.load %arg9[%c0_57, %c0_58] : memref<32x16xbf16, #tpu.memory_space<vmem>>, vector<32x16xbf16>
    %cst_59 = arith.constant dense<0.000000e+00> : vector<8x16xf32>
    %156 = tpu.matmul %154, %155, %cst_59 {dimension_numbers = #tpu.dot_dimension_numbers<[1], [0], [0], [1], [0, 0, 1, 1], [], []>} : vector<8x32xbf16>, vector<32x16xbf16>, vector<8x16xf32> -> vector<8x16xf32>
    %c0_60 = arith.constant 0 : index
    %c0_61 = arith.constant 0 : index
    %157 = vector.load %arg10[%c0_60, %c0_61] : memref<1x16xf32, #tpu.memory_space<vmem>>, vector<1x16xf32>
    %158 = vector.broadcast %157 : vector<1x16xf32> to vector<8x16xf32>
    %159 = arith.addf %156, %158 : vector<8x16xf32>
    %c0_62 = arith.constant 0 : index
    %c0_63 = arith.constant 0 : index
    %c0_64 = arith.constant 0 : index
    %160 = vector.load %arg14[%c0_62, %c0_63, %c0_64] : memref<1x8x16xf32, #tpu.memory_space<vmem>>, vector<1x8x16xf32>
    %161 = vector.shape_cast %160 : vector<1x8x16xf32> to vector<8x16xf32>
    %162 = vector.shape_cast %159 : vector<8x16xf32> to vector<1x8x16xf32>
    tpu.vector_store %arg14[%c0_62, %c0_63, %c0_64], %162 {strides = array<i32>} : memref<1x8x16xf32, #tpu.memory_space<vmem>>, vector<1x8x16xf32>,
    %163 = arith.truncf %153 : vector<8x32xf32> to vector<8x32xbf16>
    %c0_65 = arith.constant 0 : index
    %c0_66 = arith.constant 0 : index
    %164 = vector.load %arg12[%c0_65, %c0_66] : memref<32x32xbf16, #tpu.memory_space<vmem>>, vector<32x32xbf16>
    %cst_67 = arith.constant dense<0.000000e+00> : vector<8x32xf32>
    %165 = tpu.matmul %163, %164, %cst_67 {dimension_numbers = #tpu.dot_dimension_numbers<[1], [0], [0], [1], [0, 0, 1, 1], [], []>} : vector<8x32xbf16>, vector<32x32xbf16>, vector<8x32xf32> -> vector<8x32xf32>
    %c0_68 = arith.constant 0 : index
    %c0_69 = arith.constant 0 : index
    %166 = vector.load %arg13[%c0_68, %c0_69] : memref<1x32xf32, #tpu.memory_space<vmem>>, vector<1x32xf32>
    %167 = vector.broadcast %166 : vector<1x32xf32> to vector<8x32xf32>
    %168 = arith.addf %165, %167 : vector<8x32xf32>
    %c0_70 = arith.constant 0 : index
    %c0_71 = arith.constant 0 : index
    %c0_72 = arith.constant 0 : index
    %169 = vector.load %arg15[%c0_70, %c0_71, %c0_72] : memref<1x8x32xf32, #tpu.memory_space<vmem>>, vector<1x8x32xf32>
    %170 = vector.shape_cast %169 : vector<1x8x32xf32> to vector<8x32xf32>
    %171 = vector.shape_cast %168 : vector<8x32xf32> to vector<1x8x32xf32>
    tpu.vector_store %arg15[%c0_70, %c0_71, %c0_72], %171 {strides = array<i32>} : memref<1x8x32xf32, #tpu.memory_space<vmem>>, vector<1x8x32xf32>,
    return
  }
  func.func @transform_0(%arg0: i32) -> (i32, i32, i32, i32) {
    %c0_i32 = arith.constant 0 : i32
    %c0_i32_0 = arith.constant 0 : i32
    %c0_i32_1 = arith.constant 0 : i32
    %c0_i32_2 = arith.constant 0 : i32
    return %c0_i32, %arg0, %c0_i32_0, %c0_i32_1 : i32, i32, i32, i32
  }
  func.func @transform_1(%arg0: i32) -> (i32, i32, i32, i32) {
    %c0_i32 = arith.constant 0 : i32
    %c0_i32_0 = arith.constant 0 : i32
    %c0_i32_1 = arith.constant 0 : i32
    %c0_i32_2 = arith.constant 0 : i32
    return %c0_i32, %arg0, %c0_i32_0, %c0_i32_1 : i32, i32, i32, i32
  }
  func.func @transform_2(%arg0: i32) -> (i32, i32) {
    %c0_i32 = arith.constant 0 : i32
    %c0_i32_0 = arith.constant 0 : i32
    %c0_i32_1 = arith.constant 0 : i32
    return %c0_i32, %c0_i32_0 : i32, i32
  }
  func.func @transform_3(%arg0: i32) -> (i32, i32) {
    %c0_i32 = arith.constant 0 : i32
    %c0_i32_0 = arith.constant 0 : i32
    %c0_i32_1 = arith.constant 0 : i32
    return %c0_i32, %c0_i32_0 : i32, i32
  }
  func.func @transform_4(%arg0: i32) -> (i32, i32) {
    %c0_i32 = arith.constant 0 : i32
    %c0_i32_0 = arith.constant 0 : i32
    %c0_i32_1 = arith.constant 0 : i32
    return %c0_i32, %c0_i32_0 : i32, i32
  }
  func.func @transform_5(%arg0: i32) -> (i32, i32) {
    %c0_i32 = arith.constant 0 : i32
    %c0_i32_0 = arith.constant 0 : i32
    %c0_i32_1 = arith.constant 0 : i32
    return %c0_i32, %c0_i32_0 : i32, i32
  }
  func.func @transform_6(%arg0: i32) -> (i32, i32) {
    %c0_i32 = arith.constant 0 : i32
    %c0_i32_0 = arith.constant 0 : i32
    %c0_i32_1 = arith.constant 0 : i32
    return %c0_i32, %c0_i32_0 : i32, i32
  }
  func.func @transform_7(%arg0: i32) -> (i32, i32) {
    %c0_i32 = arith.constant 0 : i32
    %c0_i32_0 = arith.constant 0 : i32
    %c0_i32_1 = arith.constant 0 : i32
    return %c0_i32, %c0_i32_0 : i32, i32
  }
  func.func @transform_8(%arg0: i32) -> (i32, i32) {
    %c0_i32 = arith.constant 0 : i32
    %c0_i32_0 = arith.constant 0 : i32
    %c0_i32_1 = arith.constant 0 : i32
    return %c0_i32, %c0_i32_0 : i32, i32
  }
  func.func @transform_9(%arg0: i32) -> (i32, i32) {
    %c0_i32 = arith.constant 0 : i32
    %c0_i32_0 = arith.constant 0 : i32
    %c0_i32_1 = arith.constant 0 : i32
    return %c0_i32, %c0_i32_0 : i32, i32
  }
  func.func @transform_10(%arg0: i32) -> (i32, i32) {
    %c0_i32 = arith.constant 0 : i32
    %c0_i32_0 = arith.constant 0 : i32
    %c0_i32_1 = arith.constant 0 : i32
    return %c0_i32, %c0_i32_0 : i32, i32
  }
  func.func @transform_11(%arg0: i32) -> (i32, i32) {
    %c0_i32 = arith.constant 0 : i32
    %c0_i32_0 = arith.constant 0 : i32
    %c0_i32_1 = arith.constant 0 : i32
    return %c0_i32, %c0_i32_0 : i32, i32
  }
  func.func @transform_12(%arg0: i32) -> (i32, i32) {
    %c0_i32 = arith.constant 0 : i32
    %c0_i32_0 = arith.constant 0 : i32
    %c0_i32_1 = arith.constant 0 : i32
    return %c0_i32, %c0_i32_0 : i32, i32
  }
  func.func @transform_13(%arg0: i32) -> (i32, i32, i32) {
    %c0_i32 = arith.constant 0 : i32
    %c0_i32_0 = arith.constant 0 : i32
    %c0_i32_1 = arith.constant 0 : i32
    return %arg0, %c0_i32, %c0_i32_0 : i32, i32, i32
  }
  func.func @transform_14(%arg0: i32) -> (i32, i32, i32) {
    %c0_i32 = arith.constant 0 : i32
    %c0_i32_0 = arith.constant 0 : i32
    %c0_i32_1 = arith.constant 0 : i32
    return %arg0, %c0_i32, %c0_i32_0 : i32, i32, i32
  }
}

module attributes {stable_mosaic.version = 11 : i64} {
  func.func @_ff_block_kernel(%arg0: i32, %arg1: memref<3x16x16xf32, #tpu.memory_space<vmem>>, %arg2: memref<3x16x32xf32, #tpu.memory_space<vmem>>, %arg3: memref<1x16xf32, #tpu.memory_space<vmem>>, %arg4: memref<32x64xbf16, #tpu.memory_space<vmem>>, %arg5: memref<1x64xf32, #tpu.memory_space<vmem>>, %arg6: memref<1x64xf32, #tpu.memory_space<vmem>>, %arg7: memref<1x64xf32, #tpu.memory_space<vmem>>, %arg8: memref<1x64xf32, #tpu.memory_space<vmem>>, %arg9: memref<1x64xf32, #tpu.memory_space<vmem>>, %arg10: memref<64x32xbf16, #tpu.memory_space<vmem>>, %arg11: memref<1x32xf32, #tpu.memory_space<vmem>>, %arg12: memref<64x16xbf16, #tpu.memory_space<vmem>>, %arg13: memref<1x16xf32, #tpu.memory_space<vmem>>, %arg14: memref<16x16xf32, #tpu.memory_space<vmem>>, %arg15: memref<16x32xf32, #tpu.memory_space<vmem>>) attributes {dimension_semantics = [#tpu.dimension_semantics<parallel>], iteration_bounds = array<i64: 1>, scalar_prefetch = 0 : i64, scratch_operands = 0 : i64, tpu.core_type = #tpu.core_type<tc>, window_params = [{transform_indices = @transform_0, window_bounds = array<i64: 3, 16, 16>}, {transform_indices = @transform_1, window_bounds = array<i64: 3, 16, 32>}, {pipeline_mode = #tpu.pipeline_mode<synchronous>, transform_indices = @transform_2, window_bounds = array<i64: 1, 16>}, {pipeline_mode = #tpu.pipeline_mode<synchronous>, transform_indices = @transform_3, window_bounds = array<i64: 32, 64>}, {pipeline_mode = #tpu.pipeline_mode<synchronous>, transform_indices = @transform_4, window_bounds = array<i64: 1, 64>}, {pipeline_mode = #tpu.pipeline_mode<synchronous>, transform_indices = @transform_5, window_bounds = array<i64: 1, 64>}, {pipeline_mode = #tpu.pipeline_mode<synchronous>, transform_indices = @transform_6, window_bounds = array<i64: 1, 64>}, {pipeline_mode = #tpu.pipeline_mode<synchronous>, transform_indices = @transform_7, window_bounds = array<i64: 1, 64>}, {pipeline_mode = #tpu.pipeline_mode<synchronous>, transform_indices = @transform_8, window_bounds = array<i64: 1, 64>}, {pipeline_mode = #tpu.pipeline_mode<synchronous>, transform_indices = @transform_9, window_bounds = array<i64: 64, 32>}, {pipeline_mode = #tpu.pipeline_mode<synchronous>, transform_indices = @transform_10, window_bounds = array<i64: 1, 32>}, {pipeline_mode = #tpu.pipeline_mode<synchronous>, transform_indices = @transform_11, window_bounds = array<i64: 64, 16>}, {pipeline_mode = #tpu.pipeline_mode<synchronous>, transform_indices = @transform_12, window_bounds = array<i64: 1, 16>}, {transform_indices = @transform_13, window_bounds = array<i64: 16, 16>}, {transform_indices = @transform_14, window_bounds = array<i64: 16, 32>}]} {
    %c0 = arith.constant 0 : index
    %c0_0 = arith.constant 0 : index
    %0 = vector.load %arg3[%c0, %c0_0] : memref<1x16xf32, #tpu.memory_space<vmem>>, vector<1x16xf32>
    %c0_1 = arith.constant 0 : index
    %c0_2 = arith.constant 0 : index
    %c0_3 = arith.constant 0 : index
    %1 = vector.load %arg1[%c0_1, %c0_2, %c0_3] : memref<3x16x16xf32, #tpu.memory_space<vmem>>, vector<1x16x16xf32>
    %2 = vector.shape_cast %1 : vector<1x16x16xf32> to vector<16x16xf32>
    %3 = vector.broadcast %0 : vector<1x16xf32> to vector<16x16xf32>
    %4 = arith.mulf %2, %3 : vector<16x16xf32>
    %cst = arith.constant dense<0.000000e+00> : vector<16xf32>
    %5 = vector.multi_reduction <add>, %4, %cst [1] : vector<16x16xf32> to vector<16xf32>
    %6 = vector.shape_cast %5 : vector<16xf32> to vector<16x1xf32>
    %cst_4 = arith.constant 2.500000e-01 : f32
    %7 = vector.broadcast %cst_4 : f32 to vector<16x1xf32>
    %8 = arith.mulf %6, %7 : vector<16x1xf32>
    %c1 = arith.constant 1 : index
    %c0_5 = arith.constant 0 : index
    %c0_6 = arith.constant 0 : index
    %9 = vector.load %arg1[%c1, %c0_5, %c0_6] : memref<3x16x16xf32, #tpu.memory_space<vmem>>, vector<1x16x16xf32>
    %10 = vector.shape_cast %9 : vector<1x16x16xf32> to vector<16x16xf32>
    %11 = vector.broadcast %0 : vector<1x16xf32> to vector<16x16xf32>
    %12 = arith.mulf %10, %11 : vector<16x16xf32>
    %cst_7 = arith.constant dense<0.000000e+00> : vector<16xf32>
    %13 = vector.multi_reduction <add>, %12, %cst_7 [1] : vector<16x16xf32> to vector<16xf32>
    %14 = vector.shape_cast %13 : vector<16xf32> to vector<16x1xf32>
    %cst_8 = arith.constant 2.500000e-01 : f32
    %15 = vector.broadcast %cst_8 : f32 to vector<16x1xf32>
    %16 = arith.mulf %14, %15 : vector<16x1xf32>
    %c2 = arith.constant 2 : index
    %c0_9 = arith.constant 0 : index
    %c0_10 = arith.constant 0 : index
    %17 = vector.load %arg1[%c2, %c0_9, %c0_10] : memref<3x16x16xf32, #tpu.memory_space<vmem>>, vector<1x16x16xf32>
    %18 = vector.shape_cast %17 : vector<1x16x16xf32> to vector<16x16xf32>
    %19 = vector.broadcast %0 : vector<1x16xf32> to vector<16x16xf32>
    %20 = arith.mulf %18, %19 : vector<16x16xf32>
    %cst_11 = arith.constant dense<0.000000e+00> : vector<16xf32>
    %21 = vector.multi_reduction <add>, %20, %cst_11 [1] : vector<16x16xf32> to vector<16xf32>
    %22 = vector.shape_cast %21 : vector<16xf32> to vector<16x1xf32>
    %cst_12 = arith.constant 2.500000e-01 : f32
    %23 = vector.broadcast %cst_12 : f32 to vector<16x1xf32>
    %24 = arith.mulf %22, %23 : vector<16x1xf32>
    %25 = arith.maximumf %8, %16 : vector<16x1xf32>
    %26 = arith.maximumf %25, %24 : vector<16x1xf32>
    %27 = arith.subf %8, %26 : vector<16x1xf32>
    %28 = math.exp %27 : vector<16x1xf32>
    %29 = arith.subf %16, %26 : vector<16x1xf32>
    %30 = math.exp %29 : vector<16x1xf32>
    %31 = arith.subf %24, %26 : vector<16x1xf32>
    %32 = math.exp %31 : vector<16x1xf32>
    %33 = arith.addf %28, %30 : vector<16x1xf32>
    %34 = arith.addf %33, %32 : vector<16x1xf32>
    %35 = tpu.reciprocal %34 {approx = true} : vector<16x1xf32> -> vector<16x1xf32>
    %36 = arith.mulf %28, %35 : vector<16x1xf32>
    %c0_13 = arith.constant 0 : index
    %c0_14 = arith.constant 0 : index
    %c0_15 = arith.constant 0 : index
    %37 = vector.load %arg2[%c0_13, %c0_14, %c0_15] : memref<3x16x32xf32, #tpu.memory_space<vmem>>, vector<1x16x32xf32>
    %38 = vector.shape_cast %37 : vector<1x16x32xf32> to vector<16x32xf32>
    %39 = vector.broadcast %36 : vector<16x1xf32> to vector<16x32xf32>
    %40 = arith.mulf %39, %38 : vector<16x32xf32>
    %41 = arith.mulf %30, %35 : vector<16x1xf32>
    %c1_16 = arith.constant 1 : index
    %c0_17 = arith.constant 0 : index
    %c0_18 = arith.constant 0 : index
    %42 = vector.load %arg2[%c1_16, %c0_17, %c0_18] : memref<3x16x32xf32, #tpu.memory_space<vmem>>, vector<1x16x32xf32>
    %43 = vector.shape_cast %42 : vector<1x16x32xf32> to vector<16x32xf32>
    %44 = vector.broadcast %41 : vector<16x1xf32> to vector<16x32xf32>
    %45 = arith.mulf %44, %43 : vector<16x32xf32>
    %46 = arith.addf %40, %45 : vector<16x32xf32>
    %47 = arith.mulf %32, %35 : vector<16x1xf32>
    %c2_19 = arith.constant 2 : index
    %c0_20 = arith.constant 0 : index
    %c0_21 = arith.constant 0 : index
    %48 = vector.load %arg2[%c2_19, %c0_20, %c0_21] : memref<3x16x32xf32, #tpu.memory_space<vmem>>, vector<1x16x32xf32>
    %49 = vector.shape_cast %48 : vector<1x16x32xf32> to vector<16x32xf32>
    %50 = vector.broadcast %47 : vector<16x1xf32> to vector<16x32xf32>
    %51 = arith.mulf %50, %49 : vector<16x32xf32>
    %52 = arith.addf %46, %51 : vector<16x32xf32>
    %53 = arith.truncf %52 : vector<16x32xf32> to vector<16x32xbf16>
    %c0_22 = arith.constant 0 : index
    %c0_23 = arith.constant 0 : index
    %54 = vector.load %arg4[%c0_22, %c0_23] : memref<32x64xbf16, #tpu.memory_space<vmem>>, vector<32x64xbf16>
    %cst_24 = arith.constant dense<0.000000e+00> : vector<16x64xf32>
    %55 = tpu.matmul %53, %54, %cst_24 {dimension_numbers = #tpu.dot_dimension_numbers<[1], [0], [0], [1], [0, 0, 1, 1], [], []>} : vector<16x32xbf16>, vector<32x64xbf16>, vector<16x64xf32> -> vector<16x64xf32>
    %c0_25 = arith.constant 0 : index
    %c0_26 = arith.constant 0 : index
    %56 = vector.load %arg5[%c0_25, %c0_26] : memref<1x64xf32, #tpu.memory_space<vmem>>, vector<1x64xf32>
    %57 = vector.broadcast %56 : vector<1x64xf32> to vector<16x64xf32>
    %58 = arith.addf %55, %57 : vector<16x64xf32>
    %c0_27 = arith.constant 0 : index
    %c0_28 = arith.constant 0 : index
    %59 = vector.load %arg6[%c0_27, %c0_28] : memref<1x64xf32, #tpu.memory_space<vmem>>, vector<1x64xf32>
    %60 = vector.broadcast %59 : vector<1x64xf32> to vector<16x64xf32>
    %61 = arith.mulf %58, %60 : vector<16x64xf32>
    %c0_29 = arith.constant 0 : index
    %c0_30 = arith.constant 0 : index
    %62 = vector.load %arg7[%c0_29, %c0_30] : memref<1x64xf32, #tpu.memory_space<vmem>>, vector<1x64xf32>
    %63 = vector.broadcast %62 : vector<1x64xf32> to vector<16x64xf32>
    %64 = arith.addf %61, %63 : vector<16x64xf32>
    %65 = arith.negf %64 : vector<16x64xf32>
    %66 = math.exp %65 : vector<16x64xf32>
    %cst_31 = arith.constant 1.000000e+00 : f32
    %67 = vector.broadcast %cst_31 : f32 to vector<16x64xf32>
    %68 = arith.addf %67, %66 : vector<16x64xf32>
    %69 = arith.divf %67, %68 : vector<16x64xf32>
    %70 = arith.mulf %69, %58 : vector<16x64xf32>
    %c0_32 = arith.constant 0 : index
    %c0_33 = arith.constant 0 : index
    %71 = vector.load %arg8[%c0_32, %c0_33] : memref<1x64xf32, #tpu.memory_space<vmem>>, vector<1x64xf32>
    %72 = vector.broadcast %71 : vector<1x64xf32> to vector<16x64xf32>
    %73 = arith.mulf %58, %72 : vector<16x64xf32>
    %c0_34 = arith.constant 0 : index
    %c0_35 = arith.constant 0 : index
    %74 = vector.load %arg9[%c0_34, %c0_35] : memref<1x64xf32, #tpu.memory_space<vmem>>, vector<1x64xf32>
    %75 = vector.broadcast %74 : vector<1x64xf32> to vector<16x64xf32>
    %76 = arith.addf %73, %75 : vector<16x64xf32>
    %77 = arith.negf %76 : vector<16x64xf32>
    %78 = math.exp %77 : vector<16x64xf32>
    %cst_36 = arith.constant 1.000000e+00 : f32
    %79 = vector.broadcast %cst_36 : f32 to vector<16x64xf32>
    %80 = arith.addf %79, %78 : vector<16x64xf32>
    %81 = arith.divf %79, %80 : vector<16x64xf32>
    %82 = arith.mulf %81, %58 : vector<16x64xf32>
    %83 = arith.truncf %70 : vector<16x64xf32> to vector<16x64xbf16>
    %c0_37 = arith.constant 0 : index
    %c0_38 = arith.constant 0 : index
    %84 = vector.load %arg10[%c0_37, %c0_38] : memref<64x32xbf16, #tpu.memory_space<vmem>>, vector<64x32xbf16>
    %cst_39 = arith.constant dense<0.000000e+00> : vector<16x32xf32>
    %85 = tpu.matmul %83, %84, %cst_39 {dimension_numbers = #tpu.dot_dimension_numbers<[1], [0], [0], [1], [0, 0, 1, 1], [], []>} : vector<16x64xbf16>, vector<64x32xbf16>, vector<16x32xf32> -> vector<16x32xf32>
    %c0_40 = arith.constant 0 : index
    %c0_41 = arith.constant 0 : index
    %86 = vector.load %arg11[%c0_40, %c0_41] : memref<1x32xf32, #tpu.memory_space<vmem>>, vector<1x32xf32>
    %87 = vector.broadcast %86 : vector<1x32xf32> to vector<16x32xf32>
    %88 = arith.addf %85, %87 : vector<16x32xf32>
    %c0_42 = arith.constant 0 : index
    %c0_43 = arith.constant 0 : index
    %89 = vector.load %arg15[%c0_42, %c0_43] : memref<16x32xf32, #tpu.memory_space<vmem>>, vector<16x32xf32>
    tpu.vector_store %arg15[%c0_42, %c0_43], %88 {strides = array<i32>} : memref<16x32xf32, #tpu.memory_space<vmem>>, vector<16x32xf32>,
    %90 = arith.truncf %82 : vector<16x64xf32> to vector<16x64xbf16>
    %c0_44 = arith.constant 0 : index
    %c0_45 = arith.constant 0 : index
    %91 = vector.load %arg12[%c0_44, %c0_45] : memref<64x16xbf16, #tpu.memory_space<vmem>>, vector<64x16xbf16>
    %cst_46 = arith.constant dense<0.000000e+00> : vector<16x16xf32>
    %92 = tpu.matmul %90, %91, %cst_46 {dimension_numbers = #tpu.dot_dimension_numbers<[1], [0], [0], [1], [0, 0, 1, 1], [], []>} : vector<16x64xbf16>, vector<64x16xbf16>, vector<16x16xf32> -> vector<16x16xf32>
    %c0_47 = arith.constant 0 : index
    %c0_48 = arith.constant 0 : index
    %93 = vector.load %arg13[%c0_47, %c0_48] : memref<1x16xf32, #tpu.memory_space<vmem>>, vector<1x16xf32>
    %94 = vector.broadcast %93 : vector<1x16xf32> to vector<16x16xf32>
    %95 = arith.addf %92, %94 : vector<16x16xf32>
    %c0_49 = arith.constant 0 : index
    %c0_50 = arith.constant 0 : index
    %96 = vector.load %arg14[%c0_49, %c0_50] : memref<16x16xf32, #tpu.memory_space<vmem>>, vector<16x16xf32>
    tpu.vector_store %arg14[%c0_49, %c0_50], %95 {strides = array<i32>} : memref<16x16xf32, #tpu.memory_space<vmem>>, vector<16x16xf32>,
    return
  }
  func.func @transform_0(%arg0: i32) -> (i32, i32, i32) {
    %c0_i32 = arith.constant 0 : i32
    %c0_i32_0 = arith.constant 0 : i32
    %c0_i32_1 = arith.constant 0 : i32
    return %c0_i32, %arg0, %c0_i32_0 : i32, i32, i32
  }
  func.func @transform_1(%arg0: i32) -> (i32, i32, i32) {
    %c0_i32 = arith.constant 0 : i32
    %c0_i32_0 = arith.constant 0 : i32
    %c0_i32_1 = arith.constant 0 : i32
    return %c0_i32, %arg0, %c0_i32_0 : i32, i32, i32
  }
  func.func @transform_2(%arg0: i32) -> (i32, i32) {
    %c0_i32 = arith.constant 0 : i32
    %c0_i32_0 = arith.constant 0 : i32
    %c0_i32_1 = arith.constant 0 : i32
    return %c0_i32, %c0_i32_0 : i32, i32
  }
  func.func @transform_3(%arg0: i32) -> (i32, i32) {
    %c0_i32 = arith.constant 0 : i32
    %c0_i32_0 = arith.constant 0 : i32
    %c0_i32_1 = arith.constant 0 : i32
    return %c0_i32, %c0_i32_0 : i32, i32
  }
  func.func @transform_4(%arg0: i32) -> (i32, i32) {
    %c0_i32 = arith.constant 0 : i32
    %c0_i32_0 = arith.constant 0 : i32
    %c0_i32_1 = arith.constant 0 : i32
    return %c0_i32, %c0_i32_0 : i32, i32
  }
  func.func @transform_5(%arg0: i32) -> (i32, i32) {
    %c0_i32 = arith.constant 0 : i32
    %c0_i32_0 = arith.constant 0 : i32
    %c0_i32_1 = arith.constant 0 : i32
    return %c0_i32, %c0_i32_0 : i32, i32
  }
  func.func @transform_6(%arg0: i32) -> (i32, i32) {
    %c0_i32 = arith.constant 0 : i32
    %c0_i32_0 = arith.constant 0 : i32
    %c0_i32_1 = arith.constant 0 : i32
    return %c0_i32, %c0_i32_0 : i32, i32
  }
  func.func @transform_7(%arg0: i32) -> (i32, i32) {
    %c0_i32 = arith.constant 0 : i32
    %c0_i32_0 = arith.constant 0 : i32
    %c0_i32_1 = arith.constant 0 : i32
    return %c0_i32, %c0_i32_0 : i32, i32
  }
  func.func @transform_8(%arg0: i32) -> (i32, i32) {
    %c0_i32 = arith.constant 0 : i32
    %c0_i32_0 = arith.constant 0 : i32
    %c0_i32_1 = arith.constant 0 : i32
    return %c0_i32, %c0_i32_0 : i32, i32
  }
  func.func @transform_9(%arg0: i32) -> (i32, i32) {
    %c0_i32 = arith.constant 0 : i32
    %c0_i32_0 = arith.constant 0 : i32
    %c0_i32_1 = arith.constant 0 : i32
    return %c0_i32, %c0_i32_0 : i32, i32
  }
  func.func @transform_10(%arg0: i32) -> (i32, i32) {
    %c0_i32 = arith.constant 0 : i32
    %c0_i32_0 = arith.constant 0 : i32
    %c0_i32_1 = arith.constant 0 : i32
    return %c0_i32, %c0_i32_0 : i32, i32
  }
  func.func @transform_11(%arg0: i32) -> (i32, i32) {
    %c0_i32 = arith.constant 0 : i32
    %c0_i32_0 = arith.constant 0 : i32
    %c0_i32_1 = arith.constant 0 : i32
    return %c0_i32, %c0_i32_0 : i32, i32
  }
  func.func @transform_12(%arg0: i32) -> (i32, i32) {
    %c0_i32 = arith.constant 0 : i32
    %c0_i32_0 = arith.constant 0 : i32
    %c0_i32_1 = arith.constant 0 : i32
    return %c0_i32, %c0_i32_0 : i32, i32
  }
  func.func @transform_13(%arg0: i32) -> (i32, i32) {
    %c0_i32 = arith.constant 0 : i32
    %c0_i32_0 = arith.constant 0 : i32
    return %arg0, %c0_i32 : i32, i32
  }
  func.func @transform_14(%arg0: i32) -> (i32, i32) {
    %c0_i32 = arith.constant 0 : i32
    %c0_i32_0 = arith.constant 0 : i32
    return %arg0, %c0_i32 : i32, i32
  }
}

module attributes {stable_mosaic.version = 11 : i64} {
  func.func @_attention_block_kernel(%arg0: i32, %arg1: memref<4x1x8x16xf32, #tpu.memory_space<vmem>>, %arg2: memref<4x1x8x32xf32, #tpu.memory_space<vmem>>, %arg3: memref<1x16xf32, #tpu.memory_space<vmem>>, %arg4: memref<32x96xbf16, #tpu.memory_space<vmem>>, %arg5: memref<1x96xf32, #tpu.memory_space<vmem>>, %arg6: memref<32x32xbf16, #tpu.memory_space<vmem>>, %arg7: memref<1x32xf32, #tpu.memory_space<vmem>>, %arg8: memref<1x32xf32, #tpu.memory_space<vmem>>, %arg9: memref<32x16xbf16, #tpu.memory_space<vmem>>, %arg10: memref<1x16xf32, #tpu.memory_space<vmem>>, %arg11: memref<1x32xf32, #tpu.memory_space<vmem>>, %arg12: memref<32x32xbf16, #tpu.memory_space<vmem>>, %arg13: memref<1x32xf32, #tpu.memory_space<vmem>>, %arg14: memref<1x8x16xf32, #tpu.memory_space<vmem>>, %arg15: memref<1x8x32xf32, #tpu.memory_space<vmem>>) attributes {dimension_semantics = [#tpu.dimension_semantics<parallel>], iteration_bounds = array<i64: 2>, scalar_prefetch = 0 : i64, scratch_operands = 0 : i64, tpu.core_type = #tpu.core_type<tc>, window_params = [{transform_indices = @transform_0, window_bounds = array<i64: 4, 1, 8, 16>}, {transform_indices = @transform_1, window_bounds = array<i64: 4, 1, 8, 32>}, {pipeline_mode = #tpu.pipeline_mode<synchronous>, transform_indices = @transform_2, window_bounds = array<i64: 1, 16>}, {pipeline_mode = #tpu.pipeline_mode<synchronous>, transform_indices = @transform_3, window_bounds = array<i64: 32, 96>}, {pipeline_mode = #tpu.pipeline_mode<synchronous>, transform_indices = @transform_4, window_bounds = array<i64: 1, 96>}, {pipeline_mode = #tpu.pipeline_mode<synchronous>, transform_indices = @transform_5, window_bounds = array<i64: 32, 32>}, {pipeline_mode = #tpu.pipeline_mode<synchronous>, transform_indices = @transform_6, window_bounds = array<i64: 1, 32>}, {pipeline_mode = #tpu.pipeline_mode<synchronous>, transform_indices = @transform_7, window_bounds = array<i64: 1, 32>}, {pipeline_mode = #tpu.pipeline_mode<synchronous>, transform_indices = @transform_8, window_bounds = array<i64: 32, 16>}, {pipeline_mode = #tpu.pipeline_mode<synchronous>, transform_indices = @transform_9, window_bounds = array<i64: 1, 16>}, {pipeline_mode = #tpu.pipeline_mode<synchronous>, transform_indices = @transform_10, window_bounds = array<i64: 1, 32>}, {pipeline_mode = #tpu.pipeline_mode<synchronous>, transform_indices = @transform_11, window_bounds = array<i64: 32, 32>}, {pipeline_mode = #tpu.pipeline_mode<synchronous>, transform_indices = @transform_12, window_bounds = array<i64: 1, 32>}, {transform_indices = @transform_13, window_bounds = array<i64: 1, 8, 16>}, {transform_indices = @transform_14, window_bounds = array<i64: 1, 8, 32>}]} {
    %c0 = arith.constant 0 : index
    %c0_0 = arith.constant 0 : index
    %0 = vector.load %arg3[%c0, %c0_0] : memref<1x16xf32, #tpu.memory_space<vmem>>, vector<1x16xf32>
    %c0_1 = arith.constant 0 : index
    %c0_2 = arith.constant 0 : index
    %c0_3 = arith.constant 0 : index
    %c0_4 = arith.constant 0 : index
    %1 = vector.load %arg1[%c0_1, %c0_2, %c0_3, %c0_4] : memref<4x1x8x16xf32, #tpu.memory_space<vmem>>, vector<1x1x8x16xf32>
    %2 = vector.shape_cast %1 : vector<1x1x8x16xf32> to vector<8x16xf32>
    %3 = vector.broadcast %0 : vector<1x16xf32> to vector<8x16xf32>
    %4 = arith.mulf %2, %3 : vector<8x16xf32>
    %cst = arith.constant dense<0.000000e+00> : vector<8xf32>
    %5 = vector.multi_reduction <add>, %4, %cst [1] : vector<8x16xf32> to vector<8xf32>
    %6 = vector.shape_cast %5 : vector<8xf32> to vector<8x1xf32>
    %cst_5 = arith.constant 2.500000e-01 : f32
    %7 = vector.broadcast %cst_5 : f32 to vector<8x1xf32>
    %8 = arith.mulf %6, %7 : vector<8x1xf32>
    %c1 = arith.constant 1 : index
    %c0_6 = arith.constant 0 : index
    %c0_7 = arith.constant 0 : index
    %c0_8 = arith.constant 0 : index
    %9 = vector.load %arg1[%c1, %c0_6, %c0_7, %c0_8] : memref<4x1x8x16xf32, #tpu.memory_space<vmem>>, vector<1x1x8x16xf32>
    %10 = vector.shape_cast %9 : vector<1x1x8x16xf32> to vector<8x16xf32>
    %11 = vector.broadcast %0 : vector<1x16xf32> to vector<8x16xf32>
    %12 = arith.mulf %10, %11 : vector<8x16xf32>
    %cst_9 = arith.constant dense<0.000000e+00> : vector<8xf32>
    %13 = vector.multi_reduction <add>, %12, %cst_9 [1] : vector<8x16xf32> to vector<8xf32>
    %14 = vector.shape_cast %13 : vector<8xf32> to vector<8x1xf32>
    %cst_10 = arith.constant 2.500000e-01 : f32
    %15 = vector.broadcast %cst_10 : f32 to vector<8x1xf32>
    %16 = arith.mulf %14, %15 : vector<8x1xf32>
    %c2 = arith.constant 2 : index
    %c0_11 = arith.constant 0 : index
    %c0_12 = arith.constant 0 : index
    %c0_13 = arith.constant 0 : index
    %17 = vector.load %arg1[%c2, %c0_11, %c0_12, %c0_13] : memref<4x1x8x16xf32, #tpu.memory_space<vmem>>, vector<1x1x8x16xf32>
    %18 = vector.shape_cast %17 : vector<1x1x8x16xf32> to vector<8x16xf32>
    %19 = vector.broadcast %0 : vector<1x16xf32> to vector<8x16xf32>
    %20 = arith.mulf %18, %19 : vector<8x16xf32>
    %cst_14 = arith.constant dense<0.000000e+00> : vector<8xf32>
    %21 = vector.multi_reduction <add>, %20, %cst_14 [1] : vector<8x16xf32> to vector<8xf32>
    %22 = vector.shape_cast %21 : vector<8xf32> to vector<8x1xf32>
    %cst_15 = arith.constant 2.500000e-01 : f32
    %23 = vector.broadcast %cst_15 : f32 to vector<8x1xf32>
    %24 = arith.mulf %22, %23 : vector<8x1xf32>
    %c3 = arith.constant 3 : index
    %c0_16 = arith.constant 0 : index
    %c0_17 = arith.constant 0 : index
    %c0_18 = arith.constant 0 : index
    %25 = vector.load %arg1[%c3, %c0_16, %c0_17, %c0_18] : memref<4x1x8x16xf32, #tpu.memory_space<vmem>>, vector<1x1x8x16xf32>
    %26 = vector.shape_cast %25 : vector<1x1x8x16xf32> to vector<8x16xf32>
    %27 = vector.broadcast %0 : vector<1x16xf32> to vector<8x16xf32>
    %28 = arith.mulf %26, %27 : vector<8x16xf32>
    %cst_19 = arith.constant dense<0.000000e+00> : vector<8xf32>
    %29 = vector.multi_reduction <add>, %28, %cst_19 [1] : vector<8x16xf32> to vector<8xf32>
    %30 = vector.shape_cast %29 : vector<8xf32> to vector<8x1xf32>
    %cst_20 = arith.constant 2.500000e-01 : f32
    %31 = vector.broadcast %cst_20 : f32 to vector<8x1xf32>
    %32 = arith.mulf %30, %31 : vector<8x1xf32>
    %33 = arith.maximumf %8, %16 : vector<8x1xf32>
    %34 = arith.maximumf %33, %24 : vector<8x1xf32>
    %35 = arith.maximumf %34, %32 : vector<8x1xf32>
    %36 = arith.subf %8, %35 : vector<8x1xf32>
    %37 = math.exp %36 : vector<8x1xf32>
    %38 = arith.subf %16, %35 : vector<8x1xf32>
    %39 = math.exp %38 : vector<8x1xf32>
    %40 = arith.subf %24, %35 : vector<8x1xf32>
    %41 = math.exp %40 : vector<8x1xf32>
    %42 = arith.subf %32, %35 : vector<8x1xf32>
    %43 = math.exp %42 : vector<8x1xf32>
    %44 = arith.addf %37, %39 : vector<8x1xf32>
    %45 = arith.addf %44, %41 : vector<8x1xf32>
    %46 = arith.addf %45, %43 : vector<8x1xf32>
    %47 = tpu.reciprocal %46 {approx = true} : vector<8x1xf32> -> vector<8x1xf32>
    %48 = arith.mulf %37, %47 : vector<8x1xf32>
    %c0_21 = arith.constant 0 : index
    %c0_22 = arith.constant 0 : index
    %c0_23 = arith.constant 0 : index
    %c0_24 = arith.constant 0 : index
    %49 = vector.load %arg2[%c0_21, %c0_22, %c0_23, %c0_24] : memref<4x1x8x32xf32, #tpu.memory_space<vmem>>, vector<1x1x8x32xf32>
    %50 = vector.shape_cast %49 : vector<1x1x8x32xf32> to vector<8x32xf32>
    %51 = vector.broadcast %48 : vector<8x1xf32> to vector<8x32xf32>
    %52 = arith.mulf %51, %50 : vector<8x32xf32>
    %53 = arith.mulf %39, %47 : vector<8x1xf32>
    %c1_25 = arith.constant 1 : index
    %c0_26 = arith.constant 0 : index
    %c0_27 = arith.constant 0 : index
    %c0_28 = arith.constant 0 : index
    %54 = vector.load %arg2[%c1_25, %c0_26, %c0_27, %c0_28] : memref<4x1x8x32xf32, #tpu.memory_space<vmem>>, vector<1x1x8x32xf32>
    %55 = vector.shape_cast %54 : vector<1x1x8x32xf32> to vector<8x32xf32>
    %56 = vector.broadcast %53 : vector<8x1xf32> to vector<8x32xf32>
    %57 = arith.mulf %56, %55 : vector<8x32xf32>
    %58 = arith.addf %52, %57 : vector<8x32xf32>
    %59 = arith.mulf %41, %47 : vector<8x1xf32>
    %c2_29 = arith.constant 2 : index
    %c0_30 = arith.constant 0 : index
    %c0_31 = arith.constant 0 : index
    %c0_32 = arith.constant 0 : index
    %60 = vector.load %arg2[%c2_29, %c0_30, %c0_31, %c0_32] : memref<4x1x8x32xf32, #tpu.memory_space<vmem>>, vector<1x1x8x32xf32>
    %61 = vector.shape_cast %60 : vector<1x1x8x32xf32> to vector<8x32xf32>
    %62 = vector.broadcast %59 : vector<8x1xf32> to vector<8x32xf32>
    %63 = arith.mulf %62, %61 : vector<8x32xf32>
    %64 = arith.addf %58, %63 : vector<8x32xf32>
    %65 = arith.mulf %43, %47 : vector<8x1xf32>
    %c3_33 = arith.constant 3 : index
    %c0_34 = arith.constant 0 : index
    %c0_35 = arith.constant 0 : index
    %c0_36 = arith.constant 0 : index
    %66 = vector.load %arg2[%c3_33, %c0_34, %c0_35, %c0_36] : memref<4x1x8x32xf32, #tpu.memory_space<vmem>>, vector<1x1x8x32xf32>
    %67 = vector.shape_cast %66 : vector<1x1x8x32xf32> to vector<8x32xf32>
    %68 = vector.broadcast %65 : vector<8x1xf32> to vector<8x32xf32>
    %69 = arith.mulf %68, %67 : vector<8x32xf32>
    %70 = arith.addf %64, %69 : vector<8x32xf32>
    %71 = arith.truncf %70 : vector<8x32xf32> to vector<8x32xbf16>
    %c0_37 = arith.constant 0 : index
    %c0_38 = arith.constant 0 : index
    %72 = vector.load %arg4[%c0_37, %c0_38] : memref<32x96xbf16, #tpu.memory_space<vmem>>, vector<32x96xbf16>
    %cst_39 = arith.constant dense<0.000000e+00> : vector<8x96xf32>
    %73 = tpu.matmul %71, %72, %cst_39 {dimension_numbers = #tpu.dot_dimension_numbers<[1], [0], [0], [1], [0, 0, 1, 1], [], []>} : vector<8x32xbf16>, vector<32x96xbf16>, vector<8x96xf32> -> vector<8x96xf32>
    %c0_40 = arith.constant 0 : index
    %c0_41 = arith.constant 0 : index
    %74 = vector.load %arg5[%c0_40, %c0_41] : memref<1x96xf32, #tpu.memory_space<vmem>>, vector<1x96xf32>
    %75 = vector.broadcast %74 : vector<1x96xf32> to vector<8x96xf32>
    %76 = arith.addf %73, %75 : vector<8x96xf32>
    %77 = tpu.iota {dimensions = array<i32: 1>} : vector<8x8xi32>
    %c5_i32 = arith.constant 5 : i32
    %78 = vector.broadcast %c5_i32 : i32 to vector<8x8xi32>
    %79 = arith.cmpi slt, %77, %78 : vector<8x8xi32>
    %cst_42 = arith.constant 0.000000e+00 : f32
    %cst_43 = arith.constant -1.000000e+30 : f32
    %80 = vector.broadcast %cst_42 : f32 to vector<8x8xf32>
    %81 = vector.broadcast %cst_43 : f32 to vector<8x8xf32>
    %82 = arith.select %79, %80, %81 : vector<8x8xi1>, vector<8x8xf32>
    %83 = vector.extract_strided_slice %76 {offsets = [0, 0], sizes = [8, 8], strides = [1, 1]} : vector<8x96xf32> to vector<8x8xf32>
    %84 = arith.truncf %83 : vector<8x8xf32> to vector<8x8xbf16>
    %85 = vector.extract_strided_slice %76 {offsets = [0, 32], sizes = [8, 8], strides = [1, 1]} : vector<8x96xf32> to vector<8x8xf32>
    %86 = arith.truncf %85 : vector<8x8xf32> to vector<8x8xbf16>
    %87 = vector.extract_strided_slice %76 {offsets = [0, 64], sizes = [8, 8], strides = [1, 1]} : vector<8x96xf32> to vector<8x8xf32>
    %88 = arith.truncf %87 : vector<8x8xf32> to vector<8x8xbf16>
    %cst_44 = arith.constant dense<0.000000e+00> : vector<8x8xf32>
    %89 = tpu.matmul %84, %86, %cst_44 {dimension_numbers = #tpu.dot_dimension_numbers<[1], [1], [0], [0], [0, 0, 1, 0], [], []>} : vector<8x8xbf16>, vector<8x8xbf16>, vector<8x8xf32> -> vector<8x8xf32>
    %cst_45 = arith.constant 0.353553385 : f32
    %90 = vector.broadcast %cst_45 : f32 to vector<8x8xf32>
    %91 = arith.mulf %89, %90 : vector<8x8xf32>
    %92 = arith.addf %91, %82 : vector<8x8xf32>
    %cst_46 = arith.constant dense<0xFF800000> : vector<8xf32>
    %93 = vector.multi_reduction <maximumf>, %92, %cst_46 [1] : vector<8x8xf32> to vector<8xf32>
    %94 = vector.shape_cast %93 : vector<8xf32> to vector<8x1xf32>
    %95 = vector.broadcast %94 : vector<8x1xf32> to vector<8x8xf32>
    %96 = arith.subf %92, %95 : vector<8x8xf32>
    %97 = math.exp %96 : vector<8x8xf32>
    %cst_47 = arith.constant dense<0.000000e+00> : vector<8xf32>
    %98 = vector.multi_reduction <add>, %97, %cst_47 [1] : vector<8x8xf32> to vector<8xf32>
    %99 = vector.shape_cast %98 : vector<8xf32> to vector<8x1xf32>
    %100 = tpu.reciprocal %99 {approx = true} : vector<8x1xf32> -> vector<8x1xf32>
    %101 = vector.broadcast %100 : vector<8x1xf32> to vector<8x8xf32>
    %102 = arith.mulf %97, %101 : vector<8x8xf32>
    %103 = arith.truncf %102 : vector<8x8xf32> to vector<8x8xbf16>
    %cst_48 = arith.constant dense<0.000000e+00> : vector<8x8xf32>
    %104 = tpu.matmul %103, %88, %cst_48 {dimension_numbers = #tpu.dot_dimension_numbers<[1], [0], [0], [1], [0, 0, 1, 1], [], []>} : vector<8x8xbf16>, vector<8x8xbf16>, vector<8x8xf32> -> vector<8x8xf32>
    %105 = vector.extract_strided_slice %76 {offsets = [0, 8], sizes = [8, 8], strides = [1, 1]} : vector<8x96xf32> to vector<8x8xf32>
    %106 = arith.truncf %105 : vector<8x8xf32> to vector<8x8xbf16>
    %107 = vector.extract_strided_slice %76 {offsets = [0, 40], sizes = [8, 8], strides = [1, 1]} : vector<8x96xf32> to vector<8x8xf32>
    %108 = arith.truncf %107 : vector<8x8xf32> to vector<8x8xbf16>
    %109 = vector.extract_strided_slice %76 {offsets = [0, 72], sizes = [8, 8], strides = [1, 1]} : vector<8x96xf32> to vector<8x8xf32>
    %110 = arith.truncf %109 : vector<8x8xf32> to vector<8x8xbf16>
    %cst_49 = arith.constant dense<0.000000e+00> : vector<8x8xf32>
    %111 = tpu.matmul %106, %108, %cst_49 {dimension_numbers = #tpu.dot_dimension_numbers<[1], [1], [0], [0], [0, 0, 1, 0], [], []>} : vector<8x8xbf16>, vector<8x8xbf16>, vector<8x8xf32> -> vector<8x8xf32>
    %cst_50 = arith.constant 0.353553385 : f32
    %112 = vector.broadcast %cst_50 : f32 to vector<8x8xf32>
    %113 = arith.mulf %111, %112 : vector<8x8xf32>
    %114 = arith.addf %113, %82 : vector<8x8xf32>
    %cst_51 = arith.constant dense<0xFF800000> : vector<8xf32>
    %115 = vector.multi_reduction <maximumf>, %114, %cst_51 [1] : vector<8x8xf32> to vector<8xf32>
    %116 = vector.shape_cast %115 : vector<8xf32> to vector<8x1xf32>
    %117 = vector.broadcast %116 : vector<8x1xf32> to vector<8x8xf32>
    %118 = arith.subf %114, %117 : vector<8x8xf32>
    %119 = math.exp %118 : vector<8x8xf32>
    %cst_52 = arith.constant dense<0.000000e+00> : vector<8xf32>
    %120 = vector.multi_reduction <add>, %119, %cst_52 [1] : vector<8x8xf32> to vector<8xf32>
    %121 = vector.shape_cast %120 : vector<8xf32> to vector<8x1xf32>
    %122 = tpu.reciprocal %121 {approx = true} : vector<8x1xf32> -> vector<8x1xf32>
    %123 = vector.broadcast %122 : vector<8x1xf32> to vector<8x8xf32>
    %124 = arith.mulf %119, %123 : vector<8x8xf32>
    %125 = arith.truncf %124 : vector<8x8xf32> to vector<8x8xbf16>
    %cst_53 = arith.constant dense<0.000000e+00> : vector<8x8xf32>
    %126 = tpu.matmul %125, %110, %cst_53 {dimension_numbers = #tpu.dot_dimension_numbers<[1], [0], [0], [1], [0, 0, 1, 1], [], []>} : vector<8x8xbf16>, vector<8x8xbf16>, vector<8x8xf32> -> vector<8x8xf32>
    %127 = vector.extract_strided_slice %76 {offsets = [0, 16], sizes = [8, 8], strides = [1, 1]} : vector<8x96xf32> to vector<8x8xf32>
    %128 = arith.truncf %127 : vector<8x8xf32> to vector<8x8xbf16>
    %129 = vector.extract_strided_slice %76 {offsets = [0, 48], sizes = [8, 8], strides = [1, 1]} : vector<8x96xf32> to vector<8x8xf32>
    %130 = arith.truncf %129 : vector<8x8xf32> to vector<8x8xbf16>
    %131 = vector.extract_strided_slice %76 {offsets = [0, 80], sizes = [8, 8], strides = [1, 1]} : vector<8x96xf32> to vector<8x8xf32>
    %132 = arith.truncf %131 : vector<8x8xf32> to vector<8x8xbf16>
    %cst_54 = arith.constant dense<0.000000e+00> : vector<8x8xf32>
    %133 = tpu.matmul %128, %130, %cst_54 {dimension_numbers = #tpu.dot_dimension_numbers<[1], [1], [0], [0], [0, 0, 1, 0], [], []>} : vector<8x8xbf16>, vector<8x8xbf16>, vector<8x8xf32> -> vector<8x8xf32>
    %cst_55 = arith.constant 0.353553385 : f32
    %134 = vector.broadcast %cst_55 : f32 to vector<8x8xf32>
    %135 = arith.mulf %133, %134 : vector<8x8xf32>
    %136 = arith.addf %135, %82 : vector<8x8xf32>
    %cst_56 = arith.constant dense<0xFF800000> : vector<8xf32>
    %137 = vector.multi_reduction <maximumf>, %136, %cst_56 [1] : vector<8x8xf32> to vector<8xf32>
    %138 = vector.shape_cast %137 : vector<8xf32> to vector<8x1xf32>
    %139 = vector.broadcast %138 : vector<8x1xf32> to vector<8x8xf32>
    %140 = arith.subf %136, %139 : vector<8x8xf32>
    %141 = math.exp %140 : vector<8x8xf32>
    %cst_57 = arith.constant dense<0.000000e+00> : vector<8xf32>
    %142 = vector.multi_reduction <add>, %141, %cst_57 [1] : vector<8x8xf32> to vector<8xf32>
    %143 = vector.shape_cast %142 : vector<8xf32> to vector<8x1xf32>
    %144 = tpu.reciprocal %143 {approx = true} : vector<8x1xf32> -> vector<8x1xf32>
    %145 = vector.broadcast %144 : vector<8x1xf32> to vector<8x8xf32>
    %146 = arith.mulf %141, %145 : vector<8x8xf32>
    %147 = arith.truncf %146 : vector<8x8xf32> to vector<8x8xbf16>
    %cst_58 = arith.constant dense<0.000000e+00> : vector<8x8xf32>
    %148 = tpu.matmul %147, %132, %cst_58 {dimension_numbers = #tpu.dot_dimension_numbers<[1], [0], [0], [1], [0, 0, 1, 1], [], []>} : vector<8x8xbf16>, vector<8x8xbf16>, vector<8x8xf32> -> vector<8x8xf32>
    %149 = vector.extract_strided_slice %76 {offsets = [0, 24], sizes = [8, 8], strides = [1, 1]} : vector<8x96xf32> to vector<8x8xf32>
    %150 = arith.truncf %149 : vector<8x8xf32> to vector<8x8xbf16>
    %151 = vector.extract_strided_slice %76 {offsets = [0, 56], sizes = [8, 8], strides = [1, 1]} : vector<8x96xf32> to vector<8x8xf32>
    %152 = arith.truncf %151 : vector<8x8xf32> to vector<8x8xbf16>
    %153 = vector.extract_strided_slice %76 {offsets = [0, 88], sizes = [8, 8], strides = [1, 1]} : vector<8x96xf32> to vector<8x8xf32>
    %154 = arith.truncf %153 : vector<8x8xf32> to vector<8x8xbf16>
    %cst_59 = arith.constant dense<0.000000e+00> : vector<8x8xf32>
    %155 = tpu.matmul %150, %152, %cst_59 {dimension_numbers = #tpu.dot_dimension_numbers<[1], [1], [0], [0], [0, 0, 1, 0], [], []>} : vector<8x8xbf16>, vector<8x8xbf16>, vector<8x8xf32> -> vector<8x8xf32>
    %cst_60 = arith.constant 0.353553385 : f32
    %156 = vector.broadcast %cst_60 : f32 to vector<8x8xf32>
    %157 = arith.mulf %155, %156 : vector<8x8xf32>
    %158 = arith.addf %157, %82 : vector<8x8xf32>
    %cst_61 = arith.constant dense<0xFF800000> : vector<8xf32>
    %159 = vector.multi_reduction <maximumf>, %158, %cst_61 [1] : vector<8x8xf32> to vector<8xf32>
    %160 = vector.shape_cast %159 : vector<8xf32> to vector<8x1xf32>
    %161 = vector.broadcast %160 : vector<8x1xf32> to vector<8x8xf32>
    %162 = arith.subf %158, %161 : vector<8x8xf32>
    %163 = math.exp %162 : vector<8x8xf32>
    %cst_62 = arith.constant dense<0.000000e+00> : vector<8xf32>
    %164 = vector.multi_reduction <add>, %163, %cst_62 [1] : vector<8x8xf32> to vector<8xf32>
    %165 = vector.shape_cast %164 : vector<8xf32> to vector<8x1xf32>
    %166 = tpu.reciprocal %165 {approx = true} : vector<8x1xf32> -> vector<8x1xf32>
    %167 = vector.broadcast %166 : vector<8x1xf32> to vector<8x8xf32>
    %168 = arith.mulf %163, %167 : vector<8x8xf32>
    %169 = arith.truncf %168 : vector<8x8xf32> to vector<8x8xbf16>
    %cst_63 = arith.constant dense<0.000000e+00> : vector<8x8xf32>
    %170 = tpu.matmul %169, %154, %cst_63 {dimension_numbers = #tpu.dot_dimension_numbers<[1], [0], [0], [1], [0, 0, 1, 1], [], []>} : vector<8x8xbf16>, vector<8x8xbf16>, vector<8x8xf32> -> vector<8x8xf32>
    %171 = tpu.concatenate %104, %126, %148, %170 in 1 : vector<8x8xf32>, vector<8x8xf32>, vector<8x8xf32>, vector<8x8xf32> -> vector<8x32xf32>
    %172 = arith.truncf %171 : vector<8x32xf32> to vector<8x32xbf16>
    %c0_64 = arith.constant 0 : index
    %c0_65 = arith.constant 0 : index
    %173 = vector.load %arg6[%c0_64, %c0_65] : memref<32x32xbf16, #tpu.memory_space<vmem>>, vector<32x32xbf16>
    %cst_66 = arith.constant dense<0.000000e+00> : vector<8x32xf32>
    %174 = tpu.matmul %172, %173, %cst_66 {dimension_numbers = #tpu.dot_dimension_numbers<[1], [0], [0], [1], [0, 0, 1, 1], [], []>} : vector<8x32xbf16>, vector<32x32xbf16>, vector<8x32xf32> -> vector<8x32xf32>
    %c0_67 = arith.constant 0 : index
    %c0_68 = arith.constant 0 : index
    %175 = vector.load %arg7[%c0_67, %c0_68] : memref<1x32xf32, #tpu.memory_space<vmem>>, vector<1x32xf32>
    %176 = vector.broadcast %175 : vector<1x32xf32> to vector<8x32xf32>
    %177 = arith.addf %174, %176 : vector<8x32xf32>
    %cst_69 = arith.constant 0.000000e+00 : f32
    %178 = vector.broadcast %cst_69 : f32 to vector<8x32xf32>
    %179 = arith.cmpf oge, %177, %178 : vector<8x32xf32>
    %c0_70 = arith.constant 0 : index
    %c0_71 = arith.constant 0 : index
    %180 = vector.load %arg8[%c0_70, %c0_71] : memref<1x32xf32, #tpu.memory_space<vmem>>, vector<1x32xf32>
    %181 = vector.broadcast %180 : vector<1x32xf32> to vector<8x32xf32>
    %182 = arith.mulf %177, %181 : vector<8x32xf32>
    %183 = arith.select %179, %177, %182 : vector<8x32xi1>, vector<8x32xf32>
    %cst_72 = arith.constant 0.000000e+00 : f32
    %184 = vector.broadcast %cst_72 : f32 to vector<8x32xf32>
    %185 = arith.cmpf oge, %177, %184 : vector<8x32xf32>
    %c0_73 = arith.constant 0 : index
    %c0_74 = arith.constant 0 : index
    %186 = vector.load %arg11[%c0_73, %c0_74] : memref<1x32xf32, #tpu.memory_space<vmem>>, vector<1x32xf32>
    %187 = vector.broadcast %186 : vector<1x32xf32> to vector<8x32xf32>
    %188 = arith.mulf %177, %187 : vector<8x32xf32>
    %189 = arith.select %185, %177, %188 : vector<8x32xi1>, vector<8x32xf32>
    %190 = arith.truncf %183 : vector<8x32xf32> to vector<8x32xbf16>
    %c0_75 = arith.constant 0 : index
    %c0_76 = arith.constant 0 : index
    %191 = vector.load %arg9[%c0_75, %c0_76] : memref<32x16xbf16, #tpu.memory_space<vmem>>, vector<32x16xbf16>
    %cst_77 = arith.constant dense<0.000000e+00> : vector<8x16xf32>
    %192 = tpu.matmul %190, %191, %cst_77 {dimension_numbers = #tpu.dot_dimension_numbers<[1], [0], [0], [1], [0, 0, 1, 1], [], []>} : vector<8x32xbf16>, vector<32x16xbf16>, vector<8x16xf32> -> vector<8x16xf32>
    %c0_78 = arith.constant 0 : index
    %c0_79 = arith.constant 0 : index
    %193 = vector.load %arg10[%c0_78, %c0_79] : memref<1x16xf32, #tpu.memory_space<vmem>>, vector<1x16xf32>
    %194 = vector.broadcast %193 : vector<1x16xf32> to vector<8x16xf32>
    %195 = arith.addf %192, %194 : vector<8x16xf32>
    %c0_80 = arith.constant 0 : index
    %c0_81 = arith.constant 0 : index
    %c0_82 = arith.constant 0 : index
    %196 = vector.load %arg14[%c0_80, %c0_81, %c0_82] : memref<1x8x16xf32, #tpu.memory_space<vmem>>, vector<1x8x16xf32>
    %197 = vector.shape_cast %196 : vector<1x8x16xf32> to vector<8x16xf32>
    %198 = vector.shape_cast %195 : vector<8x16xf32> to vector<1x8x16xf32>
    tpu.vector_store %arg14[%c0_80, %c0_81, %c0_82], %198 {strides = array<i32>} : memref<1x8x16xf32, #tpu.memory_space<vmem>>, vector<1x8x16xf32>,
    %199 = arith.truncf %189 : vector<8x32xf32> to vector<8x32xbf16>
    %c0_83 = arith.constant 0 : index
    %c0_84 = arith.constant 0 : index
    %200 = vector.load %arg12[%c0_83, %c0_84] : memref<32x32xbf16, #tpu.memory_space<vmem>>, vector<32x32xbf16>
    %cst_85 = arith.constant dense<0.000000e+00> : vector<8x32xf32>
    %201 = tpu.matmul %199, %200, %cst_85 {dimension_numbers = #tpu.dot_dimension_numbers<[1], [0], [0], [1], [0, 0, 1, 1], [], []>} : vector<8x32xbf16>, vector<32x32xbf16>, vector<8x32xf32> -> vector<8x32xf32>
    %c0_86 = arith.constant 0 : index
    %c0_87 = arith.constant 0 : index
    %202 = vector.load %arg13[%c0_86, %c0_87] : memref<1x32xf32, #tpu.memory_space<vmem>>, vector<1x32xf32>
    %203 = vector.broadcast %202 : vector<1x32xf32> to vector<8x32xf32>
    %204 = arith.addf %201, %203 : vector<8x32xf32>
    %c0_88 = arith.constant 0 : index
    %c0_89 = arith.constant 0 : index
    %c0_90 = arith.constant 0 : index
    %205 = vector.load %arg15[%c0_88, %c0_89, %c0_90] : memref<1x8x32xf32, #tpu.memory_space<vmem>>, vector<1x8x32xf32>
    %206 = vector.shape_cast %205 : vector<1x8x32xf32> to vector<8x32xf32>
    %207 = vector.shape_cast %204 : vector<8x32xf32> to vector<1x8x32xf32>
    tpu.vector_store %arg15[%c0_88, %c0_89, %c0_90], %207 {strides = array<i32>} : memref<1x8x32xf32, #tpu.memory_space<vmem>>, vector<1x8x32xf32>,
    return
  }
  func.func @transform_0(%arg0: i32) -> (i32, i32, i32, i32) {
    %c0_i32 = arith.constant 0 : i32
    %c0_i32_0 = arith.constant 0 : i32
    %c0_i32_1 = arith.constant 0 : i32
    %c0_i32_2 = arith.constant 0 : i32
    return %c0_i32, %arg0, %c0_i32_0, %c0_i32_1 : i32, i32, i32, i32
  }
  func.func @transform_1(%arg0: i32) -> (i32, i32, i32, i32) {
    %c0_i32 = arith.constant 0 : i32
    %c0_i32_0 = arith.constant 0 : i32
    %c0_i32_1 = arith.constant 0 : i32
    %c0_i32_2 = arith.constant 0 : i32
    return %c0_i32, %arg0, %c0_i32_0, %c0_i32_1 : i32, i32, i32, i32
  }
  func.func @transform_2(%arg0: i32) -> (i32, i32) {
    %c0_i32 = arith.constant 0 : i32
    %c0_i32_0 = arith.constant 0 : i32
    %c0_i32_1 = arith.constant 0 : i32
    return %c0_i32, %c0_i32_0 : i32, i32
  }
  func.func @transform_3(%arg0: i32) -> (i32, i32) {
    %c0_i32 = arith.constant 0 : i32
    %c0_i32_0 = arith.constant 0 : i32
    %c0_i32_1 = arith.constant 0 : i32
    return %c0_i32, %c0_i32_0 : i32, i32
  }
  func.func @transform_4(%arg0: i32) -> (i32, i32) {
    %c0_i32 = arith.constant 0 : i32
    %c0_i32_0 = arith.constant 0 : i32
    %c0_i32_1 = arith.constant 0 : i32
    return %c0_i32, %c0_i32_0 : i32, i32
  }
  func.func @transform_5(%arg0: i32) -> (i32, i32) {
    %c0_i32 = arith.constant 0 : i32
    %c0_i32_0 = arith.constant 0 : i32
    %c0_i32_1 = arith.constant 0 : i32
    return %c0_i32, %c0_i32_0 : i32, i32
  }
  func.func @transform_6(%arg0: i32) -> (i32, i32) {
    %c0_i32 = arith.constant 0 : i32
    %c0_i32_0 = arith.constant 0 : i32
    %c0_i32_1 = arith.constant 0 : i32
    return %c0_i32, %c0_i32_0 : i32, i32
  }
  func.func @transform_7(%arg0: i32) -> (i32, i32) {
    %c0_i32 = arith.constant 0 : i32
    %c0_i32_0 = arith.constant 0 : i32
    %c0_i32_1 = arith.constant 0 : i32
    return %c0_i32, %c0_i32_0 : i32, i32
  }
  func.func @transform_8(%arg0: i32) -> (i32, i32) {
    %c0_i32 = arith.constant 0 : i32
    %c0_i32_0 = arith.constant 0 : i32
    %c0_i32_1 = arith.constant 0 : i32
    return %c0_i32, %c0_i32_0 : i32, i32
  }
  func.func @transform_9(%arg0: i32) -> (i32, i32) {
    %c0_i32 = arith.constant 0 : i32
    %c0_i32_0 = arith.constant 0 : i32
    %c0_i32_1 = arith.constant 0 : i32
    return %c0_i32, %c0_i32_0 : i32, i32
  }
  func.func @transform_10(%arg0: i32) -> (i32, i32) {
    %c0_i32 = arith.constant 0 : i32
    %c0_i32_0 = arith.constant 0 : i32
    %c0_i32_1 = arith.constant 0 : i32
    return %c0_i32, %c0_i32_0 : i32, i32
  }
  func.func @transform_11(%arg0: i32) -> (i32, i32) {
    %c0_i32 = arith.constant 0 : i32
    %c0_i32_0 = arith.constant 0 : i32
    %c0_i32_1 = arith.constant 0 : i32
    return %c0_i32, %c0_i32_0 : i32, i32
  }
  func.func @transform_12(%arg0: i32) -> (i32, i32) {
    %c0_i32 = arith.constant 0 : i32
    %c0_i32_0 = arith.constant 0 : i32
    %c0_i32_1 = arith.constant 0 : i32
    return %c0_i32, %c0_i32_0 : i32, i32
  }
  func.func @transform_13(%arg0: i32) -> (i32, i32, i32) {
    %c0_i32 = arith.constant 0 : i32
    %c0_i32_0 = arith.constant 0 : i32
    %c0_i32_1 = arith.constant 0 : i32
    return %arg0, %c0_i32, %c0_i32_0 : i32, i32, i32
  }
  func.func @transform_14(%arg0: i32) -> (i32, i32, i32) {
    %c0_i32 = arith.constant 0 : i32
    %c0_i32_0 = arith.constant 0 : i32
    %c0_i32_1 = arith.constant 0 : i32
    return %arg0, %c0_i32, %c0_i32_0 : i32, i32, i32
  }
}

module attributes {stable_mosaic.version = 11 : i64} {
  func.func @_ff_block_kernel(%arg0: i32, %arg1: memref<5x16x16xf32, #tpu.memory_space<vmem>>, %arg2: memref<5x16x32xf32, #tpu.memory_space<vmem>>, %arg3: memref<1x16xf32, #tpu.memory_space<vmem>>, %arg4: memref<32x64xbf16, #tpu.memory_space<vmem>>, %arg5: memref<1x64xf32, #tpu.memory_space<vmem>>, %arg6: memref<1x64xf32, #tpu.memory_space<vmem>>, %arg7: memref<1x64xf32, #tpu.memory_space<vmem>>, %arg8: memref<1x64xf32, #tpu.memory_space<vmem>>, %arg9: memref<1x64xf32, #tpu.memory_space<vmem>>, %arg10: memref<64x32xbf16, #tpu.memory_space<vmem>>, %arg11: memref<1x32xf32, #tpu.memory_space<vmem>>, %arg12: memref<64x16xbf16, #tpu.memory_space<vmem>>, %arg13: memref<1x16xf32, #tpu.memory_space<vmem>>, %arg14: memref<16x16xf32, #tpu.memory_space<vmem>>, %arg15: memref<16x32xf32, #tpu.memory_space<vmem>>) attributes {dimension_semantics = [#tpu.dimension_semantics<parallel>], iteration_bounds = array<i64: 1>, scalar_prefetch = 0 : i64, scratch_operands = 0 : i64, tpu.core_type = #tpu.core_type<tc>, window_params = [{transform_indices = @transform_0, window_bounds = array<i64: 5, 16, 16>}, {transform_indices = @transform_1, window_bounds = array<i64: 5, 16, 32>}, {pipeline_mode = #tpu.pipeline_mode<synchronous>, transform_indices = @transform_2, window_bounds = array<i64: 1, 16>}, {pipeline_mode = #tpu.pipeline_mode<synchronous>, transform_indices = @transform_3, window_bounds = array<i64: 32, 64>}, {pipeline_mode = #tpu.pipeline_mode<synchronous>, transform_indices = @transform_4, window_bounds = array<i64: 1, 64>}, {pipeline_mode = #tpu.pipeline_mode<synchronous>, transform_indices = @transform_5, window_bounds = array<i64: 1, 64>}, {pipeline_mode = #tpu.pipeline_mode<synchronous>, transform_indices = @transform_6, window_bounds = array<i64: 1, 64>}, {pipeline_mode = #tpu.pipeline_mode<synchronous>, transform_indices = @transform_7, window_bounds = array<i64: 1, 64>}, {pipeline_mode = #tpu.pipeline_mode<synchronous>, transform_indices = @transform_8, window_bounds = array<i64: 1, 64>}, {pipeline_mode = #tpu.pipeline_mode<synchronous>, transform_indices = @transform_9, window_bounds = array<i64: 64, 32>}, {pipeline_mode = #tpu.pipeline_mode<synchronous>, transform_indices = @transform_10, window_bounds = array<i64: 1, 32>}, {pipeline_mode = #tpu.pipeline_mode<synchronous>, transform_indices = @transform_11, window_bounds = array<i64: 64, 16>}, {pipeline_mode = #tpu.pipeline_mode<synchronous>, transform_indices = @transform_12, window_bounds = array<i64: 1, 16>}, {transform_indices = @transform_13, window_bounds = array<i64: 16, 16>}, {transform_indices = @transform_14, window_bounds = array<i64: 16, 32>}]} {
    %c0 = arith.constant 0 : index
    %c0_0 = arith.constant 0 : index
    %0 = vector.load %arg3[%c0, %c0_0] : memref<1x16xf32, #tpu.memory_space<vmem>>, vector<1x16xf32>
    %c0_1 = arith.constant 0 : index
    %c0_2 = arith.constant 0 : index
    %c0_3 = arith.constant 0 : index
    %1 = vector.load %arg1[%c0_1, %c0_2, %c0_3] : memref<5x16x16xf32, #tpu.memory_space<vmem>>, vector<1x16x16xf32>
    %2 = vector.shape_cast %1 : vector<1x16x16xf32> to vector<16x16xf32>
    %3 = vector.broadcast %0 : vector<1x16xf32> to vector<16x16xf32>
    %4 = arith.mulf %2, %3 : vector<16x16xf32>
    %cst = arith.constant dense<0.000000e+00> : vector<16xf32>
    %5 = vector.multi_reduction <add>, %4, %cst [1] : vector<16x16xf32> to vector<16xf32>
    %6 = vector.shape_cast %5 : vector<16xf32> to vector<16x1xf32>
    %cst_4 = arith.constant 2.500000e-01 : f32
    %7 = vector.broadcast %cst_4 : f32 to vector<16x1xf32>
    %8 = arith.mulf %6, %7 : vector<16x1xf32>
    %c1 = arith.constant 1 : index
    %c0_5 = arith.constant 0 : index
    %c0_6 = arith.constant 0 : index
    %9 = vector.load %arg1[%c1, %c0_5, %c0_6] : memref<5x16x16xf32, #tpu.memory_space<vmem>>, vector<1x16x16xf32>
    %10 = vector.shape_cast %9 : vector<1x16x16xf32> to vector<16x16xf32>
    %11 = vector.broadcast %0 : vector<1x16xf32> to vector<16x16xf32>
    %12 = arith.mulf %10, %11 : vector<16x16xf32>
    %cst_7 = arith.constant dense<0.000000e+00> : vector<16xf32>
    %13 = vector.multi_reduction <add>, %12, %cst_7 [1] : vector<16x16xf32> to vector<16xf32>
    %14 = vector.shape_cast %13 : vector<16xf32> to vector<16x1xf32>
    %cst_8 = arith.constant 2.500000e-01 : f32
    %15 = vector.broadcast %cst_8 : f32 to vector<16x1xf32>
    %16 = arith.mulf %14, %15 : vector<16x1xf32>
    %c2 = arith.constant 2 : index
    %c0_9 = arith.constant 0 : index
    %c0_10 = arith.constant 0 : index
    %17 = vector.load %arg1[%c2, %c0_9, %c0_10] : memref<5x16x16xf32, #tpu.memory_space<vmem>>, vector<1x16x16xf32>
    %18 = vector.shape_cast %17 : vector<1x16x16xf32> to vector<16x16xf32>
    %19 = vector.broadcast %0 : vector<1x16xf32> to vector<16x16xf32>
    %20 = arith.mulf %18, %19 : vector<16x16xf32>
    %cst_11 = arith.constant dense<0.000000e+00> : vector<16xf32>
    %21 = vector.multi_reduction <add>, %20, %cst_11 [1] : vector<16x16xf32> to vector<16xf32>
    %22 = vector.shape_cast %21 : vector<16xf32> to vector<16x1xf32>
    %cst_12 = arith.constant 2.500000e-01 : f32
    %23 = vector.broadcast %cst_12 : f32 to vector<16x1xf32>
    %24 = arith.mulf %22, %23 : vector<16x1xf32>
    %c3 = arith.constant 3 : index
    %c0_13 = arith.constant 0 : index
    %c0_14 = arith.constant 0 : index
    %25 = vector.load %arg1[%c3, %c0_13, %c0_14] : memref<5x16x16xf32, #tpu.memory_space<vmem>>, vector<1x16x16xf32>
    %26 = vector.shape_cast %25 : vector<1x16x16xf32> to vector<16x16xf32>
    %27 = vector.broadcast %0 : vector<1x16xf32> to vector<16x16xf32>
    %28 = arith.mulf %26, %27 : vector<16x16xf32>
    %cst_15 = arith.constant dense<0.000000e+00> : vector<16xf32>
    %29 = vector.multi_reduction <add>, %28, %cst_15 [1] : vector<16x16xf32> to vector<16xf32>
    %30 = vector.shape_cast %29 : vector<16xf32> to vector<16x1xf32>
    %cst_16 = arith.constant 2.500000e-01 : f32
    %31 = vector.broadcast %cst_16 : f32 to vector<16x1xf32>
    %32 = arith.mulf %30, %31 : vector<16x1xf32>
    %c4 = arith.constant 4 : index
    %c0_17 = arith.constant 0 : index
    %c0_18 = arith.constant 0 : index
    %33 = vector.load %arg1[%c4, %c0_17, %c0_18] : memref<5x16x16xf32, #tpu.memory_space<vmem>>, vector<1x16x16xf32>
    %34 = vector.shape_cast %33 : vector<1x16x16xf32> to vector<16x16xf32>
    %35 = vector.broadcast %0 : vector<1x16xf32> to vector<16x16xf32>
    %36 = arith.mulf %34, %35 : vector<16x16xf32>
    %cst_19 = arith.constant dense<0.000000e+00> : vector<16xf32>
    %37 = vector.multi_reduction <add>, %36, %cst_19 [1] : vector<16x16xf32> to vector<16xf32>
    %38 = vector.shape_cast %37 : vector<16xf32> to vector<16x1xf32>
    %cst_20 = arith.constant 2.500000e-01 : f32
    %39 = vector.broadcast %cst_20 : f32 to vector<16x1xf32>
    %40 = arith.mulf %38, %39 : vector<16x1xf32>
    %41 = arith.maximumf %8, %16 : vector<16x1xf32>
    %42 = arith.maximumf %41, %24 : vector<16x1xf32>
    %43 = arith.maximumf %42, %32 : vector<16x1xf32>
    %44 = arith.maximumf %43, %40 : vector<16x1xf32>
    %45 = arith.subf %8, %44 : vector<16x1xf32>
    %46 = math.exp %45 : vector<16x1xf32>
    %47 = arith.subf %16, %44 : vector<16x1xf32>
    %48 = math.exp %47 : vector<16x1xf32>
    %49 = arith.subf %24, %44 : vector<16x1xf32>
    %50 = math.exp %49 : vector<16x1xf32>
    %51 = arith.subf %32, %44 : vector<16x1xf32>
    %52 = math.exp %51 : vector<16x1xf32>
    %53 = arith.subf %40, %44 : vector<16x1xf32>
    %54 = math.exp %53 : vector<16x1xf32>
    %55 = arith.addf %46, %48 : vector<16x1xf32>
    %56 = arith.addf %55, %50 : vector<16x1xf32>
    %57 = arith.addf %56, %52 : vector<16x1xf32>
    %58 = arith.addf %57, %54 : vector<16x1xf32>
    %59 = tpu.reciprocal %58 {approx = true} : vector<16x1xf32> -> vector<16x1xf32>
    %60 = arith.mulf %46, %59 : vector<16x1xf32>
    %c0_21 = arith.constant 0 : index
    %c0_22 = arith.constant 0 : index
    %c0_23 = arith.constant 0 : index
    %61 = vector.load %arg2[%c0_21, %c0_22, %c0_23] : memref<5x16x32xf32, #tpu.memory_space<vmem>>, vector<1x16x32xf32>
    %62 = vector.shape_cast %61 : vector<1x16x32xf32> to vector<16x32xf32>
    %63 = vector.broadcast %60 : vector<16x1xf32> to vector<16x32xf32>
    %64 = arith.mulf %63, %62 : vector<16x32xf32>
    %65 = arith.mulf %48, %59 : vector<16x1xf32>
    %c1_24 = arith.constant 1 : index
    %c0_25 = arith.constant 0 : index
    %c0_26 = arith.constant 0 : index
    %66 = vector.load %arg2[%c1_24, %c0_25, %c0_26] : memref<5x16x32xf32, #tpu.memory_space<vmem>>, vector<1x16x32xf32>
    %67 = vector.shape_cast %66 : vector<1x16x32xf32> to vector<16x32xf32>
    %68 = vector.broadcast %65 : vector<16x1xf32> to vector<16x32xf32>
    %69 = arith.mulf %68, %67 : vector<16x32xf32>
    %70 = arith.addf %64, %69 : vector<16x32xf32>
    %71 = arith.mulf %50, %59 : vector<16x1xf32>
    %c2_27 = arith.constant 2 : index
    %c0_28 = arith.constant 0 : index
    %c0_29 = arith.constant 0 : index
    %72 = vector.load %arg2[%c2_27, %c0_28, %c0_29] : memref<5x16x32xf32, #tpu.memory_space<vmem>>, vector<1x16x32xf32>
    %73 = vector.shape_cast %72 : vector<1x16x32xf32> to vector<16x32xf32>
    %74 = vector.broadcast %71 : vector<16x1xf32> to vector<16x32xf32>
    %75 = arith.mulf %74, %73 : vector<16x32xf32>
    %76 = arith.addf %70, %75 : vector<16x32xf32>
    %77 = arith.mulf %52, %59 : vector<16x1xf32>
    %c3_30 = arith.constant 3 : index
    %c0_31 = arith.constant 0 : index
    %c0_32 = arith.constant 0 : index
    %78 = vector.load %arg2[%c3_30, %c0_31, %c0_32] : memref<5x16x32xf32, #tpu.memory_space<vmem>>, vector<1x16x32xf32>
    %79 = vector.shape_cast %78 : vector<1x16x32xf32> to vector<16x32xf32>
    %80 = vector.broadcast %77 : vector<16x1xf32> to vector<16x32xf32>
    %81 = arith.mulf %80, %79 : vector<16x32xf32>
    %82 = arith.addf %76, %81 : vector<16x32xf32>
    %83 = arith.mulf %54, %59 : vector<16x1xf32>
    %c4_33 = arith.constant 4 : index
    %c0_34 = arith.constant 0 : index
    %c0_35 = arith.constant 0 : index
    %84 = vector.load %arg2[%c4_33, %c0_34, %c0_35] : memref<5x16x32xf32, #tpu.memory_space<vmem>>, vector<1x16x32xf32>
    %85 = vector.shape_cast %84 : vector<1x16x32xf32> to vector<16x32xf32>
    %86 = vector.broadcast %83 : vector<16x1xf32> to vector<16x32xf32>
    %87 = arith.mulf %86, %85 : vector<16x32xf32>
    %88 = arith.addf %82, %87 : vector<16x32xf32>
    %89 = arith.truncf %88 : vector<16x32xf32> to vector<16x32xbf16>
    %c0_36 = arith.constant 0 : index
    %c0_37 = arith.constant 0 : index
    %90 = vector.load %arg4[%c0_36, %c0_37] : memref<32x64xbf16, #tpu.memory_space<vmem>>, vector<32x64xbf16>
    %cst_38 = arith.constant dense<0.000000e+00> : vector<16x64xf32>
    %91 = tpu.matmul %89, %90, %cst_38 {dimension_numbers = #tpu.dot_dimension_numbers<[1], [0], [0], [1], [0, 0, 1, 1], [], []>} : vector<16x32xbf16>, vector<32x64xbf16>, vector<16x64xf32> -> vector<16x64xf32>
    %c0_39 = arith.constant 0 : index
    %c0_40 = arith.constant 0 : index
    %92 = vector.load %arg5[%c0_39, %c0_40] : memref<1x64xf32, #tpu.memory_space<vmem>>, vector<1x64xf32>
    %93 = vector.broadcast %92 : vector<1x64xf32> to vector<16x64xf32>
    %94 = arith.addf %91, %93 : vector<16x64xf32>
    %c0_41 = arith.constant 0 : index
    %c0_42 = arith.constant 0 : index
    %95 = vector.load %arg6[%c0_41, %c0_42] : memref<1x64xf32, #tpu.memory_space<vmem>>, vector<1x64xf32>
    %96 = vector.broadcast %95 : vector<1x64xf32> to vector<16x64xf32>
    %97 = arith.mulf %94, %96 : vector<16x64xf32>
    %c0_43 = arith.constant 0 : index
    %c0_44 = arith.constant 0 : index
    %98 = vector.load %arg7[%c0_43, %c0_44] : memref<1x64xf32, #tpu.memory_space<vmem>>, vector<1x64xf32>
    %99 = vector.broadcast %98 : vector<1x64xf32> to vector<16x64xf32>
    %100 = arith.addf %97, %99 : vector<16x64xf32>
    %101 = arith.negf %100 : vector<16x64xf32>
    %102 = math.exp %101 : vector<16x64xf32>
    %cst_45 = arith.constant 1.000000e+00 : f32
    %103 = vector.broadcast %cst_45 : f32 to vector<16x64xf32>
    %104 = arith.addf %103, %102 : vector<16x64xf32>
    %105 = arith.divf %103, %104 : vector<16x64xf32>
    %106 = arith.mulf %105, %94 : vector<16x64xf32>
    %c0_46 = arith.constant 0 : index
    %c0_47 = arith.constant 0 : index
    %107 = vector.load %arg8[%c0_46, %c0_47] : memref<1x64xf32, #tpu.memory_space<vmem>>, vector<1x64xf32>
    %108 = vector.broadcast %107 : vector<1x64xf32> to vector<16x64xf32>
    %109 = arith.mulf %94, %108 : vector<16x64xf32>
    %c0_48 = arith.constant 0 : index
    %c0_49 = arith.constant 0 : index
    %110 = vector.load %arg9[%c0_48, %c0_49] : memref<1x64xf32, #tpu.memory_space<vmem>>, vector<1x64xf32>
    %111 = vector.broadcast %110 : vector<1x64xf32> to vector<16x64xf32>
    %112 = arith.addf %109, %111 : vector<16x64xf32>
    %113 = arith.negf %112 : vector<16x64xf32>
    %114 = math.exp %113 : vector<16x64xf32>
    %cst_50 = arith.constant 1.000000e+00 : f32
    %115 = vector.broadcast %cst_50 : f32 to vector<16x64xf32>
    %116 = arith.addf %115, %114 : vector<16x64xf32>
    %117 = arith.divf %115, %116 : vector<16x64xf32>
    %118 = arith.mulf %117, %94 : vector<16x64xf32>
    %119 = arith.truncf %106 : vector<16x64xf32> to vector<16x64xbf16>
    %c0_51 = arith.constant 0 : index
    %c0_52 = arith.constant 0 : index
    %120 = vector.load %arg10[%c0_51, %c0_52] : memref<64x32xbf16, #tpu.memory_space<vmem>>, vector<64x32xbf16>
    %cst_53 = arith.constant dense<0.000000e+00> : vector<16x32xf32>
    %121 = tpu.matmul %119, %120, %cst_53 {dimension_numbers = #tpu.dot_dimension_numbers<[1], [0], [0], [1], [0, 0, 1, 1], [], []>} : vector<16x64xbf16>, vector<64x32xbf16>, vector<16x32xf32> -> vector<16x32xf32>
    %c0_54 = arith.constant 0 : index
    %c0_55 = arith.constant 0 : index
    %122 = vector.load %arg11[%c0_54, %c0_55] : memref<1x32xf32, #tpu.memory_space<vmem>>, vector<1x32xf32>
    %123 = vector.broadcast %122 : vector<1x32xf32> to vector<16x32xf32>
    %124 = arith.addf %121, %123 : vector<16x32xf32>
    %c0_56 = arith.constant 0 : index
    %c0_57 = arith.constant 0 : index
    %125 = vector.load %arg15[%c0_56, %c0_57] : memref<16x32xf32, #tpu.memory_space<vmem>>, vector<16x32xf32>
    tpu.vector_store %arg15[%c0_56, %c0_57], %124 {strides = array<i32>} : memref<16x32xf32, #tpu.memory_space<vmem>>, vector<16x32xf32>,
    %126 = arith.truncf %118 : vector<16x64xf32> to vector<16x64xbf16>
    %c0_58 = arith.constant 0 : index
    %c0_59 = arith.constant 0 : index
    %127 = vector.load %arg12[%c0_58, %c0_59] : memref<64x16xbf16, #tpu.memory_space<vmem>>, vector<64x16xbf16>
    %cst_60 = arith.constant dense<0.000000e+00> : vector<16x16xf32>
    %128 = tpu.matmul %126, %127, %cst_60 {dimension_numbers = #tpu.dot_dimension_numbers<[1], [0], [0], [1], [0, 0, 1, 1], [], []>} : vector<16x64xbf16>, vector<64x16xbf16>, vector<16x16xf32> -> vector<16x16xf32>
    %c0_61 = arith.constant 0 : index
    %c0_62 = arith.constant 0 : index
    %129 = vector.load %arg13[%c0_61, %c0_62] : memref<1x16xf32, #tpu.memory_space<vmem>>, vector<1x16xf32>
    %130 = vector.broadcast %129 : vector<1x16xf32> to vector<16x16xf32>
    %131 = arith.addf %128, %130 : vector<16x16xf32>
    %c0_63 = arith.constant 0 : index
    %c0_64 = arith.constant 0 : index
    %132 = vector.load %arg14[%c0_63, %c0_64] : memref<16x16xf32, #tpu.memory_space<vmem>>, vector<16x16xf32>
    tpu.vector_store %arg14[%c0_63, %c0_64], %131 {strides = array<i32>} : memref<16x16xf32, #tpu.memory_space<vmem>>, vector<16x16xf32>,
    return
  }
  func.func @transform_0(%arg0: i32) -> (i32, i32, i32) {
    %c0_i32 = arith.constant 0 : i32
    %c0_i32_0 = arith.constant 0 : i32
    %c0_i32_1 = arith.constant 0 : i32
    return %c0_i32, %arg0, %c0_i32_0 : i32, i32, i32
  }
  func.func @transform_1(%arg0: i32) -> (i32, i32, i32) {
    %c0_i32 = arith.constant 0 : i32
    %c0_i32_0 = arith.constant 0 : i32
    %c0_i32_1 = arith.constant 0 : i32
    return %c0_i32, %arg0, %c0_i32_0 : i32, i32, i32
  }
  func.func @transform_2(%arg0: i32) -> (i32, i32) {
    %c0_i32 = arith.constant 0 : i32
    %c0_i32_0 = arith.constant 0 : i32
    %c0_i32_1 = arith.constant 0 : i32
    return %c0_i32, %c0_i32_0 : i32, i32
  }
  func.func @transform_3(%arg0: i32) -> (i32, i32) {
    %c0_i32 = arith.constant 0 : i32
    %c0_i32_0 = arith.constant 0 : i32
    %c0_i32_1 = arith.constant 0 : i32
    return %c0_i32, %c0_i32_0 : i32, i32
  }
  func.func @transform_4(%arg0: i32) -> (i32, i32) {
    %c0_i32 = arith.constant 0 : i32
    %c0_i32_0 = arith.constant 0 : i32
    %c0_i32_1 = arith.constant 0 : i32
    return %c0_i32, %c0_i32_0 : i32, i32
  }
  func.func @transform_5(%arg0: i32) -> (i32, i32) {
    %c0_i32 = arith.constant 0 : i32
    %c0_i32_0 = arith.constant 0 : i32
    %c0_i32_1 = arith.constant 0 : i32
    return %c0_i32, %c0_i32_0 : i32, i32
  }
  func.func @transform_6(%arg0: i32) -> (i32, i32) {
    %c0_i32 = arith.constant 0 : i32
    %c0_i32_0 = arith.constant 0 : i32
    %c0_i32_1 = arith.constant 0 : i32
    return %c0_i32, %c0_i32_0 : i32, i32
  }
  func.func @transform_7(%arg0: i32) -> (i32, i32) {
    %c0_i32 = arith.constant 0 : i32
    %c0_i32_0 = arith.constant 0 : i32
    %c0_i32_1 = arith.constant 0 : i32
    return %c0_i32, %c0_i32_0 : i32, i32
  }
  func.func @transform_8(%arg0: i32) -> (i32, i32) {
    %c0_i32 = arith.constant 0 : i32
    %c0_i32_0 = arith.constant 0 : i32
    %c0_i32_1 = arith.constant 0 : i32
    return %c0_i32, %c0_i32_0 : i32, i32
  }
  func.func @transform_9(%arg0: i32) -> (i32, i32) {
    %c0_i32 = arith.constant 0 : i32
    %c0_i32_0 = arith.constant 0 : i32
    %c0_i32_1 = arith.constant 0 : i32
    return %c0_i32, %c0_i32_0 : i32, i32
  }
  func.func @transform_10(%arg0: i32) -> (i32, i32) {
    %c0_i32 = arith.constant 0 : i32
    %c0_i32_0 = arith.constant 0 : i32
    %c0_i32_1 = arith.constant 0 : i32
    return %c0_i32, %c0_i32_0 : i32, i32
  }
  func.func @transform_11(%arg0: i32) -> (i32, i32) {
    %c0_i32 = arith.constant 0 : i32
    %c0_i32_0 = arith.constant 0 : i32
    %c0_i32_1 = arith.constant 0 : i32
    return %c0_i32, %c0_i32_0 : i32, i32
  }
  func.func @transform_12(%arg0: i32) -> (i32, i32) {
    %c0_i32 = arith.constant 0 : i32
    %c0_i32_0 = arith.constant 0 : i32
    %c0_i32_1 = arith.constant 0 : i32
    return %c0_i32, %c0_i32_0 : i32, i32
  }
  func.func @transform_13(%arg0: i32) -> (i32, i32) {
    %c0_i32 = arith.constant 0 : i32
    %c0_i32_0 = arith.constant 0 : i32
    return %arg0, %c0_i32 : i32, i32
  }
  func.func @transform_14(%arg0: i32) -> (i32, i32) {
    %c0_i32 = arith.constant 0 : i32
    %c0_i32_0 = arith.constant 0 : i32
    return %arg0, %c0_i32 : i32, i32
  }
}

module attributes {stable_mosaic.version = 11 : i64} {
  func.func @_linear_kernel(%arg0: i32, %arg1: memref<2x64xf32, #tpu.memory_space<vmem>>, %arg2: memref<64x10xbf16, #tpu.memory_space<vmem>>, %arg3: memref<1x10xf32, #tpu.memory_space<vmem>>, %arg4: memref<2x10xf32, #tpu.memory_space<vmem>>) attributes {dimension_semantics = [#tpu.dimension_semantics<parallel>], iteration_bounds = array<i64: 1>, scalar_prefetch = 0 : i64, scratch_operands = 0 : i64, tpu.core_type = #tpu.core_type<tc>, window_params = [{transform_indices = @transform_0, window_bounds = array<i64: 2, 64>}, {pipeline_mode = #tpu.pipeline_mode<synchronous>, transform_indices = @transform_1, window_bounds = array<i64: 64, 10>}, {pipeline_mode = #tpu.pipeline_mode<synchronous>, transform_indices = @transform_2, window_bounds = array<i64: 1, 10>}, {transform_indices = @transform_3, window_bounds = array<i64: 2, 10>}]} {
    %c0 = arith.constant 0 : index
    %c0_0 = arith.constant 0 : index
    %0 = vector.load %arg1[%c0, %c0_0] : memref<2x64xf32, #tpu.memory_space<vmem>>, vector<2x64xf32>
    %1 = arith.truncf %0 : vector<2x64xf32> to vector<2x64xbf16>
    %c0_1 = arith.constant 0 : index
    %c0_2 = arith.constant 0 : index
    %2 = vector.load %arg2[%c0_1, %c0_2] : memref<64x10xbf16, #tpu.memory_space<vmem>>, vector<64x10xbf16>
    %cst = arith.constant dense<0.000000e+00> : vector<2x10xf32>
    %3 = tpu.matmul %1, %2, %cst {dimension_numbers = #tpu.dot_dimension_numbers<[1], [0], [0], [1], [0, 0, 1, 1], [], []>} : vector<2x64xbf16>, vector<64x10xbf16>, vector<2x10xf32> -> vector<2x10xf32>
    %c0_3 = arith.constant 0 : index
    %c0_4 = arith.constant 0 : index
    %4 = vector.load %arg3[%c0_3, %c0_4] : memref<1x10xf32, #tpu.memory_space<vmem>>, vector<1x10xf32>
    %5 = vector.broadcast %4 : vector<1x10xf32> to vector<2x10xf32>
    %6 = arith.addf %3, %5 : vector<2x10xf32>
    %c0_5 = arith.constant 0 : index
    %c0_6 = arith.constant 0 : index
    %7 = vector.load %arg4[%c0_5, %c0_6] : memref<2x10xf32, #tpu.memory_space<vmem>>, vector<2x10xf32>
    tpu.vector_store %arg4[%c0_5, %c0_6], %6 {strides = array<i32>} : memref<2x10xf32, #tpu.memory_space<vmem>>, vector<2x10xf32>,
    return
  }
  func.func @transform_0(%arg0: i32) -> (i32, i32) {
    %c0_i32 = arith.constant 0 : i32
    %c0_i32_0 = arith.constant 0 : i32
    return %arg0, %c0_i32 : i32, i32
  }
  func.func @transform_1(%arg0: i32) -> (i32, i32) {
    %c0_i32 = arith.constant 0 : i32
    %c0_i32_0 = arith.constant 0 : i32
    %c0_i32_1 = arith.constant 0 : i32
    return %c0_i32, %c0_i32_0 : i32, i32
  }
  func.func @transform_2(%arg0: i32) -> (i32, i32) {
    %c0_i32 = arith.constant 0 : i32
    %c0_i32_0 = arith.constant 0 : i32
    %c0_i32_1 = arith.constant 0 : i32
    return %c0_i32, %c0_i32_0 : i32, i32
  }
  func.func @transform_3(%arg0: i32) -> (i32, i32) {
    %c0_i32 = arith.constant 0 : i32
    %c0_i32_0 = arith.constant 0 : i32
    return %arg0, %c0_i32 : i32, i32
  }
}

module attributes {stable_mosaic.version = 11 : i64} {
  func.func @_agg_linear_kernel(%arg0: i32, %arg1: memref<6x2x16xf32, #tpu.memory_space<vmem>>, %arg2: memref<6x2x32xf32, #tpu.memory_space<vmem>>, %arg3: memref<1x16xf32, #tpu.memory_space<vmem>>, %arg4: memref<32x64xbf16, #tpu.memory_space<vmem>>, %arg5: memref<1x64xf32, #tpu.memory_space<vmem>>, %arg6: memref<2x64xf32, #tpu.memory_space<vmem>>) attributes {dimension_semantics = [#tpu.dimension_semantics<parallel>], iteration_bounds = array<i64: 1>, scalar_prefetch = 0 : i64, scratch_operands = 0 : i64, tpu.core_type = #tpu.core_type<tc>, window_params = [{transform_indices = @transform_0, window_bounds = array<i64: 6, 2, 16>}, {transform_indices = @transform_1, window_bounds = array<i64: 6, 2, 32>}, {pipeline_mode = #tpu.pipeline_mode<synchronous>, transform_indices = @transform_2, window_bounds = array<i64: 1, 16>}, {pipeline_mode = #tpu.pipeline_mode<synchronous>, transform_indices = @transform_3, window_bounds = array<i64: 32, 64>}, {pipeline_mode = #tpu.pipeline_mode<synchronous>, transform_indices = @transform_4, window_bounds = array<i64: 1, 64>}, {transform_indices = @transform_5, window_bounds = array<i64: 2, 64>}]} {
    %c0 = arith.constant 0 : index
    %c0_0 = arith.constant 0 : index
    %0 = vector.load %arg3[%c0, %c0_0] : memref<1x16xf32, #tpu.memory_space<vmem>>, vector<1x16xf32>
    %c0_1 = arith.constant 0 : index
    %c0_2 = arith.constant 0 : index
    %c0_3 = arith.constant 0 : index
    %1 = vector.load %arg1[%c0_1, %c0_2, %c0_3] : memref<6x2x16xf32, #tpu.memory_space<vmem>>, vector<1x2x16xf32>
    %2 = vector.shape_cast %1 : vector<1x2x16xf32> to vector<2x16xf32>
    %3 = vector.broadcast %0 : vector<1x16xf32> to vector<2x16xf32>
    %4 = arith.mulf %2, %3 : vector<2x16xf32>
    %cst = arith.constant dense<0.000000e+00> : vector<2xf32>
    %5 = vector.multi_reduction <add>, %4, %cst [1] : vector<2x16xf32> to vector<2xf32>
    %6 = vector.shape_cast %5 : vector<2xf32> to vector<2x1xf32>
    %cst_4 = arith.constant 2.500000e-01 : f32
    %7 = vector.broadcast %cst_4 : f32 to vector<2x1xf32>
    %8 = arith.mulf %6, %7 : vector<2x1xf32>
    %c1 = arith.constant 1 : index
    %c0_5 = arith.constant 0 : index
    %c0_6 = arith.constant 0 : index
    %9 = vector.load %arg1[%c1, %c0_5, %c0_6] : memref<6x2x16xf32, #tpu.memory_space<vmem>>, vector<1x2x16xf32>
    %10 = vector.shape_cast %9 : vector<1x2x16xf32> to vector<2x16xf32>
    %11 = vector.broadcast %0 : vector<1x16xf32> to vector<2x16xf32>
    %12 = arith.mulf %10, %11 : vector<2x16xf32>
    %cst_7 = arith.constant dense<0.000000e+00> : vector<2xf32>
    %13 = vector.multi_reduction <add>, %12, %cst_7 [1] : vector<2x16xf32> to vector<2xf32>
    %14 = vector.shape_cast %13 : vector<2xf32> to vector<2x1xf32>
    %cst_8 = arith.constant 2.500000e-01 : f32
    %15 = vector.broadcast %cst_8 : f32 to vector<2x1xf32>
    %16 = arith.mulf %14, %15 : vector<2x1xf32>
    %c2 = arith.constant 2 : index
    %c0_9 = arith.constant 0 : index
    %c0_10 = arith.constant 0 : index
    %17 = vector.load %arg1[%c2, %c0_9, %c0_10] : memref<6x2x16xf32, #tpu.memory_space<vmem>>, vector<1x2x16xf32>
    %18 = vector.shape_cast %17 : vector<1x2x16xf32> to vector<2x16xf32>
    %19 = vector.broadcast %0 : vector<1x16xf32> to vector<2x16xf32>
    %20 = arith.mulf %18, %19 : vector<2x16xf32>
    %cst_11 = arith.constant dense<0.000000e+00> : vector<2xf32>
    %21 = vector.multi_reduction <add>, %20, %cst_11 [1] : vector<2x16xf32> to vector<2xf32>
    %22 = vector.shape_cast %21 : vector<2xf32> to vector<2x1xf32>
    %cst_12 = arith.constant 2.500000e-01 : f32
    %23 = vector.broadcast %cst_12 : f32 to vector<2x1xf32>
    %24 = arith.mulf %22, %23 : vector<2x1xf32>
    %c3 = arith.constant 3 : index
    %c0_13 = arith.constant 0 : index
    %c0_14 = arith.constant 0 : index
    %25 = vector.load %arg1[%c3, %c0_13, %c0_14] : memref<6x2x16xf32, #tpu.memory_space<vmem>>, vector<1x2x16xf32>
    %26 = vector.shape_cast %25 : vector<1x2x16xf32> to vector<2x16xf32>
    %27 = vector.broadcast %0 : vector<1x16xf32> to vector<2x16xf32>
    %28 = arith.mulf %26, %27 : vector<2x16xf32>
    %cst_15 = arith.constant dense<0.000000e+00> : vector<2xf32>
    %29 = vector.multi_reduction <add>, %28, %cst_15 [1] : vector<2x16xf32> to vector<2xf32>
    %30 = vector.shape_cast %29 : vector<2xf32> to vector<2x1xf32>
    %cst_16 = arith.constant 2.500000e-01 : f32
    %31 = vector.broadcast %cst_16 : f32 to vector<2x1xf32>
    %32 = arith.mulf %30, %31 : vector<2x1xf32>
    %c4 = arith.constant 4 : index
    %c0_17 = arith.constant 0 : index
    %c0_18 = arith.constant 0 : index
    %33 = vector.load %arg1[%c4, %c0_17, %c0_18] : memref<6x2x16xf32, #tpu.memory_space<vmem>>, vector<1x2x16xf32>
    %34 = vector.shape_cast %33 : vector<1x2x16xf32> to vector<2x16xf32>
    %35 = vector.broadcast %0 : vector<1x16xf32> to vector<2x16xf32>
    %36 = arith.mulf %34, %35 : vector<2x16xf32>
    %cst_19 = arith.constant dense<0.000000e+00> : vector<2xf32>
    %37 = vector.multi_reduction <add>, %36, %cst_19 [1] : vector<2x16xf32> to vector<2xf32>
    %38 = vector.shape_cast %37 : vector<2xf32> to vector<2x1xf32>
    %cst_20 = arith.constant 2.500000e-01 : f32
    %39 = vector.broadcast %cst_20 : f32 to vector<2x1xf32>
    %40 = arith.mulf %38, %39 : vector<2x1xf32>
    %c5 = arith.constant 5 : index
    %c0_21 = arith.constant 0 : index
    %c0_22 = arith.constant 0 : index
    %41 = vector.load %arg1[%c5, %c0_21, %c0_22] : memref<6x2x16xf32, #tpu.memory_space<vmem>>, vector<1x2x16xf32>
    %42 = vector.shape_cast %41 : vector<1x2x16xf32> to vector<2x16xf32>
    %43 = vector.broadcast %0 : vector<1x16xf32> to vector<2x16xf32>
    %44 = arith.mulf %42, %43 : vector<2x16xf32>
    %cst_23 = arith.constant dense<0.000000e+00> : vector<2xf32>
    %45 = vector.multi_reduction <add>, %44, %cst_23 [1] : vector<2x16xf32> to vector<2xf32>
    %46 = vector.shape_cast %45 : vector<2xf32> to vector<2x1xf32>
    %cst_24 = arith.constant 2.500000e-01 : f32
    %47 = vector.broadcast %cst_24 : f32 to vector<2x1xf32>
    %48 = arith.mulf %46, %47 : vector<2x1xf32>
    %49 = arith.maximumf %8, %16 : vector<2x1xf32>
    %50 = arith.maximumf %49, %24 : vector<2x1xf32>
    %51 = arith.maximumf %50, %32 : vector<2x1xf32>
    %52 = arith.maximumf %51, %40 : vector<2x1xf32>
    %53 = arith.maximumf %52, %48 : vector<2x1xf32>
    %54 = arith.subf %8, %53 : vector<2x1xf32>
    %55 = math.exp %54 : vector<2x1xf32>
    %56 = arith.subf %16, %53 : vector<2x1xf32>
    %57 = math.exp %56 : vector<2x1xf32>
    %58 = arith.subf %24, %53 : vector<2x1xf32>
    %59 = math.exp %58 : vector<2x1xf32>
    %60 = arith.subf %32, %53 : vector<2x1xf32>
    %61 = math.exp %60 : vector<2x1xf32>
    %62 = arith.subf %40, %53 : vector<2x1xf32>
    %63 = math.exp %62 : vector<2x1xf32>
    %64 = arith.subf %48, %53 : vector<2x1xf32>
    %65 = math.exp %64 : vector<2x1xf32>
    %66 = arith.addf %55, %57 : vector<2x1xf32>
    %67 = arith.addf %66, %59 : vector<2x1xf32>
    %68 = arith.addf %67, %61 : vector<2x1xf32>
    %69 = arith.addf %68, %63 : vector<2x1xf32>
    %70 = arith.addf %69, %65 : vector<2x1xf32>
    %71 = tpu.reciprocal %70 {approx = true} : vector<2x1xf32> -> vector<2x1xf32>
    %72 = arith.mulf %55, %71 : vector<2x1xf32>
    %c0_25 = arith.constant 0 : index
    %c0_26 = arith.constant 0 : index
    %c0_27 = arith.constant 0 : index
    %73 = vector.load %arg2[%c0_25, %c0_26, %c0_27] : memref<6x2x32xf32, #tpu.memory_space<vmem>>, vector<1x2x32xf32>
    %74 = vector.shape_cast %73 : vector<1x2x32xf32> to vector<2x32xf32>
    %75 = vector.broadcast %72 : vector<2x1xf32> to vector<2x32xf32>
    %76 = arith.mulf %75, %74 : vector<2x32xf32>
    %77 = arith.mulf %57, %71 : vector<2x1xf32>
    %c1_28 = arith.constant 1 : index
    %c0_29 = arith.constant 0 : index
    %c0_30 = arith.constant 0 : index
    %78 = vector.load %arg2[%c1_28, %c0_29, %c0_30] : memref<6x2x32xf32, #tpu.memory_space<vmem>>, vector<1x2x32xf32>
    %79 = vector.shape_cast %78 : vector<1x2x32xf32> to vector<2x32xf32>
    %80 = vector.broadcast %77 : vector<2x1xf32> to vector<2x32xf32>
    %81 = arith.mulf %80, %79 : vector<2x32xf32>
    %82 = arith.addf %76, %81 : vector<2x32xf32>
    %83 = arith.mulf %59, %71 : vector<2x1xf32>
    %c2_31 = arith.constant 2 : index
    %c0_32 = arith.constant 0 : index
    %c0_33 = arith.constant 0 : index
    %84 = vector.load %arg2[%c2_31, %c0_32, %c0_33] : memref<6x2x32xf32, #tpu.memory_space<vmem>>, vector<1x2x32xf32>
    %85 = vector.shape_cast %84 : vector<1x2x32xf32> to vector<2x32xf32>
    %86 = vector.broadcast %83 : vector<2x1xf32> to vector<2x32xf32>
    %87 = arith.mulf %86, %85 : vector<2x32xf32>
    %88 = arith.addf %82, %87 : vector<2x32xf32>
    %89 = arith.mulf %61, %71 : vector<2x1xf32>
    %c3_34 = arith.constant 3 : index
    %c0_35 = arith.constant 0 : index
    %c0_36 = arith.constant 0 : index
    %90 = vector.load %arg2[%c3_34, %c0_35, %c0_36] : memref<6x2x32xf32, #tpu.memory_space<vmem>>, vector<1x2x32xf32>
    %91 = vector.shape_cast %90 : vector<1x2x32xf32> to vector<2x32xf32>
    %92 = vector.broadcast %89 : vector<2x1xf32> to vector<2x32xf32>
    %93 = arith.mulf %92, %91 : vector<2x32xf32>
    %94 = arith.addf %88, %93 : vector<2x32xf32>
    %95 = arith.mulf %63, %71 : vector<2x1xf32>
    %c4_37 = arith.constant 4 : index
    %c0_38 = arith.constant 0 : index
    %c0_39 = arith.constant 0 : index
    %96 = vector.load %arg2[%c4_37, %c0_38, %c0_39] : memref<6x2x32xf32, #tpu.memory_space<vmem>>, vector<1x2x32xf32>
    %97 = vector.shape_cast %96 : vector<1x2x32xf32> to vector<2x32xf32>
    %98 = vector.broadcast %95 : vector<2x1xf32> to vector<2x32xf32>
    %99 = arith.mulf %98, %97 : vector<2x32xf32>
    %100 = arith.addf %94, %99 : vector<2x32xf32>
    %101 = arith.mulf %65, %71 : vector<2x1xf32>
    %c5_40 = arith.constant 5 : index
    %c0_41 = arith.constant 0 : index
    %c0_42 = arith.constant 0 : index
    %102 = vector.load %arg2[%c5_40, %c0_41, %c0_42] : memref<6x2x32xf32, #tpu.memory_space<vmem>>, vector<1x2x32xf32>
    %103 = vector.shape_cast %102 : vector<1x2x32xf32> to vector<2x32xf32>
    %104 = vector.broadcast %101 : vector<2x1xf32> to vector<2x32xf32>
    %105 = arith.mulf %104, %103 : vector<2x32xf32>
    %106 = arith.addf %100, %105 : vector<2x32xf32>
    %107 = arith.truncf %106 : vector<2x32xf32> to vector<2x32xbf16>
    %c0_43 = arith.constant 0 : index
    %c0_44 = arith.constant 0 : index
    %108 = vector.load %arg4[%c0_43, %c0_44] : memref<32x64xbf16, #tpu.memory_space<vmem>>, vector<32x64xbf16>
    %cst_45 = arith.constant dense<0.000000e+00> : vector<2x64xf32>
    %109 = tpu.matmul %107, %108, %cst_45 {dimension_numbers = #tpu.dot_dimension_numbers<[1], [0], [0], [1], [0, 0, 1, 1], [], []>} : vector<2x32xbf16>, vector<32x64xbf16>, vector<2x64xf32> -> vector<2x64xf32>
    %c0_46 = arith.constant 0 : index
    %c0_47 = arith.constant 0 : index
    %110 = vector.load %arg5[%c0_46, %c0_47] : memref<1x64xf32, #tpu.memory_space<vmem>>, vector<1x64xf32>
    %111 = vector.broadcast %110 : vector<1x64xf32> to vector<2x64xf32>
    %112 = arith.addf %109, %111 : vector<2x64xf32>
    %c0_48 = arith.constant 0 : index
    %c0_49 = arith.constant 0 : index
    %113 = vector.load %arg6[%c0_48, %c0_49] : memref<2x64xf32, #tpu.memory_space<vmem>>, vector<2x64xf32>
    tpu.vector_store %arg6[%c0_48, %c0_49], %112 {strides = array<i32>} : memref<2x64xf32, #tpu.memory_space<vmem>>, vector<2x64xf32>,
    return
  }
  func.func @transform_0(%arg0: i32) -> (i32, i32, i32) {
    %c0_i32 = arith.constant 0 : i32
    %c0_i32_0 = arith.constant 0 : i32
    %c0_i32_1 = arith.constant 0 : i32
    return %c0_i32, %arg0, %c0_i32_0 : i32, i32, i32
  }
  func.func @transform_1(%arg0: i32) -> (i32, i32, i32) {
    %c0_i32 = arith.constant 0 : i32
    %c0_i32_0 = arith.constant 0 : i32
    %c0_i32_1 = arith.constant 0 : i32
    return %c0_i32, %arg0, %c0_i32_0 : i32, i32, i32
  }
  func.func @transform_2(%arg0: i32) -> (i32, i32) {
    %c0_i32 = arith.constant 0 : i32
    %c0_i32_0 = arith.constant 0 : i32
    %c0_i32_1 = arith.constant 0 : i32
    return %c0_i32, %c0_i32_0 : i32, i32
  }
  func.func @transform_3(%arg0: i32) -> (i32, i32) {
    %c0_i32 = arith.constant 0 : i32
    %c0_i32_0 = arith.constant 0 : i32
    %c0_i32_1 = arith.constant 0 : i32
    return %c0_i32, %c0_i32_0 : i32, i32
  }
  func.func @transform_4(%arg0: i32) -> (i32, i32) {
    %c0_i32 = arith.constant 0 : i32
    %c0_i32_0 = arith.constant 0 : i32
    %c0_i32_1 = arith.constant 0 : i32
    return %c0_i32, %c0_i32_0 : i32, i32
  }
  func.func @transform_5(%arg0: i32) -> (i32, i32) {
    %c0_i32 = arith.constant 0 : i32
    %c0_i32_0 = arith.constant 0 : i32
    return %arg0, %c0_i32 : i32, i32
  }
}

</mosaic_0001>

<llo_original>
// kernel: _lambda_.11
$region0: #{_lambda_.11}
  #allocation0 [shape = 'u32[]', space=smem, size = 0x4, offset = 0x4, fixed_abs, tag = 'smem constant byte address 0x4 - core index']
  #allocation1 [shape = 'u32[72,128]{1,0:T(1,128)}', space=vmem, size = 0x9000, scoped, tag = 'internal scratch']
  %s0 = inlined_call_operand.vmem [shape: f32[8,192], index: 0, kind: input, shape index: {}]
  %s1 = inlined_call_operand.vmem [shape: bf16[192,32], index: 1, kind: input, shape index: {}]
  %s2 = inlined_call_operand.vmem [shape: f32[1,32], index: 2, kind: input, shape index: {}]
  %s3 = inlined_call_operand.vmem [shape: bf16[192,16], index: 3, kind: input, shape index: {}]
  %s4 = inlined_call_operand.vmem [shape: f32[1,16], index: 4, kind: input, shape index: {}]
  %s5 = inlined_call_operand.vmem [shape: f32[8,32], index: 5, kind: output, shape index: {0}]
  %s6 = inlined_call_operand.vmem [shape: f32[8,16], index: 6, kind: output, shape index: {1}]
  %7 = xla_tuple %s5, %s6
  %s8 = sld [smem:[#allocation0]]
  $region38: #{_lambda_.11} parent=0
    _
  %s10 = ssub.s32 1, %s8
  %s11 = scalar_select 0, %s10, %s8
  // Predicated region
  $region2: #{_lambda_.11} parent=0 // pred_check
    _
  $region3: #{_lambda_.11} parent=0 // pred_check_branch
    %13 = sbr.rel (0) target = $region5
  $region4: #{_lambda_.11} parent=0 // pred_region
    _
  $region5: #{_lambda_.11} parent=0 // pred_fallthru
    _
  // Predicated region
  $region6: #{_lambda_.11} parent=0 // pred_check
    _
  $region7: #{_lambda_.11} parent=0 // pred_check_branch
    %15 = sbr.rel (0) target = $region9
  $region8: #{_lambda_.11} parent=0 // pred_region
    _
  $region9: #{_lambda_.11} parent=0 // pred_fallthru
    _
  // Predicated region
  $region10: #{_lambda_.11} parent=0 // pred_check
    _
  $region11: #{_lambda_.11} parent=0 // pred_check_branch
    %17 = sbr.rel (0) target = $region13
  $region12: #{_lambda_.11} parent=0 // pred_region
    _
  $region13: #{_lambda_.11} parent=0 // pred_fallthru
    _
  // Predicated region
  $region14: #{_lambda_.11} parent=0 // pred_check
    _
  $region15: #{_lambda_.11} parent=0 // pred_check_branch
    %19 = sbr.rel (0) target = $region17
  $region16: #{_lambda_.11} parent=0 // pred_region
    _
  $region17: #{_lambda_.11} parent=0 // pred_fallthru
    _
  // Predicated region
  $region18: #{_lambda_.11} parent=0 // pred_check
    _
  $region19: #{_lambda_.11} parent=0 // pred_check_branch
    %21 = sbr.rel (0) target = $region21
  $region20: #{_lambda_.11} parent=0 // pred_region
    _
  $region21: #{_lambda_.11} parent=0 // pred_fallthru
    _
  %v23 = vld [vmem:[%s0] sm:$0xff]
  %v24 = vld [vmem:[%s0 + $0x8] sm:$0xff]
  %v25 = vpack.c.bf16 %v23, %v23
  %v26 = vpack.c.bf16 %v24, %v24
  %v27 = vld [vmem:[%s1] sm:$0xf]
  %v28 = vld [vmem:[%s1 + $0x4] sm:$0xf]
  %v29 = vld [vmem:[%s1 + $0x8] sm:$0xf]
  %v30 = vld [vmem:[%s1 + $0xc] sm:$0xf]
  %v31 = vld [vmem:[%s1 + $0x10] sm:$0xf]
  %v32 = vld [vmem:[%s1 + $0x14] sm:$0xf]
  %v33 = vld [vmem:[%s1 + $0x18] sm:$0xf]
  %v34 = vld [vmem:[%s1 + $0x1c] sm:$0xf]
  %v35 = vld [vmem:[%s1 + $0x20] sm:$0xf]
  %v36 = vld [vmem:[%s1 + $0x24] sm:$0xf]
  %v37 = vld [vmem:[%s1 + $0x28] sm:$0xf]
  %v38 = vld [vmem:[%s1 + $0x2c] sm:$0xf]
  %v39 = vld [vmem:[%s1 + $0x30] sm:$0xf]
  %v40 = vld [vmem:[%s1 + $0x34] sm:$0xf]
  %v41 = vld [vmem:[%s1 + $0x38] sm:$0xf]
  %v42 = vld [vmem:[%s1 + $0x3c] sm:$0xf]
  %v43 = vld [vmem:[%s1 + $0x40] sm:$0xf]
  %v44 = vld [vmem:[%s1 + $0x44] sm:$0xf]
  %v45 = vld [vmem:[%s1 + $0x48] sm:$0xf]
  %v46 = vld [vmem:[%s1 + $0x4c] sm:$0xf]
  %v47 = vld [vmem:[%s1 + $0x50] sm:$0xf]
  %v48 = vld [vmem:[%s1 + $0x54] sm:$0xf]
  %v49 = vld [vmem:[%s1 + $0x58] sm:$0xf]
  %v50 = vld [vmem:[%s1 + $0x5c] sm:$0xf]
  %v51 = vld [vmem:[%s2] sm:$0x1]
  %v53 = vperm.slane %v51, 0
  %v79 = vunpack.c.l.b16 %v27
  %v80 = vunpack.c.l.b16 %v28
  %v81 = vunpack.c.l.b16 %v29
  %v82 = vunpack.c.l.b16 %v30
  %v83 = vunpack.c.l.b16 %v31
  %v84 = vunpack.c.l.b16 %v32
  %v85 = vunpack.c.l.b16 %v33
  %v86 = vunpack.c.l.b16 %v34
  %v87 = vunpack.c.l.b16 %v35
  %v88 = vunpack.c.l.b16 %v36
  %v89 = vunpack.c.l.b16 %v37
  %v90 = vunpack.c.l.b16 %v38
  %v91 = vunpack.c.l.b16 %v39
  %v92 = vunpack.c.l.b16 %v40
  %v93 = vunpack.c.l.b16 %v41
  %v94 = vunpack.c.l.b16 %v42
  %v95 = vunpack.c.l.b16 %v43
  %v96 = vunpack.c.l.b16 %v44
  %v97 = vunpack.c.l.b16 %v45
  %v98 = vunpack.c.l.b16 %v46
  %v99 = vunpack.c.l.b16 %v47
  %v100 = vunpack.c.l.b16 %v48
  %v101 = vunpack.c.l.b16 %v49
  %v102 = vunpack.c.l.b16 %v50
  %v103 = vpack.c.b16 %v80, %v79
  %v104 = vpack.c.b16 %v82, %v81
  %v105 = vpack.c.b16 %v84, %v83
  %v106 = vpack.c.b16 %v86, %v85
  %v107 = vpack.c.b16 %v88, %v87
  %v108 = vpack.c.b16 %v90, %v89
  %v109 = vpack.c.b16 %v92, %v91
  %v110 = vpack.c.b16 %v94, %v93
  %v111 = vpack.c.b16 %v96, %v95
  %v112 = vpack.c.b16 %v98, %v97
  %v113 = vpack.c.b16 %v100, %v99
  %v114 = vpack.c.b16 %v102, %v101
  %vm127 = vcmask 523264
  %v129 = vsel %vm127, %v26, 0
  %131 = vmatpush.bf16.msra.mxu0 %v110
  %132 = vmatpush.bf16.msra.mxu0 %v109
  %133 = vmatpush.bf16.msra.mxu0 %v108
  %134 = vmatpush.bf16.msra.mxu0 %v107
  %135 = vmatpush.bf16.msra.mxu0 %v106
  %136 = vmatpush.bf16.msra.mxu0 %v105
  %137 = vmatpush.bf16.msra.mxu0 %v104
  %138 = vmatpush.bf16.msra.mxu0 %v103
  %139 = vmatmul.bf16.gmra.mxu0 %v25
  %v140 = vpop.f32.mrf.mxu0
  %v141 = vadd.f32 %v53, %v140
  %v142 = vpop.f32.mrf.mxu0
  %143 = vdwg.mxu0
  %144 = vmatpush.bf16.msra.mxu0 0
  %145 = vmatpush.bf16.msra.mxu0 0
  %146 = vmatpush.bf16.msra.mxu0 0
  %147 = vmatpush.bf16.msra.mxu0 0
  %148 = vmatpush.bf16.msra.mxu0 %v114
  %149 = vmatpush.bf16.msra.mxu0 %v113
  %150 = vmatpush.bf16.msra.mxu0 %v112
  %151 = vmatpush.bf16.msra.mxu0 %v111
  %152 = vmatmul.bf16.gmra.mxu0 %v129
  %v153 = vpop.f32.mrf.mxu0
  %v154 = vadd.f32 %v141, %v153
  %v155 = vpop.f32.mrf.mxu0
  %156 = vdwg.mxu0
  %vm157 = vcmask 261120
  %158 = vst.msk [vmem:[%s5] sm:$0xff] %vm157, %v154
  %v159 = vld [vmem:[%s3] sm:$0xf]
  %v160 = vld [vmem:[%s3 + $0x4] sm:$0xf]
  %v161 = vld [vmem:[%s3 + $0x8] sm:$0xf]
  %v162 = vld [vmem:[%s3 + $0xc] sm:$0xf]
  %v163 = vld [vmem:[%s3 + $0x10] sm:$0xf]
  %v164 = vld [vmem:[%s3 + $0x14] sm:$0xf]
  %v165 = vld [vmem:[%s3 + $0x18] sm:$0xf]
  %v166 = vld [vmem:[%s3 + $0x1c] sm:$0xf]
  %v167 = vld [vmem:[%s3 + $0x20] sm:$0xf]
  %v168 = vld [vmem:[%s3 + $0x24] sm:$0xf]
  %v169 = vld [vmem:[%s3 + $0x28] sm:$0xf]
  %v170 = vld [vmem:[%s3 + $0x2c] sm:$0xf]
  %v171 = vld [vmem:[%s3 + $0x30] sm:$0xf]
  %v172 = vld [vmem:[%s3 + $0x34] sm:$0xf]
  %v173 = vld [vmem:[%s3 + $0x38] sm:$0xf]
  %v174 = vld [vmem:[%s3 + $0x3c] sm:$0xf]
  %v175 = vld [vmem:[%s3 + $0x40] sm:$0xf]
  %v176 = vld [vmem:[%s3 + $0x44] sm:$0xf]
  %v177 = vld [vmem:[%s3 + $0x48] sm:$0xf]
  %v178 = vld [vmem:[%s3 + $0x4c] sm:$0xf]
  %v179 = vld [vmem:[%s3 + $0x50] sm:$0xf]
  %v180 = vld [vmem:[%s3 + $0x54] sm:$0xf]
  %v181 = vld [vmem:[%s3 + $0x58] sm:$0xf]
  %v182 = vld [vmem:[%s3 + $0x5c] sm:$0xf]
  %v183 = vld [vmem:[%s4] sm:$0x1]
  %v185 = vperm.slane %v183, 0
  %v211 = vunpack.c.l.b16 %v159
  %v212 = vunpack.c.l.b16 %v160
  %v213 = vunpack.c.l.b16 %v161
  %v214 = vunpack.c.l.b16 %v162
  %v215 = vunpack.c.l.b16 %v163
  %v216 = vunpack.c.l.b16 %v164
  %v217 = vunpack.c.l.b16 %v165
  %v218 = vunpack.c.l.b16 %v166
  %v219 = vunpack.c.l.b16 %v167
  %v220 = vunpack.c.l.b16 %v168
  %v221 = vunpack.c.l.b16 %v169
  %v222 = vunpack.c.l.b16 %v170
  %v223 = vunpack.c.l.b16 %v171
  %v224 = vunpack.c.l.b16 %v172
  %v225 = vunpack.c.l.b16 %v173
  %v226 = vunpack.c.l.b16 %v174
  %v227 = vunpack.c.l.b16 %v175
  %v228 = vunpack.c.l.b16 %v176
  %v229 = vunpack.c.l.b16 %v177
  %v230 = vunpack.c.l.b16 %v178
  %v231 = vunpack.c.l.b16 %v179
  %v232 = vunpack.c.l.b16 %v180
  %v233 = vunpack.c.l.b16 %v181
  %v234 = vunpack.c.l.b16 %v182
  %v235 = vpack.c.b16 %v212, %v211
  %v236 = vpack.c.b16 %v214, %v213
  %v237 = vpack.c.b16 %v216, %v215
  %v238 = vpack.c.b16 %v218, %v217
  %v239 = vpack.c.b16 %v220, %v219
  %v240 = vpack.c.b16 %v222, %v221
  %v241 = vpack.c.b16 %v224, %v223
  %v242 = vpack.c.b16 %v226, %v225
  %v243 = vpack.c.b16 %v228, %v227
  %v244 = vpack.c.b16 %v230, %v229
  %v245 = vpack.c.b16 %v232, %v231
  %v246 = vpack.c.b16 %v234, %v233
  %259 = vmatpush.bf16.msra.mxu0 %v242
  %260 = vmatpush.bf16.msra.mxu0 %v241
  %261 = vmatpush.bf16.msra.mxu0 %v240
  %262 = vmatpush.bf16.msra.mxu0 %v239
  %263 = vmatpush.bf16.msra.mxu0 %v238
  %264 = vmatpush.bf16.msra.mxu0 %v237
  %265 = vmatpush.bf16.msra.mxu0 %v236
  %266 = vmatpush.bf16.msra.mxu0 %v235
  %267 = vmatmul.bf16.gmra.mxu0 %v25
  %v268 = vpop.f32.mrf.mxu0
  %v269 = vadd.f32 %v185, %v268
  %v270 = vpop.f32.mrf.mxu0
  %271 = vdwg.mxu0
  %272 = vmatpush.bf16.msra.mxu0 0
  %273 = vmatpush.bf16.msra.mxu0 0
  %274 = vmatpush.bf16.msra.mxu0 0
  %275 = vmatpush.bf16.msra.mxu0 0
  %276 = vmatpush.bf16.msra.mxu0 %v246
  %277 = vmatpush.bf16.msra.mxu0 %v245
  %278 = vmatpush.bf16.msra.mxu0 %v244
  %279 = vmatpush.bf16.msra.mxu0 %v243
  %280 = vmatmul.bf16.gmra.mxu0 %v129
  %v281 = vpop.f32.mrf.mxu0
  %v282 = vadd.f32 %v269, %v281
  %v283 = vpop.f32.mrf.mxu0
  %284 = vdwg.mxu0
  %vm285 = vcmask 130048
  %286 = vst.msk [vmem:[%s6] sm:$0xff] %vm285, %v282
  // Predicated region
  $region22: #{_lambda_.11} parent=0 // pred_check
    _
  $region23: #{_lambda_.11} parent=0 // pred_check_branch
    %288 = sbr.rel (0) target = $region25
  $region24: #{_lambda_.11} parent=0 // pred_region
    _
  $region25: #{_lambda_.11} parent=0 // pred_fallthru
    _
  // Predicated region
  $region26: #{_lambda_.11} parent=0 // pred_check
    _
  $region27: #{_lambda_.11} parent=0 // pred_check_branch
    %290 = sbr.rel (0) target = $region29
  $region28: #{_lambda_.11} parent=0 // pred_region
    _
  $region29: #{_lambda_.11} parent=0 // pred_fallthru
    _
  // Predicated region
  $region30: #{_lambda_.11} parent=0 // pred_check
    _
  $region31: #{_lambda_.11} parent=0 // pred_check_branch
    %292 = sbr.rel (0) target = $region33
  $region32: #{_lambda_.11} parent=0 // pred_region
    _
  $region33: #{_lambda_.11} parent=0 // pred_fallthru
    _
  // Predicated region
  $region34: #{_lambda_.11} parent=0 // pred_check
    _
  $region35: #{_lambda_.11} parent=0 // pred_check_branch
    %294 = sbr.rel (0) target = $region37
  $region36: #{_lambda_.11} parent=0 // pred_region
    _
  $region37: #{_lambda_.11} parent=0 // pred_fallthru
    _

// kernel: _lambda_.16
$region0: #{_lambda_.16}
  #allocation0 [shape = 'u32[]', space=smem, size = 0x4, offset = 0x4, fixed_abs, tag = 'smem constant byte address 0x4 - core index']
  #allocation1 [shape = 'u32[72,128]{1,0:T(1,128)}', space=vmem, size = 0x9000, scoped, tag = 'internal scratch']
  %s0 = inlined_call_operand.vmem [shape: f32[6,16,16], index: 0, kind: input, shape index: {}, may-alias: {0,13}]
  %s1 = inlined_call_operand.vmem [shape: f32[6,16,32], index: 1, kind: input, shape index: {}]
  %s2 = inlined_call_operand.vmem [shape: f32[1,16], index: 2, kind: input, shape index: {}]
  %s3 = inlined_call_operand.vmem [shape: bf16[32,64], index: 3, kind: input, shape index: {}]
  %s4 = inlined_call_operand.vmem [shape: f32[1,64], index: 4, kind: input, shape index: {}]
  %s5 = inlined_call_operand.vmem [shape: f32[1,64], index: 5, kind: input, shape index: {}]
  %s6 = inlined_call_operand.vmem [shape: f32[1,64], index: 6, kind: input, shape index: {}]
  %s7 = inlined_call_operand.vmem [shape: f32[1,64], index: 7, kind: input, shape index: {}]
  %s8 = inlined_call_operand.vmem [shape: f32[1,64], index: 8, kind: input, shape index: {}]
  %s9 = inlined_call_operand.vmem [shape: bf16[64,32], index: 9, kind: input, shape index: {}]
  %s10 = inlined_call_operand.vmem [shape: f32[1,32], index: 10, kind: input, shape index: {}]
  %s11 = inlined_call_operand.vmem [shape: bf16[64,16], index: 11, kind: input, shape index: {}]
  %s12 = inlined_call_operand.vmem [shape: f32[1,16], index: 12, kind: input, shape index: {}]
  %s13 = inlined_call_operand.vmem [shape: f32[6,16,16], index: 13, kind: output, shape index: {0}, may-alias: {0,13}]
  %s14 = inlined_call_operand.vmem [shape: f32[16,32], index: 14, kind: output, shape index: {1}]
  %15 = xla_tuple %s13, %s14
  %s16 = scalar_lea.vmem %s13, 48
  %s17 = sld [smem:[#allocation0]]
  $region104: #{_lambda_.16} parent=0
    _
  %s19 = ssub.s32 1, %s17
  %s20 = scalar_select 0, %s19, %s17
  $region1: #{_lambda_.16} parent=0
    #allocation2 [shape = 'u8[8192]{0}', space=vmem, size = 0x2000, scoped, tag = 'output window, operand 0, single buffered']
    // Predicated region
    $region2: #{_lambda_.16} parent=1 // pred_check
      _
    $region3: #{_lambda_.16} parent=1 // pred_check_branch
      %22 = sbr.rel (0) target = $region5
    $region4: #{_lambda_.16} parent=1 // pred_region
      _
    $region5: #{_lambda_.16} parent=1 // pred_fallthru
      _
    // Predicated region
    $region6: #{_lambda_.16} parent=1 // pred_check
      _
    $region7: #{_lambda_.16} parent=1 // pred_check_branch
      %24 = sbr.rel (0) target = $region9
    $region8: #{_lambda_.16} parent=1 // pred_region
      _
    $region9: #{_lambda_.16} parent=1 // pred_fallthru
      _
    // Predicated region
    $region10: #{_lambda_.16} parent=1 // pred_check
      _
    $region11: #{_lambda_.16} parent=1 // pred_check_branch
      %26 = sbr.rel (0) target = $region13
    $region12: #{_lambda_.16} parent=1 // pred_region
      _
    $region13: #{_lambda_.16} parent=1 // pred_fallthru
      _
    // Predicated region
    $region14: #{_lambda_.16} parent=1 // pred_check
      _
    $region15: #{_lambda_.16} parent=1 // pred_check_branch
      %28 = sbr.rel (0) target = $region17
    $region16: #{_lambda_.16} parent=1 // pred_region
      _
    $region17: #{_lambda_.16} parent=1 // pred_fallthru
      _
    // Predicated region
    $region18: #{_lambda_.16} parent=1 // pred_check
      _
    $region19: #{_lambda_.16} parent=1 // pred_check_branch
      %30 = sbr.rel (0) target = $region21
    $region20: #{_lambda_.16} parent=1 // pred_region
      _
    $region21: #{_lambda_.16} parent=1 // pred_fallthru
      _
    // Predicated region
    $region22: #{_lambda_.16} parent=1 // pred_check
      _
    $region23: #{_lambda_.16} parent=1 // pred_check_branch
      %32 = sbr.rel (0) target = $region25
    $region24: #{_lambda_.16} parent=1 // pred_region
      _
    $region25: #{_lambda_.16} parent=1 // pred_fallthru
      _
    // Predicated region
    $region26: #{_lambda_.16} parent=1 // pred_check
      _
    $region27: #{_lambda_.16} parent=1 // pred_check_branch
      %34 = sbr.rel (0) target = $region29
    $region28: #{_lambda_.16} parent=1 // pred_region
      _
    $region29: #{_lambda_.16} parent=1 // pred_fallthru
      _
    // Predicated region
    $region30: #{_lambda_.16} parent=1 // pred_check
      _
    $region31: #{_lambda_.16} parent=1 // pred_check_branch
      %36 = sbr.rel (0) target = $region33
    $region32: #{_lambda_.16} parent=1 // pred_region
      _
    $region33: #{_lambda_.16} parent=1 // pred_fallthru
      _
    // Predicated region
    $region34: #{_lambda_.16} parent=1 // pred_check
      _
    $region35: #{_lambda_.16} parent=1 // pred_check_branch
      %38 = sbr.rel (0) target = $region37
    $region36: #{_lambda_.16} parent=1 // pred_region
      _
    $region37: #{_lambda_.16} parent=1 // pred_fallthru
      _
    // Predicated region
    $region38: #{_lambda_.16} parent=1 // pred_check
      _
    $region39: #{_lambda_.16} parent=1 // pred_check_branch
      %40 = sbr.rel (0) target = $region41
    $region40: #{_lambda_.16} parent=1 // pred_region
      _
    $region41: #{_lambda_.16} parent=1 // pred_fallthru
      _
    // Predicated region
    $region42: #{_lambda_.16} parent=1 // pred_check
      _
    $region43: #{_lambda_.16} parent=1 // pred_check_branch
      %42 = sbr.rel (0) target = $region45
    $region44: #{_lambda_.16} parent=1 // pred_region
      _
    $region45: #{_lambda_.16} parent=1 // pred_fallthru
      _
    // Predicated region
    $region46: #{_lambda_.16} parent=1 // pred_check
      _
    $region47: #{_lambda_.16} parent=1 // pred_check_branch
      %44 = sbr.rel (0) target = $region49
    $region48: #{_lambda_.16} parent=1 // pred_region
      _
    $region49: #{_lambda_.16} parent=1 // pred_fallthru
      _
    // Predicated region
    $region50: #{_lambda_.16} parent=1 // pred_check
      _
    $region51: #{_lambda_.16} parent=1 // pred_check_branch
      %46 = sbr.rel (0) target = $region53
    $region52: #{_lambda_.16} parent=1 // pred_region
      _
    $region53: #{_lambda_.16} parent=1 // pred_fallthru
      _
    %v48 = vld [vmem:[%s2] sm:$0x1]
    %v49 = vld [vmem:[%s0] sm:$0xff]
    %v50 = vld [vmem:[%s0 + $0x8] sm:$0xff]
    %v52 = vperm.slane %v48, 0
    %v54 = vmul.f32 %v49, %v52
    %v55 = vmul.f32 %v50, %v52
    %vm56 = vcmask 130048
    %v57 = vsel %vm56, %v54, 0.0
    %58 = vadd.xlane.f32.xlu0 %v57
    %v59 = vpop.xlane.xlu0 %58
    %v60 = vsel %vm56, %v55, 0.0
    %61 = vadd.xlane.f32.xlu0 %v60
    %v62 = vpop.xlane.xlu0 %61
    %v63 = vmul.f32 %v59, 0.25
    %v64 = vmul.f32 %v62, 0.25
    %s65 = scalar_lea.vmem %s0, 16
    %v66 = vld [vmem:[%s65] sm:$0xff]
    %v67 = vld [vmem:[%s65 + $0x8] sm:$0xff]
    %v68 = vmul.f32 %v66, %v52
    %v69 = vmul.f32 %v67, %v52
    %v70 = vsel %vm56, %v68, 0.0
    %71 = vadd.xlane.f32.xlu0 %v70
    %v72 = vpop.xlane.xlu0 %71
    %v73 = vsel %vm56, %v69, 0.0
    %74 = vadd.xlane.f32.xlu0 %v73
    %v75 = vpop.xlane.xlu0 %74
    %v76 = vmul.f32 %v72, 0.25
    %v77 = vmul.f32 %v75, 0.25
    %s78 = scalar_lea.vmem %s0, 32
    %v79 = vld [vmem:[%s78] sm:$0xff]
    %v80 = vld [vmem:[%s78 + $0x8] sm:$0xff]
    %v81 = vmul.f32 %v79, %v52
    %v82 = vmul.f32 %v80, %v52
    %v83 = vsel %vm56, %v81, 0.0
    %84 = vadd.xlane.f32.xlu0 %v83
    %v85 = vpop.xlane.xlu0 %84
    %v86 = vsel %vm56, %v82, 0.0
    %87 = vadd.xlane.f32.xlu0 %v86
    %v88 = vpop.xlane.xlu0 %87
    %v89 = vmul.f32 %v85, 0.25
    %v90 = vmul.f32 %v88, 0.25
    %v91 = vmax.f32 %v63, %v76
    %v92 = vmax.f32 %v64, %v77
    %v93 = vmax.f32 %v91, %v89
    %v94 = vmax.f32 %v92, %v90
    %v95 = vsub.f32 %v63, %v93
    %v96 = vsub.f32 %v64, %v94
    %v97 = vmul.f32 %v95, 1.442695
    %v98 = vpow.pop %v97
    %v99 = vmul.f32 %v96, 1.442695
    %v100 = vpow.pop %v99
    %v101 = vsub.f32 %v76, %v93
    %v102 = vsub.f32 %v77, %v94
    %v103 = vmul.f32 %v101, 1.442695
    %v104 = vpow.pop %v103
    %v105 = vmul.f32 %v102, 1.442695
    %v106 = vpow.pop %v105
    %v107 = vsub.f32 %v89, %v93
    %v108 = vsub.f32 %v90, %v94
    %v109 = vmul.f32 %v107, 1.442695
    %v110 = vpow.pop %v109
    %v111 = vmul.f32 %v108, 1.442695
    %v112 = vpow.pop %v111
    %v113 = vadd.f32 %v98, %v104
    %v114 = vadd.f32 %v100, %v106
    %v115 = vadd.f32 %v113, %v110
    %v116 = vadd.f32 %v114, %v112
    %v117 = vrcp.pop %v115
    %v118 = vrcp.pop %v116
    %v119 = vmul.f32 %v98, %v117
    %v120 = vmul.f32 %v100, %v118
    %v121 = vld [vmem:[%s1] sm:$0xff]
    %v122 = vld [vmem:[%s1 + $0x8] sm:$0xff]
    %v123 = vmul.f32 %v119, %v121
    %v124 = vmul.f32 %v120, %v122
    %v125 = vmul.f32 %v104, %v117
    %v126 = vmul.f32 %v106, %v118
    %s127 = scalar_lea.vmem %s1, 16
    %v128 = vld [vmem:[%s127] sm:$0xff]
    %v129 = vld [vmem:[%s127 + $0x8] sm:$0xff]
    %v130 = vmul.f32 %v125, %v128
    %v131 = vmul.f32 %v126, %v129
    %v132 = vadd.f32 %v123, %v130
    %v133 = vadd.f32 %v124, %v131
    %v134 = vmul.f32 %v110, %v117
    %v135 = vmul.f32 %v112, %v118
    %s136 = scalar_lea.vmem %s1, 32
    %v137 = vld [vmem:[%s136] sm:$0xff]
    %v138 = vld [vmem:[%s136 + $0x8] sm:$0xff]
    %v139 = vmul.f32 %v134, %v137
    %v140 = vmul.f32 %v135, %v138
    %v141 = vadd.f32 %v132, %v139
    %v142 = vadd.f32 %v133, %v140
    %v143 = vpack.c.bf16 %v142, %v141
    %v144 = vld [vmem:[%s3] sm:$0xf]
    %v145 = vld [vmem:[%s3 + $0x4] sm:$0xf]
    %v146 = vld [vmem:[%s3 + $0x8] sm:$0xf]
    %v147 = vld [vmem:[%s3 + $0xc] sm:$0xf]
    %v148 = vld [vmem:[%s4] sm:$0x1]
    %v150 = vperm.slane %v148, 0
    %v156 = vunpack.c.l.b16 %v144
    %v157 = vunpack.c.l.b16 %v145
    %v158 = vunpack.c.l.b16 %v146
    %v159 = vunpack.c.l.b16 %v147
    %v160 = vpack.c.b16 %v157, %v156
    %v161 = vpack.c.b16 %v159, %v158
    %vm164 = vcmask 261120
    %v166 = vsel %vm164, %v143, 0
    %168 = vmatpush.bf16.msra.mxu0 0
    %169 = vmatpush.bf16.msra.mxu0 0
    %170 = vmatpush.bf16.msra.mxu0 0
    %171 = vmatpush.bf16.msra.mxu0 0
    %172 = vmatpush.bf16.msra.mxu0 0
    %173 = vmatpush.bf16.msra.mxu0 0
    %174 = vmatpush.bf16.msra.mxu0 %v161
    %175 = vmatpush.bf16.msra.mxu0 %v160
    %176 = vmatmul.bf16.gmra.mxu0 %v166
    %v177 = vpop.f32.mrf.mxu0
    %v178 = vadd.f32 %v150, %v177
    %v179 = vpop.f32.mrf.mxu0
    %v180 = vadd.f32 %v150, %v179
    %181 = vdwg.mxu0
    %v182 = vld [vmem:[%s5] sm:$0x1]
    %v184 = vperm.slane %v182, 0
    %v186 = vmul.f32 %v178, %v184
    %v187 = vmul.f32 %v180, %v184
    %v188 = vld [vmem:[%s6] sm:$0x1]
    %v190 = vperm.slane %v188, 0
    %v192 = vadd.f32 %v186, %v190
    %v193 = vadd.f32 %v187, %v190
    %v194 = vxor.u32 %v192, 2147483648
    %v195 = vxor.u32 %v193, 2147483648
    %v196 = vmul.f32 %v194, 1.442695
    %v197 = vpow.pop %v196
    %v198 = vmul.f32 %v195, 1.442695
    %v199 = vpow.pop %v198
    %v200 = vadd.f32 %v197, 1.0
    %v201 = vadd.f32 %v199, 1.0
    %v202 = vrcp.pop %v200
    %v203 = vmul.f32 %v200, %v202
    %v204 = vsub.f32 1.0, %v203
    %v205 = vmul.f32 %v202, %v204
    %v206 = vadd.f32 %v202, %v205
    %vm207 = vweird.f32 %v200
    %vm208 = vweird.f32 %v202
    %vm209 = vmor %vm207, %vm208
    %v210 = vsel %vm209, %v202, %v206
    %v211 = vand.u32 2147483647, %v200
    %vm212 = vcmp.eq.f32.partialorder %v211, 8.507059e+37
    %v213 = vand.u32 %v200, 2147483648
    %v214 = vor.u32 1.1754944e-38, %v213
    %v215 = vsel %vm212, %v214, %v210
    %v216 = vmul.f32 1.0, %v215
    %v217 = vrcp.pop %v201
    %v218 = vmul.f32 %v201, %v217
    %v219 = vsub.f32 1.0, %v218
    %v220 = vmul.f32 %v217, %v219
    %v221 = vadd.f32 %v217, %v220
    %vm222 = vweird.f32 %v201
    %vm223 = vweird.f32 %v217
    %vm224 = vmor %vm222, %vm223
    %v225 = vsel %vm224, %v217, %v221
    %v226 = vand.u32 2147483647, %v201
    %vm227 = vcmp.eq.f32.partialorder %v226, 8.507059e+37
    %v228 = vand.u32 %v201, 2147483648
    %v229 = vor.u32 1.1754944e-38, %v228
    %v230 = vsel %vm227, %v229, %v225
    %v231 = vmul.f32 1.0, %v230
    %v232 = vmul.f32 %v216, %v178
    %v233 = vmul.f32 %v231, %v180
    %v234 = vld [vmem:[%s7] sm:$0x1]
    %v236 = vperm.slane %v234, 0
    %v238 = vmul.f32 %v178, %v236
    %v239 = vmul.f32 %v180, %v236
    %v240 = vld [vmem:[%s8] sm:$0x1]
    %v242 = vperm.slane %v240, 0
    %v244 = vadd.f32 %v238, %v242
    %v245 = vadd.f32 %v239, %v242
    %v246 = vxor.u32 %v244, 2147483648
    %v247 = vxor.u32 %v245, 2147483648
    %v248 = vmul.f32 %v246, 1.442695
    %v249 = vpow.pop %v248
    %v250 = vmul.f32 %v247, 1.442695
    %v251 = vpow.pop %v250
    %v252 = vadd.f32 %v249, 1.0
    %v253 = vadd.f32 %v251, 1.0
    %v254 = vrcp.pop %v252
    %v255 = vmul.f32 %v252, %v254
    %v256 = vsub.f32 1.0, %v255
    %v257 = vmul.f32 %v254, %v256
    %v258 = vadd.f32 %v254, %v257
    %vm259 = vweird.f32 %v252
    %vm260 = vweird.f32 %v254
    %vm261 = vmor %vm259, %vm260
    %v262 = vsel %vm261, %v254, %v258
    %v263 = vand.u32 2147483647, %v252
    %vm264 = vcmp.eq.f32.partialorder %v263, 8.507059e+37
    %v265 = vand.u32 %v252, 2147483648
    %v266 = vor.u32 1.1754944e-38, %v265
    %v267 = vsel %vm264, %v266, %v262
    %v268 = vmul.f32 1.0, %v267
    %v269 = vrcp.pop %v253
    %v270 = vmul.f32 %v253, %v269
    %v271 = vsub.f32 1.0, %v270
    %v272 = vmul.f32 %v269, %v271
    %v273 = vadd.f32 %v269, %v272
    %vm274 = vweird.f32 %v253
    %vm275 = vweird.f32 %v269
    %vm276 = vmor %vm274, %vm275
    %v277 = vsel %vm276, %v269, %v273
    %v278 = vand.u32 2147483647, %v253
    %vm279 = vcmp.eq.f32.partialorder %v278, 8.507059e+37
    %v280 = vand.u32 %v253, 2147483648
    %v281 = vor.u32 1.1754944e-38, %v280
    %v282 = vsel %vm279, %v281, %v277
    %v283 = vmul.f32 1.0, %v282
    %v284 = vmul.f32 %v268, %v178
    %v285 = vmul.f32 %v283, %v180
    %v286 = vpack.c.bf16 %v233, %v232
    %v287 = vld [vmem:[%s9] sm:$0xf]
    %v288 = vld [vmem:[%s9 + $0x4] sm:$0xf]
    %v289 = vld [vmem:[%s9 + $0x8] sm:$0xf]
    %v290 = vld [vmem:[%s9 + $0xc] sm:$0xf]
    %v291 = vld [vmem:[%s9 + $0x10] sm:$0xf]
    %v292 = vld [vmem:[%s9 + $0x14] sm:$0xf]
    %v293 = vld [vmem:[%s9 + $0x18] sm:$0xf]
    %v294 = vld [vmem:[%s9 + $0x1c] sm:$0xf]
    %v295 = vld [vmem:[%s10] sm:$0x1]
    %v297 = vperm.slane %v295, 0
    %v307 = vunpack.c.l.b16 %v287
    %v308 = vunpack.c.l.b16 %v288
    %v309 = vunpack.c.l.b16 %v289
    %v310 = vunpack.c.l.b16 %v290
    %v311 = vunpack.c.l.b16 %v291
    %v312 = vunpack.c.l.b16 %v292
    %v313 = vunpack.c.l.b16 %v293
    %v314 = vunpack.c.l.b16 %v294
    %v315 = vpack.c.b16 %v308, %v307
    %v316 = vpack.c.b16 %v310, %v309
    %v317 = vpack.c.b16 %v312, %v311
    %v318 = vpack.c.b16 %v314, %v313
    %vm323 = vcmask 523264
    %v325 = vsel %vm323, %v286, 0
    %327 = vmatpush.bf16.msra.mxu0 0
    %328 = vmatpush.bf16.msra.mxu0 0
    %329 = vmatpush.bf16.msra.mxu0 0
    %330 = vmatpush.bf16.msra.mxu0 0
    %331 = vmatpush.bf16.msra.mxu0 %v318
    %332 = vmatpush.bf16.msra.mxu0 %v317
    %333 = vmatpush.bf16.msra.mxu0 %v316
    %334 = vmatpush.bf16.msra.mxu0 %v315
    %335 = vmatmul.bf16.gmra.mxu0 %v325
    %v336 = vpop.f32.mrf.mxu0
    %v337 = vadd.f32 %v297, %v336
    %v338 = vpop.f32.mrf.mxu0
    %v339 = vadd.f32 %v297, %v338
    %340 = vdwg.mxu0
    %341 = vst.msk [vmem:[%s14] sm:$0xff] %vm164, %v337
    %342 = vst.msk [vmem:[%s14 + $0x8] sm:$0xff] %vm164, %v339
    %v343 = vpack.c.bf16 %v285, %v284
    %v344 = vld [vmem:[%s11] sm:$0xf]
    %v345 = vld [vmem:[%s11 + $0x4] sm:$0xf]
    %v346 = vld [vmem:[%s11 + $0x8] sm:$0xf]
    %v347 = vld [vmem:[%s11 + $0xc] sm:$0xf]
    %v348 = vld [vmem:[%s11 + $0x10] sm:$0xf]
    %v349 = vld [vmem:[%s11 + $0x14] sm:$0xf]
    %v350 = vld [vmem:[%s11 + $0x18] sm:$0xf]
    %v351 = vld [vmem:[%s11 + $0x1c] sm:$0xf]
    %v352 = vld [vmem:[%s12] sm:$0x1]
    %v354 = vperm.slane %v352, 0
    %v364 = vunpack.c.l.b16 %v344
    %v365 = vunpack.c.l.b16 %v345
    %v366 = vunpack.c.l.b16 %v346
    %v367 = vunpack.c.l.b16 %v347
    %v368 = vunpack.c.l.b16 %v348
    %v369 = vunpack.c.l.b16 %v349
    %v370 = vunpack.c.l.b16 %v350
    %v371 = vunpack.c.l.b16 %v351
    %v372 = vpack.c.b16 %v365, %v364
    %v373 = vpack.c.b16 %v367, %v366
    %v374 = vpack.c.b16 %v369, %v368
    %v375 = vpack.c.b16 %v371, %v370
    %v381 = vsel %vm323, %v343, 0
    %383 = vmatpush.bf16.msra.mxu0 0
    %384 = vmatpush.bf16.msra.mxu0 0
    %385 = vmatpush.bf16.msra.mxu0 0
    %386 = vmatpush.bf16.msra.mxu0 0
    %387 = vmatpush.bf16.msra.mxu0 %v375
    %388 = vmatpush.bf16.msra.mxu0 %v374
    %389 = vmatpush.bf16.msra.mxu0 %v373
    %390 = vmatpush.bf16.msra.mxu0 %v372
    %391 = vmatmul.bf16.gmra.mxu0 %v381
    %v392 = vpop.f32.mrf.mxu0
    %v393 = vadd.f32 %v354, %v392
    %v394 = vpop.f32.mrf.mxu0
    %v395 = vadd.f32 %v354, %v394
    %396 = vdwg.mxu0
    %397 = vst.msk [vmem:[#allocation2] sm:$0xff] %vm56, %v393
    %398 = vst.msk [vmem:[#allocation2 + $0x8] sm:$0xff] %vm56, %v395
    // Predicated region
    $region54: #{_lambda_.16} parent=1 // pred_check
      _
    $region55: #{_lambda_.16} parent=1 // pred_check_branch
      %400 = sbr.rel (0) target = $region57
    $region56: #{_lambda_.16} parent=1 // pred_region
      // Predicated region
      $region58: #{_lambda_.16} parent=56 // pred_check
        _
      $region59: #{_lambda_.16} parent=56 // pred_check_branch
        %402 = sbr.rel (0) target = $region61
      $region60: #{_lambda_.16} parent=56 // pred_region
        // Predicated region
        $region62: #{_lambda_.16} parent=60 // pred_check
          _
        $region63: #{_lambda_.16} parent=60 // pred_check_branch
          %404 = sbr.rel (0) target = $region65
        $region64: #{_lambda_.16} parent=60 // pred_region
          // Predicated region
          $region77: #{_lambda_.16} parent=64 // pred_check
            _
          $region78: #{_lambda_.16} parent=64 // pred_check_branch
            %422 = sbr.rel (0) target = $region80
          $region79: #{_lambda_.16} parent=64 // pred_region
            loop: start=0, step=1, limit=1
            $region81: #{_lambda_.16} parent=79 // loop_pre_header
              _
            $region82: #{_lambda_.16} parent=79 // loop_header
              %s424 = sphi 0, %s428
              %p425 = scmp.ge.s32.totalorder %s424, 1
              %s429 = sphi [#allocation2], [#allocation2]
              %s430 = sphi %s16, %s16
            $region83: #{_lambda_.16} parent=79 // loop_header_branch
              %427 = sbr.rel (%p425) target = $region87
            $region84: #{_lambda_.16} parent=79 // loop_body
              %v431 = vld [vmem:[%s429] sm:$0xff]
              %432 = vst [vmem:[%s430] sm:$0xff] %v431
              %v433 = vld [vmem:[%s429 + $0x8] sm:$0xff]
              %434 = vst [vmem:[%s430 + $0x8] sm:$0xff] %v433
            $region85: #{_lambda_.16} parent=79 // loop_footer
              %s428 = sadd.s32 1, %s424
            $region86: #{_lambda_.16} parent=79 // loop_footer_branch
              %423 = sbr.rel target = $region82
            $region87: #{_lambda_.16} parent=79 // loop_exit
              _
          $region80: #{_lambda_.16} parent=64 // pred_fallthru
            _
          // Predicated region
          $region88: #{_lambda_.16} parent=64 // pred_check
            _
          $region89: #{_lambda_.16} parent=64 // pred_check_branch
            %436 = sbr.rel target = $region91
          $region90: #{_lambda_.16} parent=64 // pred_region
            _
          $region91: #{_lambda_.16} parent=64 // pred_fallthru
            _
        $region65: #{_lambda_.16} parent=60 // pred_fallthru
          _
        // Predicated region
        $region66: #{_lambda_.16} parent=60 // pred_check
          _
        $region67: #{_lambda_.16} parent=60 // pred_check_branch
          %406 = sbr.rel target = $region69
        $region68: #{_lambda_.16} parent=60 // pred_region
          %s408 = ssub.s32 256, 1
          loop: start=0, step=1, limit=1
          $region70: #{_lambda_.16} parent=68 // loop_pre_header
            _
          $region71: #{_lambda_.16} parent=68 // loop_header
            %s410 = sphi 0, %s414
            %p411 = scmp.ge.s32.totalorder %s410, 1
            %s415 = sphi [#allocation2], [#allocation2]
            %s416 = sphi %s16, %s16
          $region72: #{_lambda_.16} parent=68 // loop_header_branch
            %413 = sbr.rel (%p411) target = $region76
          $region73: #{_lambda_.16} parent=68 // loop_body
            %v417 = vld [vmem:[%s415] sm:%s408]
            %418 = vst [vmem:[%s416] sm:%s408] %v417
            %v419 = vld [vmem:[%s415 + $0x8] sm:%s408]
            %420 = vst [vmem:[%s416 + $0x8] sm:%s408] %v419
          $region74: #{_lambda_.16} parent=68 // loop_footer
            %s414 = sadd.s32 1, %s410
          $region75: #{_lambda_.16} parent=68 // loop_footer_branch
            %409 = sbr.rel target = $region71
          $region76: #{_lambda_.16} parent=68 // loop_exit
            _
        $region69: #{_lambda_.16} parent=60 // pred_fallthru
          _
      $region61: #{_lambda_.16} parent=56 // pred_fallthru
        _
      %437 = vnop
    $region57: #{_lambda_.16} parent=1 // pred_fallthru
      _
    // Predicated region
    $region92: #{_lambda_.16} parent=1 // pred_check
      _
    $region93: #{_lambda_.16} parent=1 // pred_check_branch
      %439 = sbr.rel (0) target = $region95
    $region94: #{_lambda_.16} parent=1 // pred_region
      _
    $region95: #{_lambda_.16} parent=1 // pred_fallthru
      _
    // Predicated region
    $region96: #{_lambda_.16} parent=1 // pred_check
      _
    $region97: #{_lambda_.16} parent=1 // pred_check_branch
      %441 = sbr.rel (0) target = $region99
    $region98: #{_lambda_.16} parent=1 // pred_region
      _
    $region99: #{_lambda_.16} parent=1 // pred_fallthru
      _
    // Predicated region
    $region100: #{_lambda_.16} parent=1 // pred_check
      _
    $region101: #{_lambda_.16} parent=1 // pred_check_branch
      %443 = sbr.rel (0) target = $region103
    $region102: #{_lambda_.16} parent=1 // pred_region
      _
    $region103: #{_lambda_.16} parent=1 // pred_fallthru
      _

// kernel: _lambda_.17
$region0: #{_lambda_.17}
  #allocation0 [shape = 'u32[]', space=smem, size = 0x4, offset = 0x4, fixed_abs, tag = 'smem constant byte address 0x4 - core index']
  #allocation1 [shape = 'u32[72,128]{1,0:T(1,128)}', space=vmem, size = 0x9000, scoped, tag = 'internal scratch']
  %s0 = inlined_call_operand.vmem [shape: f32[6,16,16], index: 0, kind: input, shape index: {}, may-alias: {0,14}]
  %s1 = inlined_call_operand.vmem [shape: f32[6,2,8,16], index: 1, kind: input, shape index: {}]
  %s2 = inlined_call_operand.vmem [shape: f32[6,2,8,32], index: 2, kind: input, shape index: {}]
  %s3 = inlined_call_operand.vmem [shape: f32[1,16], index: 3, kind: input, shape index: {}]
  %s4 = inlined_call_operand.vmem [shape: bf16[32,96], index: 4, kind: input, shape index: {}]
  %s5 = inlined_call_operand.vmem [shape: f32[1,96], index: 5, kind: input, shape index: {}]
  %s6 = inlined_call_operand.vmem [shape: bf16[32,32], index: 6, kind: input, shape index: {}]
  %s7 = inlined_call_operand.vmem [shape: f32[1,32], index: 7, kind: input, shape index: {}]
  %s8 = inlined_call_operand.vmem [shape: f32[1,32], index: 8, kind: input, shape index: {}]
  %s9 = inlined_call_operand.vmem [shape: bf16[32,16], index: 9, kind: input, shape index: {}]
  %s10 = inlined_call_operand.vmem [shape: f32[1,16], index: 10, kind: input, shape index: {}]
  %s11 = inlined_call_operand.vmem [shape: f32[1,32], index: 11, kind: input, shape index: {}]
  %s12 = inlined_call_operand.vmem [shape: bf16[32,32], index: 12, kind: input, shape index: {}]
  %s13 = inlined_call_operand.vmem [shape: f32[1,32], index: 13, kind: input, shape index: {}]
  %s14 = inlined_call_operand.vmem [shape: f32[6,16,16], index: 14, kind: output, shape index: {0}, may-alias: {0,14}]
  %s15 = inlined_call_operand.vmem [shape: f32[2,8,32], index: 15, kind: output, shape index: {1}]
  %16 = xla_tuple %s14, %s15
  %s17 = scalar_lea.vmem %s14, 32
  %s18 = sld [smem:[#allocation0]]
  $region203: #{_lambda_.17} parent=0
    _
  %s20 = ssub.s32 1, %s18
  %s21 = scalar_select 0, %s20, %s18
  $region1: #{_lambda_.17} parent=0
    #allocation2 [shape = 'u8[16384]{0}', space=vmem, size = 0x4000, scoped, tag = 'input window, operand 0']
    #allocation3 [shape = 'u8[16384]{0}', space=vmem, size = 0x4000, scoped, tag = 'input window, operand 1']
    #allocation4 [shape = 'u8[8192]{0}', space=vmem, size = 0x2000, scoped, tag = 'output window, operand 0']
    loop: start=0, step=1, limit=4
    $region2: #{_lambda_.17} parent=1 // loop_pre_header
      _
    $region3: #{_lambda_.17} parent=1 // loop_header
      %s23 = sphi 0, %s27
      %p24 = scmp.ge.s32.totalorder %s23, 4
      %s33 = sphi 0, %s35
      %s36 = sphi 0, %s33
      %s37 = sphi 0, %s36
      %s53 = sphi 0, %s37
      %s59 = sphi 0, %s61
      %s62 = sphi 0, %s59
      %s63 = sphi 0, %s62
      %s79 = sphi 0, %s63
      %s83 = sphi 0, %s83
      %s85 = sphi 0, %s83
      %s86 = sphi 0, %s85
      %s100 = sphi 0, %s86
      %s104 = sphi 0, %s104
      %s106 = sphi 0, %s104
      %s107 = sphi 0, %s106
      %s121 = sphi 0, %s107
      %s125 = sphi 0, %s125
      %s127 = sphi 0, %s125
      %s128 = sphi 0, %s127
      %s142 = sphi 0, %s128
      %s146 = sphi 0, %s146
      %s148 = sphi 0, %s146
      %s149 = sphi 0, %s148
      %s163 = sphi 0, %s149
      %s167 = sphi 0, %s167
      %s169 = sphi 0, %s167
      %s170 = sphi 0, %s169
      %s184 = sphi 0, %s170
      %s188 = sphi 0, %s188
      %s190 = sphi 0, %s188
      %s191 = sphi 0, %s190
      %s205 = sphi 0, %s191
      %s209 = sphi 0, %s209
      %s211 = sphi 0, %s209
      %s212 = sphi 0, %s211
      %s226 = sphi 0, %s212
      %s230 = sphi 0, %s230
      %s232 = sphi 0, %s230
      %s233 = sphi 0, %s232
      %s247 = sphi 0, %s233
      %s251 = sphi 0, %s251
      %s253 = sphi 0, %s251
      %s254 = sphi 0, %s253
      %s268 = sphi 0, %s254
      %s272 = sphi 0, %s272
      %s274 = sphi 0, %s272
      %s275 = sphi 0, %s274
      %s289 = sphi 0, %s275
      %s293 = sphi 0, %s293
      %s295 = sphi 0, %s293
      %s296 = sphi 0, %s295
      %s310 = sphi 0, %s296
      %s316 = sphi 0, %s318
      %s319 = sphi 0, %s316
      %s320 = sphi 0, %s319
      %s336 = sphi 0, %s320
      %s342 = sphi 0, %s344
      %s345 = sphi 0, %s342
      %s346 = sphi 0, %s345
      %s362 = sphi 0, %s346
    $region4: #{_lambda_.17} parent=1 // loop_header_branch
      %26 = sbr.rel (%p24) target = $region8
    $region5: #{_lambda_.17} parent=1 // loop_body
      %s28 = ssub.s32 %s23, 1
      %s29 = ssub.s32 %s23, 2
      %s30 = sadd.s32 %s23, 1
      %s31 = ssub.s32 %s23, %s30
      %p32 = scmp.eq.s32.totalorder %s31, 0
      %s34 = sadd.s32 %s33, 1
      %s35 = scalar_select %p32, %s33, %s34
      %p38 = pneg %p32
      %p39 = scmp.eq.s32.totalorder %s23, 1
      %p40 = por %p38, %p39
      %p41 = scmp.ne.s32.totalorder %s33, %s36
      %p42 = scmp.eq.s32.totalorder %s23, 0
      %p43 = por %p41, %p42
      %p44 = scmp.ne.s32.totalorder %s33, %s36
      %p45 = scmp.eq.s32.totalorder %s28, 1
      %p46 = por %p44, %p45
      %p47 = scmp.ne.s32.totalorder %s36, %s37
      %p48 = scmp.eq.s32.totalorder %s28, 0
      %p49 = por %p47, %p48
      %p50 = scmp.ne.s32.totalorder %s36, %s37
      %p51 = scmp.eq.s32.totalorder %s29, 1
      %p52 = por %p50, %p51
      %p54 = scmp.ne.s32.totalorder %s37, %s53
      %p55 = scmp.eq.s32.totalorder %s29, 0
      %p56 = por %p54, %p55
      %s57 = ssub.s32 %s23, %s30
      %p58 = scmp.eq.s32.totalorder %s57, 0
      %s60 = sadd.s32 %s59, 1
      %s61 = scalar_select %p58, %s59, %s60
      %p64 = pneg %p58
      %p65 = scmp.eq.s32.totalorder %s23, 1
      %p66 = por %p64, %p65
      %p67 = scmp.ne.s32.totalorder %s59, %s62
      %p68 = scmp.eq.s32.totalorder %s23, 0
      %p69 = por %p67, %p68
      %p70 = scmp.ne.s32.totalorder %s59, %s62
      %p71 = scmp.eq.s32.totalorder %s28, 1
      %p72 = por %p70, %p71
      %p73 = scmp.ne.s32.totalorder %s62, %s63
      %p74 = scmp.eq.s32.totalorder %s28, 0
      %p75 = por %p73, %p74
      %p76 = scmp.ne.s32.totalorder %s62, %s63
      %p77 = scmp.eq.s32.totalorder %s29, 1
      %p78 = por %p76, %p77
      %p80 = scmp.ne.s32.totalorder %s63, %s79
      %p81 = scmp.eq.s32.totalorder %s29, 0
      %p82 = por %p80, %p81
      %s84 = sadd.s32 %s83, 1
      %p87 = scmp.eq.s32.totalorder %s23, 1
      %p88 = scmp.ne.s32.totalorder %s83, %s85
      %p89 = scmp.eq.s32.totalorder %s23, 0
      %p90 = por %p88, %p89
      %p91 = scmp.ne.s32.totalorder %s83, %s85
      %p92 = scmp.eq.s32.totalorder %s28, 1
      %p93 = por %p91, %p92
      %p94 = scmp.ne.s32.totalorder %s85, %s86
      %p95 = scmp.eq.s32.totalorder %s28, 0
      %p96 = por %p94, %p95
      %p97 = scmp.ne.s32.totalorder %s85, %s86
      %p98 = scmp.eq.s32.totalorder %s29, 1
      %p99 = por %p97, %p98
      %p101 = scmp.ne.s32.totalorder %s86, %s100
      %p102 = scmp.eq.s32.totalorder %s29, 0
      %p103 = por %p101, %p102
      %s105 = sadd.s32 %s104, 1
      %p108 = scmp.eq.s32.totalorder %s23, 1
      %p109 = scmp.ne.s32.totalorder %s104, %s106
      %p110 = scmp.eq.s32.totalorder %s23, 0
      %p111 = por %p109, %p110
      %p112 = scmp.ne.s32.totalorder %s104, %s106
      %p113 = scmp.eq.s32.totalorder %s28, 1
      %p114 = por %p112, %p113
      %p115 = scmp.ne.s32.totalorder %s106, %s107
      %p116 = scmp.eq.s32.totalorder %s28, 0
      %p117 = por %p115, %p116
      %p118 = scmp.ne.s32.totalorder %s106, %s107
      %p119 = scmp.eq.s32.totalorder %s29, 1
      %p120 = por %p118, %p119
      %p122 = scmp.ne.s32.totalorder %s107, %s121
      %p123 = scmp.eq.s32.totalorder %s29, 0
      %p124 = por %p122, %p123
      %s126 = sadd.s32 %s125, 1
      %p129 = scmp.eq.s32.totalorder %s23, 1
      %p130 = scmp.ne.s32.totalorder %s125, %s127
      %p131 = scmp.eq.s32.totalorder %s23, 0
      %p132 = por %p130, %p131
      %p133 = scmp.ne.s32.totalorder %s125, %s127
      %p134 = scmp.eq.s32.totalorder %s28, 1
      %p135 = por %p133, %p134
      %p136 = scmp.ne.s32.totalorder %s127, %s128
      %p137 = scmp.eq.s32.totalorder %s28, 0
      %p138 = por %p136, %p137
      %p139 = scmp.ne.s32.totalorder %s127, %s128
      %p140 = scmp.eq.s32.totalorder %s29, 1
      %p141 = por %p139, %p140
      %p143 = scmp.ne.s32.totalorder %s128, %s142
      %p144 = scmp.eq.s32.totalorder %s29, 0
      %p145 = por %p143, %p144
      %s147 = sadd.s32 %s146, 1
      %p150 = scmp.eq.s32.totalorder %s23, 1
      %p151 = scmp.ne.s32.totalorder %s146, %s148
      %p152 = scmp.eq.s32.totalorder %s23, 0
      %p153 = por %p151, %p152
      %p154 = scmp.ne.s32.totalorder %s146, %s148
      %p155 = scmp.eq.s32.totalorder %s28, 1
      %p156 = por %p154, %p155
      %p157 = scmp.ne.s32.totalorder %s148, %s149
      %p158 = scmp.eq.s32.totalorder %s28, 0
      %p159 = por %p157, %p158
      %p160 = scmp.ne.s32.totalorder %s148, %s149
      %p161 = scmp.eq.s32.totalorder %s29, 1
      %p162 = por %p160, %p161
      %p164 = scmp.ne.s32.totalorder %s149, %s163
      %p165 = scmp.eq.s32.totalorder %s29, 0
      %p166 = por %p164, %p165
      %s168 = sadd.s32 %s167, 1
      %p171 = scmp.eq.s32.totalorder %s23, 1
      %p172 = scmp.ne.s32.totalorder %s167, %s169
      %p173 = scmp.eq.s32.totalorder %s23, 0
      %p174 = por %p172, %p173
      %p175 = scmp.ne.s32.totalorder %s167, %s169
      %p176 = scmp.eq.s32.totalorder %s28, 1
      %p177 = por %p175, %p176
      %p178 = scmp.ne.s32.totalorder %s169, %s170
      %p179 = scmp.eq.s32.totalorder %s28, 0
      %p180 = por %p178, %p179
      %p181 = scmp.ne.s32.totalorder %s169, %s170
      %p182 = scmp.eq.s32.totalorder %s29, 1
      %p183 = por %p181, %p182
      %p185 = scmp.ne.s32.totalorder %s170, %s184
      %p186 = scmp.eq.s32.totalorder %s29, 0
      %p187 = por %p185, %p186
      %s189 = sadd.s32 %s188, 1
      %p192 = scmp.eq.s32.totalorder %s23, 1
      %p193 = scmp.ne.s32.totalorder %s188, %s190
      %p194 = scmp.eq.s32.totalorder %s23, 0
      %p195 = por %p193, %p194
      %p196 = scmp.ne.s32.totalorder %s188, %s190
      %p197 = scmp.eq.s32.totalorder %s28, 1
      %p198 = por %p196, %p197
      %p199 = scmp.ne.s32.totalorder %s190, %s191
      %p200 = scmp.eq.s32.totalorder %s28, 0
      %p201 = por %p199, %p200
      %p202 = scmp.ne.s32.totalorder %s190, %s191
      %p203 = scmp.eq.s32.totalorder %s29, 1
      %p204 = por %p202, %p203
      %p206 = scmp.ne.s32.totalorder %s191, %s205
      %p207 = scmp.eq.s32.totalorder %s29, 0
      %p208 = por %p206, %p207
      %s210 = sadd.s32 %s209, 1
      %p213 = scmp.eq.s32.totalorder %s23, 1
      %p214 = scmp.ne.s32.totalorder %s209, %s211
      %p215 = scmp.eq.s32.totalorder %s23, 0
      %p216 = por %p214, %p215
      %p217 = scmp.ne.s32.totalorder %s209, %s211
      %p218 = scmp.eq.s32.totalorder %s28, 1
      %p219 = por %p217, %p218
      %p220 = scmp.ne.s32.totalorder %s211, %s212
      %p221 = scmp.eq.s32.totalorder %s28, 0
      %p222 = por %p220, %p221
      %p223 = scmp.ne.s32.totalorder %s211, %s212
      %p224 = scmp.eq.s32.totalorder %s29, 1
      %p225 = por %p223, %p224
      %p227 = scmp.ne.s32.totalorder %s212, %s226
      %p228 = scmp.eq.s32.totalorder %s29, 0
      %p229 = por %p227, %p228
      %s231 = sadd.s32 %s230, 1
      %p234 = scmp.eq.s32.totalorder %s23, 1
      %p235 = scmp.ne.s32.totalorder %s230, %s232
      %p236 = scmp.eq.s32.totalorder %s23, 0
      %p237 = por %p235, %p236
      %p238 = scmp.ne.s32.totalorder %s230, %s232
      %p239 = scmp.eq.s32.totalorder %s28, 1
      %p240 = por %p238, %p239
      %p241 = scmp.ne.s32.totalorder %s232, %s233
      %p242 = scmp.eq.s32.totalorder %s28, 0
      %p243 = por %p241, %p242
      %p244 = scmp.ne.s32.totalorder %s232, %s233
      %p245 = scmp.eq.s32.totalorder %s29, 1
      %p246 = por %p244, %p245
      %p248 = scmp.ne.s32.totalorder %s233, %s247
      %p249 = scmp.eq.s32.totalorder %s29, 0
      %p250 = por %p248, %p249
      %s252 = sadd.s32 %s251, 1
      %p255 = scmp.eq.s32.totalorder %s23, 1
      %p256 = scmp.ne.s32.totalorder %s251, %s253
      %p257 = scmp.eq.s32.totalorder %s23, 0
      %p258 = por %p256, %p257
      %p259 = scmp.ne.s32.totalorder %s251, %s253
      %p260 = scmp.eq.s32.totalorder %s28, 1
      %p261 = por %p259, %p260
      %p262 = scmp.ne.s32.totalorder %s253, %s254
      %p263 = scmp.eq.s32.totalorder %s28, 0
      %p264 = por %p262, %p263
      %p265 = scmp.ne.s32.totalorder %s253, %s254
      %p266 = scmp.eq.s32.totalorder %s29, 1
      %p267 = por %p265, %p266
      %p269 = scmp.ne.s32.totalorder %s254, %s268
      %p270 = scmp.eq.s32.totalorder %s29, 0
      %p271 = por %p269, %p270
      %s273 = sadd.s32 %s272, 1
      %p276 = scmp.eq.s32.totalorder %s23, 1
      %p277 = scmp.ne.s32.totalorder %s272, %s274
      %p278 = scmp.eq.s32.totalorder %s23, 0
      %p279 = por %p277, %p278
      %p280 = scmp.ne.s32.totalorder %s272, %s274
      %p281 = scmp.eq.s32.totalorder %s28, 1
      %p282 = por %p280, %p281
      %p283 = scmp.ne.s32.totalorder %s274, %s275
      %p284 = scmp.eq.s32.totalorder %s28, 0
      %p285 = por %p283, %p284
      %p286 = scmp.ne.s32.totalorder %s274, %s275
      %p287 = scmp.eq.s32.totalorder %s29, 1
      %p288 = por %p286, %p287
      %p290 = scmp.ne.s32.totalorder %s275, %s289
      %p291 = scmp.eq.s32.totalorder %s29, 0
      %p292 = por %p290, %p291
      %s294 = sadd.s32 %s293, 1
      %p297 = scmp.eq.s32.totalorder %s23, 1
      %p298 = scmp.ne.s32.totalorder %s293, %s295
      %p299 = scmp.eq.s32.totalorder %s23, 0
      %p300 = por %p298, %p299
      %p301 = scmp.ne.s32.totalorder %s293, %s295
      %p302 = scmp.eq.s32.totalorder %s28, 1
      %p303 = por %p301, %p302
      %p304 = scmp.ne.s32.totalorder %s295, %s296
      %p305 = scmp.eq.s32.totalorder %s28, 0
      %p306 = por %p304, %p305
      %p307 = scmp.ne.s32.totalorder %s295, %s296
      %p308 = scmp.eq.s32.totalorder %s29, 1
      %p309 = por %p307, %p308
      %p311 = scmp.ne.s32.totalorder %s296, %s310
      %p312 = scmp.eq.s32.totalorder %s29, 0
      %p313 = por %p311, %p312
      %s314 = ssub.s32 %s23, %s30
      %p315 = scmp.eq.s32.totalorder %s314, 0
      %s317 = sadd.s32 %s316, 1
      %s318 = scalar_select %p315, %s316, %s317
      %p321 = pneg %p315
      %p322 = scmp.eq.s32.totalorder %s23, 1
      %p323 = por %p321, %p322
      %p324 = scmp.ne.s32.totalorder %s316, %s319
      %p325 = scmp.eq.s32.totalorder %s23, 0
      %p326 = por %p324, %p325
      %p327 = scmp.ne.s32.totalorder %s316, %s319
      %p328 = scmp.eq.s32.totalorder %s28, 1
      %p329 = por %p327, %p328
      %p330 = scmp.ne.s32.totalorder %s319, %s320
      %p331 = scmp.eq.s32.totalorder %s28, 0
      %p332 = por %p330, %p331
      %p333 = scmp.ne.s32.totalorder %s319, %s320
      %p334 = scmp.eq.s32.totalorder %s29, 1
      %p335 = por %p333, %p334
      %p337 = scmp.ne.s32.totalorder %s320, %s336
      %p338 = scmp.eq.s32.totalorder %s29, 0
      %p339 = por %p337, %p338
      %s340 = ssub.s32 %s23, %s30
      %p341 = scmp.eq.s32.totalorder %s340, 0
      %s343 = sadd.s32 %s342, 1
      %s344 = scalar_select %p341, %s342, %s343
      %p347 = pneg %p341
      %p348 = scmp.eq.s32.totalorder %s23, 1
      %p349 = por %p347, %p348
      %p350 = scmp.ne.s32.totalorder %s342, %s345
      %p351 = scmp.eq.s32.totalorder %s23, 0
      %p352 = por %p350, %p351
      %p353 = scmp.ne.s32.totalorder %s342, %s345
      %p354 = scmp.eq.s32.totalorder %s28, 1
      %p355 = por %p353, %p354
      %p356 = scmp.ne.s32.totalorder %s345, %s346
      %p357 = scmp.eq.s32.totalorder %s28, 0
      %p358 = por %p356, %p357
      %p359 = scmp.ne.s32.totalorder %s345, %s346
      %p360 = scmp.eq.s32.totalorder %s29, 1
      %p361 = por %p359, %p360
      %p363 = scmp.ne.s32.totalorder %s346, %s362
      %p364 = scmp.eq.s32.totalorder %s29, 0
      %p365 = por %p363, %p364
      %p366 = scmp.le.s32.totalorder 1, %s23
      %p367 = scmp.lt.s32.totalorder %s23, 3
      %p368 = pnand %p366, %p367
      %p369 = pneg %p368
      // Predicated region
      $region9: #{_lambda_.17} parent=5 // pred_check
        _
      $region10: #{_lambda_.17} parent=5 // pred_check_branch
        %371 = sbr.rel (%p368) target = $region12
      $region11: #{_lambda_.17} parent=5 // pred_region
        %s372 = ssub.s32 %s23, 1
        // Predicated region
        $region13: #{_lambda_.17} parent=11 // pred_check
          %p373 = pneg %p96
        $region14: #{_lambda_.17} parent=11 // pred_check_branch
          %375 = sbr.rel (%p373) target = $region16
        $region15: #{_lambda_.17} parent=11 // pred_region
          _
        $region16: #{_lambda_.17} parent=11 // pred_fallthru
          _
        // Predicated region
        $region17: #{_lambda_.17} parent=11 // pred_check
          %p376 = pneg %p117
        $region18: #{_lambda_.17} parent=11 // pred_check_branch
          %378 = sbr.rel (%p376) target = $region20
        $region19: #{_lambda_.17} parent=11 // pred_region
          _
        $region20: #{_lambda_.17} parent=11 // pred_fallthru
          _
        // Predicated region
        $region21: #{_lambda_.17} parent=11 // pred_check
          %p379 = pneg %p138
        $region22: #{_lambda_.17} parent=11 // pred_check_branch
          %381 = sbr.rel (%p379) target = $region24
        $region23: #{_lambda_.17} parent=11 // pred_region
          _
        $region24: #{_lambda_.17} parent=11 // pred_fallthru
          _
        // Predicated region
        $region25: #{_lambda_.17} parent=11 // pred_check
          %p382 = pneg %p159
        $region26: #{_lambda_.17} parent=11 // pred_check_branch
          %384 = sbr.rel (%p382) target = $region28
        $region27: #{_lambda_.17} parent=11 // pred_region
          _
        $region28: #{_lambda_.17} parent=11 // pred_fallthru
          _
        // Predicated region
        $region29: #{_lambda_.17} parent=11 // pred_check
          %p385 = pneg %p180
        $region30: #{_lambda_.17} parent=11 // pred_check_branch
          %387 = sbr.rel (%p385) target = $region32
        $region31: #{_lambda_.17} parent=11 // pred_region
          _
        $region32: #{_lambda_.17} parent=11 // pred_fallthru
          _
        // Predicated region
        $region33: #{_lambda_.17} parent=11 // pred_check
          %p388 = pneg %p201
        $region34: #{_lambda_.17} parent=11 // pred_check_branch
          %390 = sbr.rel (%p388) target = $region36
        $region35: #{_lambda_.17} parent=11 // pred_region
          _
        $region36: #{_lambda_.17} parent=11 // pred_fallthru
          _
        // Predicated region
        $region37: #{_lambda_.17} parent=11 // pred_check
          %p391 = pneg %p222
        $region38: #{_lambda_.17} parent=11 // pred_check_branch
          %393 = sbr.rel (%p391) target = $region40
        $region39: #{_lambda_.17} parent=11 // pred_region
          _
        $region40: #{_lambda_.17} parent=11 // pred_fallthru
          _
        // Predicated region
        $region41: #{_lambda_.17} parent=11 // pred_check
          %p394 = pneg %p243
        $region42: #{_lambda_.17} parent=11 // pred_check_branch
          %396 = sbr.rel (%p394) target = $region44
        $region43: #{_lambda_.17} parent=11 // pred_region
          _
        $region44: #{_lambda_.17} parent=11 // pred_fallthru
          _
        // Predicated region
        $region45: #{_lambda_.17} parent=11 // pred_check
          %p397 = pneg %p264
        $region46: #{_lambda_.17} parent=11 // pred_check_branch
          %399 = sbr.rel (%p397) target = $region48
        $region47: #{_lambda_.17} parent=11 // pred_region
          _
        $region48: #{_lambda_.17} parent=11 // pred_fallthru
          _
        // Predicated region
        $region49: #{_lambda_.17} parent=11 // pred_check
          %p400 = pneg %p285
        $region50: #{_lambda_.17} parent=11 // pred_check_branch
          %402 = sbr.rel (%p400) target = $region52
        $region51: #{_lambda_.17} parent=11 // pred_region
          _
        $region52: #{_lambda_.17} parent=11 // pred_fallthru
          _
        // Predicated region
        $region53: #{_lambda_.17} parent=11 // pred_check
          %p403 = pneg %p306
        $region54: #{_lambda_.17} parent=11 // pred_check_branch
          %405 = sbr.rel (%p403) target = $region56
        $region55: #{_lambda_.17} parent=11 // pred_region
          _
        $region56: #{_lambda_.17} parent=11 // pred_fallthru
          _
      $region12: #{_lambda_.17} parent=5 // pred_fallthru
        _
      %p406 = scmp.lt.s32.totalorder %s23, 2
      // Predicated region
      $region57: #{_lambda_.17} parent=5 // pred_check
        %p407 = pneg %p406
      $region58: #{_lambda_.17} parent=5 // pred_check_branch
        %409 = sbr.rel (%p407) target = $region60
      $region59: #{_lambda_.17} parent=5 // pred_region
        // Predicated region
        $region61: #{_lambda_.17} parent=59 // pred_check
          %p410 = pneg %p43
        $region62: #{_lambda_.17} parent=59 // pred_check_branch
          %412 = sbr.rel (%p410) target = $region64
        $region63: #{_lambda_.17} parent=59 // pred_region
          %s413 = sand.u32 %s33, 1
          %s414 = sand.u32 %s33, 1
          %s415 = smul.addr %s414, 16
          %s416 = scalar_lea.vmem [#allocation2], %s415
          %s417 = smul.addr %s23, 8
          %s418 = scalar_lea.vmem %s1, %s417
          // Predicated region
          $region65: #{_lambda_.17} parent=63 // pred_check
            _
          $region66: #{_lambda_.17} parent=63 // pred_check_branch
            %420 = sbr.rel (0) target = $region68
          $region67: #{_lambda_.17} parent=63 // pred_region
            // Predicated region
            $region69: #{_lambda_.17} parent=67 // pred_check
              _
            $region70: #{_lambda_.17} parent=67 // pred_check_branch
              %422 = sbr.rel (0) target = $region72
            $region71: #{_lambda_.17} parent=67 // pred_region
              // Predicated region
              $region84: #{_lambda_.17} parent=71 // pred_check
                _
              $region85: #{_lambda_.17} parent=71 // pred_check_branch
                %440 = sbr.rel (0) target = $region87
              $region86: #{_lambda_.17} parent=71 // pred_region
                loop: start=0, step=1, limit=1
                $region88: #{_lambda_.17} parent=86 // loop_pre_header
                  _
                $region89: #{_lambda_.17} parent=86 // loop_header
                  %s442 = sphi 0, %s446
                  %p443 = scmp.ge.s32.totalorder %s442, 1
                  %s447 = sphi %s418, %s418
                  %s448 = sphi %s416, %s416
                $region90: #{_lambda_.17} parent=86 // loop_header_branch
                  %445 = sbr.rel (%p443) target = $region94
                $region91: #{_lambda_.17} parent=86 // loop_body
                  %v449 = vld [vmem:[%s447] sm:$0xff]
                  %450 = vst [vmem:[%s448] sm:$0xff] %v449
                  %v451 = vld [vmem:[%s447 + $0x10] sm:$0xff]
                  %452 = vst [vmem:[%s448 + $0x8] sm:$0xff] %v451
                $region92: #{_lambda_.17} parent=86 // loop_footer
                  %s446 = sadd.s32 1, %s442
                $region93: #{_lambda_.17} parent=86 // loop_footer_branch
                  %441 = sbr.rel target = $region89
                $region94: #{_lambda_.17} parent=86 // loop_exit
                  _
              $region87: #{_lambda_.17} parent=71 // pred_fallthru
                _
              // Predicated region
              $region95: #{_lambda_.17} parent=71 // pred_check
                _
              $region96: #{_lambda_.17} parent=71 // pred_check_branch
                %454 = sbr.rel target = $region98
              $region97: #{_lambda_.17} parent=71 // pred_region
                _
              $region98: #{_lambda_.17} parent=71 // pred_fallthru
                _
            $region72: #{_lambda_.17} parent=67 // pred_fallthru
              _
            // Predicated region
            $region73: #{_lambda_.17} parent=67 // pred_check
              _
            $region74: #{_lambda_.17} parent=67 // pred_check_branch
              %424 = sbr.rel target = $region76
            $region75: #{_lambda_.17} parent=67 // pred_region
              %s426 = ssub.s32 256, 1
              loop: start=0, step=1, limit=1
              $region77: #{_lambda_.17} parent=75 // loop_pre_header
                _
              $region78: #{_lambda_.17} parent=75 // loop_header
                %s428 = sphi 0, %s432
                %p429 = scmp.ge.s32.totalorder %s428, 1
                %s433 = sphi %s418, %s418
                %s434 = sphi %s416, %s416
              $region79: #{_lambda_.17} parent=75 // loop_header_branch
                %431 = sbr.rel (%p429) target = $region83
              $region80: #{_lambda_.17} parent=75 // loop_body
                %v435 = vld [vmem:[%s433] sm:%s426]
                %436 = vst [vmem:[%s434] sm:%s426] %v435
                %v437 = vld [vmem:[%s433 + $0x10] sm:%s426]
                %438 = vst [vmem:[%s434 + $0x8] sm:%s426] %v437
              $region81: #{_lambda_.17} parent=75 // loop_footer
                %s432 = sadd.s32 1, %s428
              $region82: #{_lambda_.17} parent=75 // loop_footer_branch
                %427 = sbr.rel target = $region78
              $region83: #{_lambda_.17} parent=75 // loop_exit
                _
            $region76: #{_lambda_.17} parent=67 // pred_fallthru
              _
          $region68: #{_lambda_.17} parent=63 // pred_fallthru
            _
          %455 = vnop
        $region64: #{_lambda_.17} parent=59 // pred_fallthru
          _
        // Predicated region
        $region99: #{_lambda_.17} parent=59 // pred_check
          %p456 = pneg %p69
        $region100: #{_lambda_.17} parent=59 // pred_check_branch
          %458 = sbr.rel (%p456) target = $region102
        $region101: #{_lambda_.17} parent=59 // pred_region
          %s459 = sand.u32 %s59, 1
          %s460 = sand.u32 %s59, 1
          %s461 = smul.addr %s460, 16
          %s462 = scalar_lea.vmem [#allocation3], %s461
          %s463 = smul.addr %s23, 8
          %s464 = scalar_lea.vmem %s2, %s463
          // Predicated region
          $region103: #{_lambda_.17} parent=101 // pred_check
            _
          $region104: #{_lambda_.17} parent=101 // pred_check_branch
            %466 = sbr.rel (0) target = $region106
          $region105: #{_lambda_.17} parent=101 // pred_region
            // Predicated region
            $region107: #{_lambda_.17} parent=105 // pred_check
              _
            $region108: #{_lambda_.17} parent=105 // pred_check_branch
              %468 = sbr.rel (0) target = $region110
            $region109: #{_lambda_.17} parent=105 // pred_region
              // Predicated region
              $region122: #{_lambda_.17} parent=109 // pred_check
                _
              $region123: #{_lambda_.17} parent=109 // pred_check_branch
                %486 = sbr.rel (0) target = $region125
              $region124: #{_lambda_.17} parent=109 // pred_region
                loop: start=0, step=1, limit=1
                $region126: #{_lambda_.17} parent=124 // loop_pre_header
                  _
                $region127: #{_lambda_.17} parent=124 // loop_header
                  %s488 = sphi 0, %s492
                  %p489 = scmp.ge.s32.totalorder %s488, 1
                  %s493 = sphi %s464, %s464
                  %s494 = sphi %s462, %s462
                $region128: #{_lambda_.17} parent=124 // loop_header_branch
                  %491 = sbr.rel (%p489) target = $region132
                $region129: #{_lambda_.17} parent=124 // loop_body
                  %v495 = vld [vmem:[%s493] sm:$0xff]
                  %496 = vst [vmem:[%s494] sm:$0xff] %v495
                  %v497 = vld [vmem:[%s493 + $0x10] sm:$0xff]
                  %498 = vst [vmem:[%s494 + $0x8] sm:$0xff] %v497
                $region130: #{_lambda_.17} parent=124 // loop_footer
                  %s492 = sadd.s32 1, %s488
                $region131: #{_lambda_.17} parent=124 // loop_footer_branch
                  %487 = sbr.rel target = $region127
                $region132: #{_lambda_.17} parent=124 // loop_exit
                  _
              $region125: #{_lambda_.17} parent=109 // pred_fallthru
                _
              // Predicated region
              $region133: #{_lambda_.17} parent=109 // pred_check
                _
              $region134: #{_lambda_.17} parent=109 // pred_check_branch
                %500 = sbr.rel target = $region136
              $region135: #{_lambda_.17} parent=109 // pred_region
                _
              $region136: #{_lambda_.17} parent=109 // pred_fallthru
                _
            $region110: #{_lambda_.17} parent=105 // pred_fallthru
              _
            // Predicated region
            $region111: #{_lambda_.17} parent=105 // pred_check
              _
            $region112: #{_lambda_.17} parent=105 // pred_check_branch
              %470 = sbr.rel target = $region114
            $region113: #{_lambda_.17} parent=105 // pred_region
              %s472 = ssub.s32 256, 1
              loop: start=0, step=1, limit=1
              $region115: #{_lambda_.17} parent=113 // loop_pre_header
                _
              $region116: #{_lambda_.17} parent=113 // loop_header
                %s474 = sphi 0, %s478
                %p475 = scmp.ge.s32.totalorder %s474, 1
                %s479 = sphi %s464, %s464
                %s480 = sphi %s462, %s462
              $region117: #{_lambda_.17} parent=113 // loop_header_branch
                %477 = sbr.rel (%p475) target = $region121
              $region118: #{_lambda_.17} parent=113 // loop_body
                %v481 = vld [vmem:[%s479] sm:%s472]
                %482 = vst [vmem:[%s480] sm:%s472] %v481
                %v483 = vld [vmem:[%s479 + $0x10] sm:%s472]
                %484 = vst [vmem:[%s480 + $0x8] sm:%s472] %v483
              $region119: #{_lambda_.17} parent=113 // loop_footer
                %s478 = sadd.s32 1, %s474
              $region120: #{_lambda_.17} parent=113 // loop_footer_branch
                %473 = sbr.rel target = $region116
              $region121: #{_lambda_.17} parent=113 // loop_exit
                _
            $region114: #{_lambda_.17} parent=105 // pred_fallthru
              _
          $region106: #{_lambda_.17} parent=101 // pred_fallthru
            _
          %501 = vnop
        $region102: #{_lambda_.17} parent=59 // pred_fallthru
          _
      $region60: #{_lambda_.17} parent=5 // pred_fallthru
        _
      %p502 = scmp.le.s32.totalorder 1, %s23
      %p503 = scmp.lt.s32.totalorder %s23, 3
      %p504 = pnand %p502, %p503
      %p505 = pneg %p504
      // Predicated region
      $region137: #{_lambda_.17} parent=5 // pred_check
        _
      $region138: #{_lambda_.17} parent=5 // pred_check_branch
        %507 = sbr.rel (%p504) target = $region140
      $region139: #{_lambda_.17} parent=5 // pred_region
        %s508 = ssub.s32 %s23, 1
        %s509 = sand.u32 %s36, 1
        %s510 = sand.u32 %s36, 1
        %s511 = smul.addr %s510, 16
        %s512 = scalar_lea.vmem [#allocation2], %s511
        // Predicated region
        $region141: #{_lambda_.17} parent=139 // pred_check
          %p513 = pneg %p49
        $region142: #{_lambda_.17} parent=139 // pred_check_branch
          %515 = sbr.rel (%p513) target = $region144
        $region143: #{_lambda_.17} parent=139 // pred_region
          _
        $region144: #{_lambda_.17} parent=139 // pred_fallthru
          _
        %s516 = sand.u32 %s62, 1
        %s517 = sand.u32 %s62, 1
        %s518 = smul.addr %s517, 16
        %s519 = scalar_lea.vmem [#allocation3], %s518
        // Predicated region
        $region145: #{_lambda_.17} parent=139 // pred_check
          %p520 = pneg %p75
        $region146: #{_lambda_.17} parent=139 // pred_check_branch
          %522 = sbr.rel (%p520) target = $region148
        $region147: #{_lambda_.17} parent=139 // pred_region
          _
        $region148: #{_lambda_.17} parent=139 // pred_fallthru
          _
        %s523 = sand.u32 %s36, 1
        %s524 = sand.u32 %s36, 1
        %s525 = smul.addr %s524, 16
        %s526 = scalar_lea.vmem [#allocation2], %s525
        %p527 = pneg %p49
        %p528 = pneg %p46
        %s529 = sand.u32 %s62, 1
        %s530 = sand.u32 %s62, 1
        %s531 = smul.addr %s530, 16
        %s532 = scalar_lea.vmem [#allocation3], %s531
        %p533 = pneg %p75
        %p534 = pneg %p72
        %p535 = pneg %p96
        %p536 = pneg %p93
        %p537 = pneg %p117
        %p538 = pneg %p114
        %p539 = pneg %p138
        %p540 = pneg %p135
        %p541 = pneg %p159
        %p542 = pneg %p156
        %p543 = pneg %p180
        %p544 = pneg %p177
        %p545 = pneg %p201
        %p546 = pneg %p198
        %p547 = pneg %p222
        %p548 = pneg %p219
        %p549 = pneg %p243
        %p550 = pneg %p240
        %p551 = pneg %p264
        %p552 = pneg %p261
        %p553 = pneg %p285
        %p554 = pneg %p282
        %p555 = pneg %p306
        %p556 = pneg %p303
        %p557 = pneg %p332
        %p558 = pneg %p329
        %s559 = sand.u32 %s319, 1
        %s560 = sand.u32 %s319, 1
        %s561 = smul.addr %s560, 8
        %s562 = scalar_lea.vmem [#allocation4], %s561
        %p563 = pneg %p358
        %p564 = pneg %p355
        %p565 = scmp.lt.s32.totalorder %s28, 1
        %s566 = scalar_select %p565, %s28, 1
        %s567 = smul.addr %s566, 8
        %s568 = scalar_lea.vmem %s15, %s567
        %p569 = scmp.lt.s32.totalorder %s28, 1
        %s570 = scalar_select %p569, %s28, 1
        %s571 = smul.addr %s570, 8
        %s572 = scalar_lea.vmem %s15, %s571
        %v574 = vld [vmem:[%s3] sm:$0x1]
        %v575 = vld [vmem:[%s512] sm:$0xff]
        %v577 = vperm.slane %v574, 0
        %v579 = vmul.f32 %v575, %v577
        %vm580 = vcmask 130048
        %v581 = vsel %vm580, %v579, 0.0
        %582 = vadd.xlane.f32.xlu0 %v581
        %v583 = vpop.xlane.xlu0 %582
        %v584 = vmul.f32 %v583, 0.25
        %s585 = scalar_lea.vmem %s512, 8 [#allocation2]
        %v586 = vld [vmem:[%s585] sm:$0xff]
        %v587 = vmul.f32 %v586, %v577
        %v588 = vsel %vm580, %v587, 0.0
        %589 = vadd.xlane.f32.xlu0 %v588
        %v590 = vpop.xlane.xlu0 %589
        %v591 = vmul.f32 %v590, 0.25
        %v592 = vmax.f32 %v584, %v591
        %v593 = vsub.f32 %v584, %v592
        %v594 = vmul.f32 %v593, 1.442695
        %v595 = vpow.pop %v594
        %v596 = vsub.f32 %v591, %v592
        %v597 = vmul.f32 %v596, 1.442695
        %v598 = vpow.pop %v597
        %v599 = vadd.f32 %v595, %v598
        %v600 = vrcp.pop %v599
        %v601 = vmul.f32 %v595, %v600
        %v602 = vld [vmem:[%s519] sm:$0xff]
        %v603 = vmul.f32 %v601, %v602
        %v604 = vmul.f32 %v598, %v600
        %s605 = scalar_lea.vmem %s519, 8 [#allocation3]
        %v606 = vld [vmem:[%s605] sm:$0xff]
        %v607 = vmul.f32 %v604, %v606
        %v608 = vadd.f32 %v603, %v607
        %v609 = vpack.c.bf16 %v608, %v608
        %v610 = vld [vmem:[%s4] sm:$0xf]
        %v611 = vld [vmem:[%s4 + $0x4] sm:$0xf]
        %v612 = vld [vmem:[%s4 + $0x8] sm:$0xf]
        %v613 = vld [vmem:[%s4 + $0xc] sm:$0xf]
        %v614 = vld [vmem:[%s5] sm:$0x1]
        %v616 = vperm.slane %v614, 0
        %v622 = vunpack.c.l.b16 %v610
        %v623 = vunpack.c.l.b16 %v611
        %v624 = vunpack.c.l.b16 %v612
        %v625 = vunpack.c.l.b16 %v613
        %v626 = vpack.c.b16 %v623, %v622
        %v627 = vpack.c.b16 %v625, %v624
        %vm630 = vcmask 261120
        %v632 = vsel %vm630, %v609, 0
        %634 = vmatpush.bf16.msra.mxu0 0
        %635 = vmatpush.bf16.msra.mxu0 0
        %636 = vmatpush.bf16.msra.mxu0 0
        %637 = vmatpush.bf16.msra.mxu0 0
        %638 = vmatpush.bf16.msra.mxu0 0
        %639 = vmatpush.bf16.msra.mxu0 0
        %640 = vmatpush.bf16.msra.mxu0 %v627
        %641 = vmatpush.bf16.msra.mxu0 %v626
        %642 = vmatmul.bf16.gmra.mxu0 %v632
        %v643 = vpop.f32.mrf.mxu0
        %v644 = vadd.f32 %v616, %v643
        %v645 = vpop.f32.mrf.mxu0
        %646 = vdwg.mxu0
        %v647 = vlaneseq
        %v648 = vand.u32 %v647, 127
        %vm649 = vcmp.lt.s32.totalorder %v648, 5
        %v650 = vsel %vm649, 0.0, -1e+30
        %v651 = vpack.c.bf16 %v644, %v644
        %653 = vrot.lane.b32.xlu0 %v651, 96
        %v654 = vpop.permute.xlu0 %653
        %vm655 = vcmask 64512
        %v657 = vsel %vm655, %v651, 0
        %v660 = vsel %vm655, %v654, 0
        %662 = vmatpush.bf16.xpose.msra.mxu0 0
        %663 = vmatpush.bf16.xpose.msra.mxu0 0
        %664 = vmatpush.bf16.xpose.msra.mxu0 0
        %665 = vmatpush.bf16.xpose.msra.mxu0 0
        %666 = vmatpush.bf16.xpose.msra.mxu0 0
        %667 = vmatpush.bf16.xpose.msra.mxu0 0
        %668 = vmatpush.bf16.xpose.msra.mxu0 0
        %669 = vmatpush.bf16.xpose.msra.mxu0 %v660
        %670 = vmatmul.bf16.gmra.mxu0 %v657
        %v671 = vpop.f32.mrf.mxu0
        %v672 = vadd.f32 0.0, %v671
        %v673 = vpop.f32.mrf.mxu0
        %674 = vdwg.mxu0
        %v675 = vmul.f32 %v672, 0.35355338
        %v676 = vadd.f32 %v675, %v650
        %v677 = vsel %vm655, %v676, -inf
        %678 = vmax.xlane.f32.xlu0 %v677
        %v679 = vpop.xlane.xlu0 %678
        %v680 = vsub.f32 %v676, %v679
        %v681 = vmul.f32 %v680, 1.442695
        %v682 = vpow.pop %v681
        %v683 = vsel %vm655, %v682, 0.0
        %684 = vadd.xlane.f32.xlu0 %v683
        %v685 = vpop.xlane.xlu0 %684
        %v686 = vrcp.pop %v685
        %v687 = vmul.f32 %v682, %v686
        %v688 = vpack.c.bf16 %v687, %v687
        %689 = vrot.lane.b32.xlu0 %v651, 64
        %v690 = vpop.permute.xlu0 %689
        %v692 = vsel %vm655, %v688, 0
        %vm694 = vcmask 1043456
        %v696 = vsel %vm694, %v690, 0
        %698 = vmatpush.bf16.msra.mxu0 0
        %699 = vmatpush.bf16.msra.mxu0 0
        %700 = vmatpush.bf16.msra.mxu0 0
        %701 = vmatpush.bf16.msra.mxu0 0
        %702 = vmatpush.bf16.msra.mxu0 0
        %703 = vmatpush.bf16.msra.mxu0 0
        %704 = vmatpush.bf16.msra.mxu0 0
        %705 = vmatpush.bf16.msra.mxu0 %v696
        %706 = vmatmul.bf16.gmra.mxu0 %v692
        %v707 = vpop.f32.mrf.mxu0
        %v708 = vadd.f32 0.0, %v707
        %v709 = vpop.f32.mrf.mxu0
        %710 = vdwg.mxu0
        %711 = vrot.lane.b32.xlu0 %v651, 120
        %v712 = vpop.permute.xlu0 %711
        %713 = vrot.lane.b32.xlu0 %v651, 88
        %v714 = vpop.permute.xlu0 %713
        %v716 = vsel %vm655, %v712, 0
        %v719 = vsel %vm655, %v714, 0
        %721 = vmatpush.bf16.xpose.msra.mxu0 0
        %722 = vmatpush.bf16.xpose.msra.mxu0 0
        %723 = vmatpush.bf16.xpose.msra.mxu0 0
        %724 = vmatpush.bf16.xpose.msra.mxu0 0
        %725 = vmatpush.bf16.xpose.msra.mxu0 0
        %726 = vmatpush.bf16.xpose.msra.mxu0 0
        %727 = vmatpush.bf16.xpose.msra.mxu0 0
        %728 = vmatpush.bf16.xpose.msra.mxu0 %v719
        %729 = vmatmul.bf16.gmra.mxu0 %v716
        %v730 = vpop.f32.mrf.mxu0
        %v731 = vadd.f32 0.0, %v730
        %v732 = vpop.f32.mrf.mxu0
        %733 = vdwg.mxu0
        %v734 = vmul.f32 %v731, 0.35355338
        %v735 = vadd.f32 %v734, %v650
        %v736 = vsel %vm655, %v735, -inf
        %737 = vmax.xlane.f32.xlu0 %v736
        %v738 = vpop.xlane.xlu0 %737
        %v739 = vsub.f32 %v735, %v738
        %v740 = vmul.f32 %v739, 1.442695
        %v741 = vpow.pop %v740
        %v742 = vsel %vm655, %v741, 0.0
        %743 = vadd.xlane.f32.xlu0 %v742
        %v744 = vpop.xlane.xlu0 %743
        %v745 = vrcp.pop %v744
        %v746 = vmul.f32 %v741, %v745
        %v747 = vpack.c.bf16 %v746, %v746
        %748 = vrot.lane.b32.xlu0 %v651, 56
        %v749 = vpop.permute.xlu0 %748
        %v751 = vsel %vm655, %v747, 0
        %v754 = vsel %vm694, %v749, 0
        %756 = vmatpush.bf16.msra.mxu0 0
        %757 = vmatpush.bf16.msra.mxu0 0
        %758 = vmatpush.bf16.msra.mxu0 0
        %759 = vmatpush.bf16.msra.mxu0 0
        %760 = vmatpush.bf16.msra.mxu0 0
        %761 = vmatpush.bf16.msra.mxu0 0
        %762 = vmatpush.bf16.msra.mxu0 0
        %763 = vmatpush.bf16.msra.mxu0 %v754
        %764 = vmatmul.bf16.gmra.mxu0 %v751
        %v765 = vpop.f32.mrf.mxu0
        %v766 = vadd.f32 0.0, %v765
        %v767 = vpop.f32.mrf.mxu0
        %768 = vdwg.mxu0
        %769 = vrot.lane.b32.xlu0 %v651, 112
        %v770 = vpop.permute.xlu0 %769
        %771 = vrot.lane.b32.xlu0 %v651, 80
        %v772 = vpop.permute.xlu0 %771
        %v774 = vsel %vm655, %v770, 0
        %v777 = vsel %vm655, %v772, 0
        %779 = vmatpush.bf16.xpose.msra.mxu0 0
        %780 = vmatpush.bf16.xpose.msra.mxu0 0
        %781 = vmatpush.bf16.xpose.msra.mxu0 0
        %782 = vmatpush.bf16.xpose.msra.mxu0 0
        %783 = vmatpush.bf16.xpose.msra.mxu0 0
        %784 = vmatpush.bf16.xpose.msra.mxu0 0
        %785 = vmatpush.bf16.xpose.msra.mxu0 0
        %786 = vmatpush.bf16.xpose.msra.mxu0 %v777
        %787 = vmatmul.bf16.gmra.mxu0 %v774
        %v788 = vpop.f32.mrf.mxu0
        %v789 = vadd.f32 0.0, %v788
        %v790 = vpop.f32.mrf.mxu0
        %791 = vdwg.mxu0
        %v792 = vmul.f32 %v789, 0.35355338
        %v793 = vadd.f32 %v792, %v650
        %v794 = vsel %vm655, %v793, -inf
        %795 = vmax.xlane.f32.xlu0 %v794
        %v796 = vpop.xlane.xlu0 %795
        %v797 = vsub.f32 %v793, %v796
        %v798 = vmul.f32 %v797, 1.442695
        %v799 = vpow.pop %v798
        %v800 = vsel %vm655, %v799, 0.0
        %801 = vadd.xlane.f32.xlu0 %v800
        %v802 = vpop.xlane.xlu0 %801
        %v803 = vrcp.pop %v802
        %v804 = vmul.f32 %v799, %v803
        %v805 = vpack.c.bf16 %v804, %v804
        %806 = vrot.lane.b32.xlu0 %v651, 48
        %v807 = vpop.permute.xlu0 %806
        %v809 = vsel %vm655, %v805, 0
        %v812 = vsel %vm694, %v807, 0
        %814 = vmatpush.bf16.msra.mxu0 0
        %815 = vmatpush.bf16.msra.mxu0 0
        %816 = vmatpush.bf16.msra.mxu0 0
        %817 = vmatpush.bf16.msra.mxu0 0
        %818 = vmatpush.bf16.msra.mxu0 0
        %819 = vmatpush.bf16.msra.mxu0 0
        %820 = vmatpush.bf16.msra.mxu0 0
        %821 = vmatpush.bf16.msra.mxu0 %v812
        %822 = vmatmul.bf16.gmra.mxu0 %v809
        %v823 = vpop.f32.mrf.mxu0
        %v824 = vadd.f32 0.0, %v823
        %v825 = vpop.f32.mrf.mxu0
        %826 = vdwg.mxu0
        %827 = vrot.lane.b32.xlu0 %v651, 104
        %v828 = vpop.permute.xlu0 %827
        %829 = vrot.lane.b32.xlu0 %v651, 72
        %v830 = vpop.permute.xlu0 %829
        %v832 = vsel %vm655, %v828, 0
        %v835 = vsel %vm655, %v830, 0
        %837 = vmatpush.bf16.xpose.msra.mxu0 0
        %838 = vmatpush.bf16.xpose.msra.mxu0 0
        %839 = vmatpush.bf16.xpose.msra.mxu0 0
        %840 = vmatpush.bf16.xpose.msra.mxu0 0
        %841 = vmatpush.bf16.xpose.msra.mxu0 0
        %842 = vmatpush.bf16.xpose.msra.mxu0 0
        %843 = vmatpush.bf16.xpose.msra.mxu0 0
        %844 = vmatpush.bf16.xpose.msra.mxu0 %v835
        %845 = vmatmul.bf16.gmra.mxu0 %v832
        %v846 = vpop.f32.mrf.mxu0
        %v847 = vadd.f32 0.0, %v846
        %v848 = vpop.f32.mrf.mxu0
        %849 = vdwg.mxu0
        %v850 = vmul.f32 %v847, 0.35355338
        %v851 = vadd.f32 %v850, %v650
        %v852 = vsel %vm655, %v851, -inf
        %853 = vmax.xlane.f32.xlu0 %v852
        %v854 = vpop.xlane.xlu0 %853
        %v855 = vsub.f32 %v851, %v854
        %v856 = vmul.f32 %v855, 1.442695
        %v857 = vpow.pop %v856
        %v858 = vsel %vm655, %v857, 0.0
        %859 = vadd.xlane.f32.xlu0 %v858
        %v860 = vpop.xlane.xlu0 %859
        %v861 = vrcp.pop %v860
        %v862 = vmul.f32 %v857, %v861
        %v863 = vpack.c.bf16 %v862, %v862
        %864 = vrot.lane.b32.xlu0 %v651, 40
        %v865 = vpop.permute.xlu0 %864
        %v867 = vsel %vm655, %v863, 0
        %v870 = vsel %vm694, %v865, 0
        %872 = vmatpush.bf16.msra.mxu0 0
        %873 = vmatpush.bf16.msra.mxu0 0
        %874 = vmatpush.bf16.msra.mxu0 0
        %875 = vmatpush.bf16.msra.mxu0 0
        %876 = vmatpush.bf16.msra.mxu0 0
        %877 = vmatpush.bf16.msra.mxu0 0
        %878 = vmatpush.bf16.msra.mxu0 0
        %879 = vmatpush.bf16.msra.mxu0 %v870
        %880 = vmatmul.bf16.gmra.mxu0 %v867
        %v881 = vpop.f32.mrf.mxu0
        %v882 = vadd.f32 0.0, %v881
        %v883 = vpop.f32.mrf.mxu0
        %884 = vdwg.mxu0
        %886 = vrot.lane.b32.xlu0 %v766, 8
        %v887 = vpop.permute.xlu0 %886
        %890 = vrot.lane.b32.xlu0 %v824, 16
        %v891 = vpop.permute.xlu0 %890
        %894 = vrot.lane.b32.xlu0 %v882, 24
        %v895 = vpop.permute.xlu0 %894
        %v897 = vsel %vm655, %v708, %v887
        %v898 = vsel %vm580, %v897, %v891
        %vm899 = vcmask 195584
        %v900 = vsel %vm899, %v898, %v895
        %v901 = vpack.c.bf16 %v900, %v900
        %v902 = vld [vmem:[%s6] sm:$0xf]
        %v903 = vld [vmem:[%s6 + $0x4] sm:$0xf]
        %v904 = vld [vmem:[%s6 + $0x8] sm:$0xf]
        %v905 = vld [vmem:[%s6 + $0xc] sm:$0xf]
        %v906 = vld [vmem:[%s7] sm:$0x1]
        %v908 = vperm.slane %v906, 0
        %v914 = vunpack.c.l.b16 %v902
        %v915 = vunpack.c.l.b16 %v903
        %v916 = vunpack.c.l.b16 %v904
        %v917 = vunpack.c.l.b16 %v905
        %v918 = vpack.c.b16 %v915, %v914
        %v919 = vpack.c.b16 %v917, %v916
        %v923 = vsel %vm630, %v901, 0
        %925 = vmatpush.bf16.msra.mxu0 0
        %926 = vmatpush.bf16.msra.mxu0 0
        %927 = vmatpush.bf16.msra.mxu0 0
        %928 = vmatpush.bf16.msra.mxu0 0
        %929 = vmatpush.bf16.msra.mxu0 0
        %930 = vmatpush.bf16.msra.mxu0 0
        %931 = vmatpush.bf16.msra.mxu0 %v919
        %932 = vmatpush.bf16.msra.mxu0 %v918
        %933 = vmatmul.bf16.gmra.mxu0 %v923
        %v934 = vpop.f32.mrf.mxu0
        %v935 = vadd.f32 %v908, %v934
        %v936 = vpop.f32.mrf.mxu0
        %937 = vdwg.mxu0
        %vm938 = vcmp.ge.f32.partialorder %v935, 0.0
        %v939 = vld [vmem:[%s8] sm:$0x1]
        %v941 = vperm.slane %v939, 0
        %v943 = vmul.f32 %v935, %v941
        %v944 = vsel %vm938, %v935, %v943
        %v945 = vld [vmem:[%s11] sm:$0x1]
        %v947 = vperm.slane %v945, 0
        %v949 = vmul.f32 %v935, %v947
        %v950 = vsel %vm938, %v935, %v949
        %v951 = vpack.c.bf16 %v944, %v944
        %v952 = vld [vmem:[%s9] sm:$0xf]
        %v953 = vld [vmem:[%s9 + $0x4] sm:$0xf]
        %v954 = vld [vmem:[%s9 + $0x8] sm:$0xf]
        %v955 = vld [vmem:[%s9 + $0xc] sm:$0xf]
        %v956 = vld [vmem:[%s10] sm:$0x1]
        %v958 = vperm.slane %v956, 0
        %v964 = vunpack.c.l.b16 %v952
        %v965 = vunpack.c.l.b16 %v953
        %v966 = vunpack.c.l.b16 %v954
        %v967 = vunpack.c.l.b16 %v955
        %v968 = vpack.c.b16 %v965, %v964
        %v969 = vpack.c.b16 %v967, %v966
        %v973 = vsel %vm630, %v951, 0
        %975 = vmatpush.bf16.msra.mxu0 0
        %976 = vmatpush.bf16.msra.mxu0 0
        %977 = vmatpush.bf16.msra.mxu0 0
        %978 = vmatpush.bf16.msra.mxu0 0
        %979 = vmatpush.bf16.msra.mxu0 0
        %980 = vmatpush.bf16.msra.mxu0 0
        %981 = vmatpush.bf16.msra.mxu0 %v969
        %982 = vmatpush.bf16.msra.mxu0 %v968
        %983 = vmatmul.bf16.gmra.mxu0 %v973
        %v984 = vpop.f32.mrf.mxu0
        %v985 = vadd.f32 %v958, %v984
        %v986 = vpop.f32.mrf.mxu0
        %987 = vdwg.mxu0
        %988 = vst.msk [vmem:[%s562] sm:$0xff] %vm580, %v985
        %v989 = vpack.c.bf16 %v950, %v950
        %v990 = vld [vmem:[%s12] sm:$0xf]
        %v991 = vld [vmem:[%s12 + $0x4] sm:$0xf]
        %v992 = vld [vmem:[%s12 + $0x8] sm:$0xf]
        %v993 = vld [vmem:[%s12 + $0xc] sm:$0xf]
        %v994 = vld [vmem:[%s13] sm:$0x1]
        %v996 = vperm.slane %v994, 0
        %v1002 = vunpack.c.l.b16 %v990
        %v1003 = vunpack.c.l.b16 %v991
        %v1004 = vunpack.c.l.b16 %v992
        %v1005 = vunpack.c.l.b16 %v993
        %v1006 = vpack.c.b16 %v1003, %v1002
        %v1007 = vpack.c.b16 %v1005, %v1004
        %v1011 = vsel %vm630, %v989, 0
        %1013 = vmatpush.bf16.msra.mxu0 0
        %1014 = vmatpush.bf16.msra.mxu0 0
        %1015 = vmatpush.bf16.msra.mxu0 0
        %1016 = vmatpush.bf16.msra.mxu0 0
        %1017 = vmatpush.bf16.msra.mxu0 0
        %1018 = vmatpush.bf16.msra.mxu0 0
        %1019 = vmatpush.bf16.msra.mxu0 %v1007
        %1020 = vmatpush.bf16.msra.mxu0 %v1006
        %1021 = vmatmul.bf16.gmra.mxu0 %v1011
        %v1022 = vpop.f32.mrf.mxu0
        %v1023 = vadd.f32 %v996, %v1022
        %v1024 = vpop.f32.mrf.mxu0
        %1025 = vdwg.mxu0
        %1026 = vst.msk [vmem:[%s572] sm:$0xff] %vm630, %v1023
        %s1027 = sand.u32 %s319, 1
        %s1028 = sand.u32 %s319, 1
        %s1029 = smul.addr %s1028, 8
        %s1030 = scalar_lea.vmem [#allocation4], %s1029
        %p1031 = scmp.lt.s32.totalorder %s28, 1
        %s1032 = scalar_select %p1031, %s28, 1
        %s1033 = smul.addr %s1032, 8
        %s1034 = scalar_lea.vmem %s15, %s1033
        // Predicated region
        $region149: #{_lambda_.17} parent=139 // pred_check
          %p1035 = pneg %p329
        $region150: #{_lambda_.17} parent=139 // pred_check_branch
          %1037 = sbr.rel (%p1035) target = $region152
        $region151: #{_lambda_.17} parent=139 // pred_region
          %s1038 = smul.addr %s28, 8
          %s1039 = scalar_lea.vmem %s17, %s1038
          // Predicated region
          $region153: #{_lambda_.17} parent=151 // pred_check
            _
          $region154: #{_lambda_.17} parent=151 // pred_check_branch
            %1041 = sbr.rel (0) target = $region156
          $region155: #{_lambda_.17} parent=151 // pred_region
            // Predicated region
            $region157: #{_lambda_.17} parent=155 // pred_check
              _
            $region158: #{_lambda_.17} parent=155 // pred_check_branch
              %1043 = sbr.rel (0) target = $region160
            $region159: #{_lambda_.17} parent=155 // pred_region
              // Predicated region
              $region172: #{_lambda_.17} parent=159 // pred_check
                _
              $region173: #{_lambda_.17} parent=159 // pred_check_branch
                %1059 = sbr.rel (0) target = $region175
              $region174: #{_lambda_.17} parent=159 // pred_region
                loop: start=0, step=1, limit=1
                $region176: #{_lambda_.17} parent=174 // loop_pre_header
                  _
                $region177: #{_lambda_.17} parent=174 // loop_header
                  %s1061 = sphi 0, %s1065
                  %p1062 = scmp.ge.s32.totalorder %s1061, 1
                  %s1066 = sphi %s1030, %s1030
                  %s1067 = sphi %s1039, %s1039
                $region178: #{_lambda_.17} parent=174 // loop_header_branch
                  %1064 = sbr.rel (%p1062) target = $region182
                $region179: #{_lambda_.17} parent=174 // loop_body
                  %v1068 = vld [vmem:[%s1066] sm:$0xff]
                  %1069 = vst [vmem:[%s1067] sm:$0xff] %v1068
                $region180: #{_lambda_.17} parent=174 // loop_footer
                  %s1065 = sadd.s32 1, %s1061
                $region181: #{_lambda_.17} parent=174 // loop_footer_branch
                  %1060 = sbr.rel target = $region177
                $region182: #{_lambda_.17} parent=174 // loop_exit
                  _
              $region175: #{_lambda_.17} parent=159 // pred_fallthru
                _
              // Predicated region
              $region183: #{_lambda_.17} parent=159 // pred_check
                _
              $region184: #{_lambda_.17} parent=159 // pred_check_branch
                %1071 = sbr.rel target = $region186
              $region185: #{_lambda_.17} parent=159 // pred_region
                _
              $region186: #{_lambda_.17} parent=159 // pred_fallthru
                _
            $region160: #{_lambda_.17} parent=155 // pred_fallthru
              _
            // Predicated region
            $region161: #{_lambda_.17} parent=155 // pred_check
              _
            $region162: #{_lambda_.17} parent=155 // pred_check_branch
              %1045 = sbr.rel target = $region164
            $region163: #{_lambda_.17} parent=155 // pred_region
              %s1047 = ssub.s32 256, 1
              loop: start=0, step=1, limit=1
              $region165: #{_lambda_.17} parent=163 // loop_pre_header
                _
              $region166: #{_lambda_.17} parent=163 // loop_header
                %s1049 = sphi 0, %s1053
                %p1050 = scmp.ge.s32.totalorder %s1049, 1
                %s1054 = sphi %s1030, %s1030
                %s1055 = sphi %s1039, %s1039
              $region167: #{_lambda_.17} parent=163 // loop_header_branch
                %1052 = sbr.rel (%p1050) target = $region171
              $region168: #{_lambda_.17} parent=163 // loop_body
                %v1056 = vld [vmem:[%s1054] sm:%s1047]
                %1057 = vst [vmem:[%s1055] sm:%s1047] %v1056
              $region169: #{_lambda_.17} parent=163 // loop_footer
                %s1053 = sadd.s32 1, %s1049
              $region170: #{_lambda_.17} parent=163 // loop_footer_branch
                %1048 = sbr.rel target = $region166
              $region171: #{_lambda_.17} parent=163 // loop_exit
                _
            $region164: #{_lambda_.17} parent=155 // pred_fallthru
              _
          $region156: #{_lambda_.17} parent=151 // pred_fallthru
            _
          %1072 = vnop
        $region152: #{_lambda_.17} parent=139 // pred_fallthru
          _
        // Predicated region
        $region187: #{_lambda_.17} parent=139 // pred_check
          %p1073 = pneg %p355
        $region188: #{_lambda_.17} parent=139 // pred_check_branch
          %1075 = sbr.rel (%p1073) target = $region190
        $region189: #{_lambda_.17} parent=139 // pred_region
          _
        $region190: #{_lambda_.17} parent=139 // pred_fallthru
          _
      $region140: #{_lambda_.17} parent=5 // pred_fallthru
        _
      %p1076 = scmp.le.s32.totalorder 2, %s23
      // Predicated region
      $region191: #{_lambda_.17} parent=5 // pred_check
        %p1077 = pneg %p1076
      $region192: #{_lambda_.17} parent=5 // pred_check_branch
        %1079 = sbr.rel (%p1077) target = $region194
      $region193: #{_lambda_.17} parent=5 // pred_region
        %s1080 = ssub.s32 %s23, 2
        // Predicated region
        $region195: #{_lambda_.17} parent=193 // pred_check
          %p1081 = pneg %p335
        $region196: #{_lambda_.17} parent=193 // pred_check_branch
          %1083 = sbr.rel (%p1081) target = $region198
        $region197: #{_lambda_.17} parent=193 // pred_region
          %s1084 = sand.u32 %s320, 1
          %s1085 = sand.u32 %s320, 1
          %s1086 = smul.addr %s1085, 8
          %s1087 = scalar_lea.vmem [#allocation4], %s1086
        $region198: #{_lambda_.17} parent=193 // pred_fallthru
          _
        // Predicated region
        $region199: #{_lambda_.17} parent=193 // pred_check
          %p1088 = pneg %p361
        $region200: #{_lambda_.17} parent=193 // pred_check_branch
          %1090 = sbr.rel (%p1088) target = $region202
        $region201: #{_lambda_.17} parent=193 // pred_region
          %p1091 = scmp.lt.s32.totalorder %s29, 1
          %s1092 = scalar_select %p1091, %s29, 1
          %s1093 = smul.addr %s1092, 8
          %s1094 = scalar_lea.vmem %s15, %s1093
        $region202: #{_lambda_.17} parent=193 // pred_fallthru
          _
      $region194: #{_lambda_.17} parent=5 // pred_fallthru
        _
    $region6: #{_lambda_.17} parent=1 // loop_footer
      %s27 = sadd.s32 1, %s23
    $region7: #{_lambda_.17} parent=1 // loop_footer_branch
      %22 = sbr.rel target = $region3
    $region8: #{_lambda_.17} parent=1 // loop_exit
      _

// kernel: _lambda_.15
$region0: #{_lambda_.15}
  #allocation0 [shape = 'u32[]', space=smem, size = 0x4, offset = 0x4, fixed_abs, tag = 'smem constant byte address 0x4 - core index']
  #allocation1 [shape = 'u32[72,128]{1,0:T(1,128)}', space=vmem, size = 0x9000, scoped, tag = 'internal scratch']
  %s0 = inlined_call_operand.vmem [shape: f32[6,16,16], index: 0, kind: input, shape index: {}, may-alias: {0,14}]
  %s1 = inlined_call_operand.vmem [shape: f32[6,2,8,16], index: 1, kind: input, shape index: {}]
  %s2 = inlined_call_operand.vmem [shape: f32[6,2,8,32], index: 2, kind: input, shape index: {}]
  %s3 = inlined_call_operand.vmem [shape: f32[1,16], index: 3, kind: input, shape index: {}]
  %s4 = inlined_call_operand.vmem [shape: bf16[32,96], index: 4, kind: input, shape index: {}]
  %s5 = inlined_call_operand.vmem [shape: f32[1,96], index: 5, kind: input, shape index: {}]
  %s6 = inlined_call_operand.vmem [shape: bf16[32,32], index: 6, kind: input, shape index: {}]
  %s7 = inlined_call_operand.vmem [shape: f32[1,32], index: 7, kind: input, shape index: {}]
  %s8 = inlined_call_operand.vmem [shape: f32[1,32], index: 8, kind: input, shape index: {}]
  %s9 = inlined_call_operand.vmem [shape: bf16[32,16], index: 9, kind: input, shape index: {}]
  %s10 = inlined_call_operand.vmem [shape: f32[1,16], index: 10, kind: input, shape index: {}]
  %s11 = inlined_call_operand.vmem [shape: f32[1,32], index: 11, kind: input, shape index: {}]
  %s12 = inlined_call_operand.vmem [shape: bf16[32,32], index: 12, kind: input, shape index: {}]
  %s13 = inlined_call_operand.vmem [shape: f32[1,32], index: 13, kind: input, shape index: {}]
  %s14 = inlined_call_operand.vmem [shape: f32[6,16,16], index: 14, kind: output, shape index: {0}, may-alias: {0,14}]
  %s15 = inlined_call_operand.vmem [shape: f32[2,8,32], index: 15, kind: output, shape index: {1}]
  %16 = xla_tuple %s14, %s15
  %s17 = scalar_lea.vmem %s14, 64
  %s18 = sld [smem:[#allocation0]]
  $region203: #{_lambda_.15} parent=0
    _
  %s20 = ssub.s32 1, %s18
  %s21 = scalar_select 0, %s20, %s18
  $region1: #{_lambda_.15} parent=0
    #allocation2 [shape = 'u8[32768]{0}', space=vmem, size = 0x8000, scoped, tag = 'input window, operand 0']
    #allocation3 [shape = 'u8[32768]{0}', space=vmem, size = 0x8000, scoped, tag = 'input window, operand 1']
    #allocation4 [shape = 'u8[8192]{0}', space=vmem, size = 0x2000, scoped, tag = 'output window, operand 0']
    loop: start=0, step=1, limit=4
    $region2: #{_lambda_.15} parent=1 // loop_pre_header
      _
    $region3: #{_lambda_.15} parent=1 // loop_header
      %s23 = sphi 0, %s27
      %p24 = scmp.ge.s32.totalorder %s23, 4
      %s33 = sphi 0, %s35
      %s36 = sphi 0, %s33
      %s37 = sphi 0, %s36
      %s53 = sphi 0, %s37
      %s59 = sphi 0, %s61
      %s62 = sphi 0, %s59
      %s63 = sphi 0, %s62
      %s79 = sphi 0, %s63
      %s83 = sphi 0, %s83
      %s85 = sphi 0, %s83
      %s86 = sphi 0, %s85
      %s100 = sphi 0, %s86
      %s104 = sphi 0, %s104
      %s106 = sphi 0, %s104
      %s107 = sphi 0, %s106
      %s121 = sphi 0, %s107
      %s125 = sphi 0, %s125
      %s127 = sphi 0, %s125
      %s128 = sphi 0, %s127
      %s142 = sphi 0, %s128
      %s146 = sphi 0, %s146
      %s148 = sphi 0, %s146
      %s149 = sphi 0, %s148
      %s163 = sphi 0, %s149
      %s167 = sphi 0, %s167
      %s169 = sphi 0, %s167
      %s170 = sphi 0, %s169
      %s184 = sphi 0, %s170
      %s188 = sphi 0, %s188
      %s190 = sphi 0, %s188
      %s191 = sphi 0, %s190
      %s205 = sphi 0, %s191
      %s209 = sphi 0, %s209
      %s211 = sphi 0, %s209
      %s212 = sphi 0, %s211
      %s226 = sphi 0, %s212
      %s230 = sphi 0, %s230
      %s232 = sphi 0, %s230
      %s233 = sphi 0, %s232
      %s247 = sphi 0, %s233
      %s251 = sphi 0, %s251
      %s253 = sphi 0, %s251
      %s254 = sphi 0, %s253
      %s268 = sphi 0, %s254
      %s272 = sphi 0, %s272
      %s274 = sphi 0, %s272
      %s275 = sphi 0, %s274
      %s289 = sphi 0, %s275
      %s293 = sphi 0, %s293
      %s295 = sphi 0, %s293
      %s296 = sphi 0, %s295
      %s310 = sphi 0, %s296
      %s316 = sphi 0, %s318
      %s319 = sphi 0, %s316
      %s320 = sphi 0, %s319
      %s336 = sphi 0, %s320
      %s342 = sphi 0, %s344
      %s345 = sphi 0, %s342
      %s346 = sphi 0, %s345
      %s362 = sphi 0, %s346
    $region4: #{_lambda_.15} parent=1 // loop_header_branch
      %26 = sbr.rel (%p24) target = $region8
    $region5: #{_lambda_.15} parent=1 // loop_body
      %s28 = ssub.s32 %s23, 1
      %s29 = ssub.s32 %s23, 2
      %s30 = sadd.s32 %s23, 1
      %s31 = ssub.s32 %s23, %s30
      %p32 = scmp.eq.s32.totalorder %s31, 0
      %s34 = sadd.s32 %s33, 1
      %s35 = scalar_select %p32, %s33, %s34
      %p38 = pneg %p32
      %p39 = scmp.eq.s32.totalorder %s23, 1
      %p40 = por %p38, %p39
      %p41 = scmp.ne.s32.totalorder %s33, %s36
      %p42 = scmp.eq.s32.totalorder %s23, 0
      %p43 = por %p41, %p42
      %p44 = scmp.ne.s32.totalorder %s33, %s36
      %p45 = scmp.eq.s32.totalorder %s28, 1
      %p46 = por %p44, %p45
      %p47 = scmp.ne.s32.totalorder %s36, %s37
      %p48 = scmp.eq.s32.totalorder %s28, 0
      %p49 = por %p47, %p48
      %p50 = scmp.ne.s32.totalorder %s36, %s37
      %p51 = scmp.eq.s32.totalorder %s29, 1
      %p52 = por %p50, %p51
      %p54 = scmp.ne.s32.totalorder %s37, %s53
      %p55 = scmp.eq.s32.totalorder %s29, 0
      %p56 = por %p54, %p55
      %s57 = ssub.s32 %s23, %s30
      %p58 = scmp.eq.s32.totalorder %s57, 0
      %s60 = sadd.s32 %s59, 1
      %s61 = scalar_select %p58, %s59, %s60
      %p64 = pneg %p58
      %p65 = scmp.eq.s32.totalorder %s23, 1
      %p66 = por %p64, %p65
      %p67 = scmp.ne.s32.totalorder %s59, %s62
      %p68 = scmp.eq.s32.totalorder %s23, 0
      %p69 = por %p67, %p68
      %p70 = scmp.ne.s32.totalorder %s59, %s62
      %p71 = scmp.eq.s32.totalorder %s28, 1
      %p72 = por %p70, %p71
      %p73 = scmp.ne.s32.totalorder %s62, %s63
      %p74 = scmp.eq.s32.totalorder %s28, 0
      %p75 = por %p73, %p74
      %p76 = scmp.ne.s32.totalorder %s62, %s63
      %p77 = scmp.eq.s32.totalorder %s29, 1
      %p78 = por %p76, %p77
      %p80 = scmp.ne.s32.totalorder %s63, %s79
      %p81 = scmp.eq.s32.totalorder %s29, 0
      %p82 = por %p80, %p81
      %s84 = sadd.s32 %s83, 1
      %p87 = scmp.eq.s32.totalorder %s23, 1
      %p88 = scmp.ne.s32.totalorder %s83, %s85
      %p89 = scmp.eq.s32.totalorder %s23, 0
      %p90 = por %p88, %p89
      %p91 = scmp.ne.s32.totalorder %s83, %s85
      %p92 = scmp.eq.s32.totalorder %s28, 1
      %p93 = por %p91, %p92
      %p94 = scmp.ne.s32.totalorder %s85, %s86
      %p95 = scmp.eq.s32.totalorder %s28, 0
      %p96 = por %p94, %p95
      %p97 = scmp.ne.s32.totalorder %s85, %s86
      %p98 = scmp.eq.s32.totalorder %s29, 1
      %p99 = por %p97, %p98
      %p101 = scmp.ne.s32.totalorder %s86, %s100
      %p102 = scmp.eq.s32.totalorder %s29, 0
      %p103 = por %p101, %p102
      %s105 = sadd.s32 %s104, 1
      %p108 = scmp.eq.s32.totalorder %s23, 1
      %p109 = scmp.ne.s32.totalorder %s104, %s106
      %p110 = scmp.eq.s32.totalorder %s23, 0
      %p111 = por %p109, %p110
      %p112 = scmp.ne.s32.totalorder %s104, %s106
      %p113 = scmp.eq.s32.totalorder %s28, 1
      %p114 = por %p112, %p113
      %p115 = scmp.ne.s32.totalorder %s106, %s107
      %p116 = scmp.eq.s32.totalorder %s28, 0
      %p117 = por %p115, %p116
      %p118 = scmp.ne.s32.totalorder %s106, %s107
      %p119 = scmp.eq.s32.totalorder %s29, 1
      %p120 = por %p118, %p119
      %p122 = scmp.ne.s32.totalorder %s107, %s121
      %p123 = scmp.eq.s32.totalorder %s29, 0
      %p124 = por %p122, %p123
      %s126 = sadd.s32 %s125, 1
      %p129 = scmp.eq.s32.totalorder %s23, 1
      %p130 = scmp.ne.s32.totalorder %s125, %s127
      %p131 = scmp.eq.s32.totalorder %s23, 0
      %p132 = por %p130, %p131
      %p133 = scmp.ne.s32.totalorder %s125, %s127
      %p134 = scmp.eq.s32.totalorder %s28, 1
      %p135 = por %p133, %p134
      %p136 = scmp.ne.s32.totalorder %s127, %s128
      %p137 = scmp.eq.s32.totalorder %s28, 0
      %p138 = por %p136, %p137
      %p139 = scmp.ne.s32.totalorder %s127, %s128
      %p140 = scmp.eq.s32.totalorder %s29, 1
      %p141 = por %p139, %p140
      %p143 = scmp.ne.s32.totalorder %s128, %s142
      %p144 = scmp.eq.s32.totalorder %s29, 0
      %p145 = por %p143, %p144
      %s147 = sadd.s32 %s146, 1
      %p150 = scmp.eq.s32.totalorder %s23, 1
      %p151 = scmp.ne.s32.totalorder %s146, %s148
      %p152 = scmp.eq.s32.totalorder %s23, 0
      %p153 = por %p151, %p152
      %p154 = scmp.ne.s32.totalorder %s146, %s148
      %p155 = scmp.eq.s32.totalorder %s28, 1
      %p156 = por %p154, %p155
      %p157 = scmp.ne.s32.totalorder %s148, %s149
      %p158 = scmp.eq.s32.totalorder %s28, 0
      %p159 = por %p157, %p158
      %p160 = scmp.ne.s32.totalorder %s148, %s149
      %p161 = scmp.eq.s32.totalorder %s29, 1
      %p162 = por %p160, %p161
      %p164 = scmp.ne.s32.totalorder %s149, %s163
      %p165 = scmp.eq.s32.totalorder %s29, 0
      %p166 = por %p164, %p165
      %s168 = sadd.s32 %s167, 1
      %p171 = scmp.eq.s32.totalorder %s23, 1
      %p172 = scmp.ne.s32.totalorder %s167, %s169
      %p173 = scmp.eq.s32.totalorder %s23, 0
      %p174 = por %p172, %p173
      %p175 = scmp.ne.s32.totalorder %s167, %s169
      %p176 = scmp.eq.s32.totalorder %s28, 1
      %p177 = por %p175, %p176
      %p178 = scmp.ne.s32.totalorder %s169, %s170
      %p179 = scmp.eq.s32.totalorder %s28, 0
      %p180 = por %p178, %p179
      %p181 = scmp.ne.s32.totalorder %s169, %s170
      %p182 = scmp.eq.s32.totalorder %s29, 1
      %p183 = por %p181, %p182
      %p185 = scmp.ne.s32.totalorder %s170, %s184
      %p186 = scmp.eq.s32.totalorder %s29, 0
      %p187 = por %p185, %p186
      %s189 = sadd.s32 %s188, 1
      %p192 = scmp.eq.s32.totalorder %s23, 1
      %p193 = scmp.ne.s32.totalorder %s188, %s190
      %p194 = scmp.eq.s32.totalorder %s23, 0
      %p195 = por %p193, %p194
      %p196 = scmp.ne.s32.totalorder %s188, %s190
      %p197 = scmp.eq.s32.totalorder %s28, 1
      %p198 = por %p196, %p197
      %p199 = scmp.ne.s32.totalorder %s190, %s191
      %p200 = scmp.eq.s32.totalorder %s28, 0
      %p201 = por %p199, %p200
      %p202 = scmp.ne.s32.totalorder %s190, %s191
      %p203 = scmp.eq.s32.totalorder %s29, 1
      %p204 = por %p202, %p203
      %p206 = scmp.ne.s32.totalorder %s191, %s205
      %p207 = scmp.eq.s32.totalorder %s29, 0
      %p208 = por %p206, %p207
      %s210 = sadd.s32 %s209, 1
      %p213 = scmp.eq.s32.totalorder %s23, 1
      %p214 = scmp.ne.s32.totalorder %s209, %s211
      %p215 = scmp.eq.s32.totalorder %s23, 0
      %p216 = por %p214, %p215
      %p217 = scmp.ne.s32.totalorder %s209, %s211
      %p218 = scmp.eq.s32.totalorder %s28, 1
      %p219 = por %p217, %p218
      %p220 = scmp.ne.s32.totalorder %s211, %s212
      %p221 = scmp.eq.s32.totalorder %s28, 0
      %p222 = por %p220, %p221
      %p223 = scmp.ne.s32.totalorder %s211, %s212
      %p224 = scmp.eq.s32.totalorder %s29, 1
      %p225 = por %p223, %p224
      %p227 = scmp.ne.s32.totalorder %s212, %s226
      %p228 = scmp.eq.s32.totalorder %s29, 0
      %p229 = por %p227, %p228
      %s231 = sadd.s32 %s230, 1
      %p234 = scmp.eq.s32.totalorder %s23, 1
      %p235 = scmp.ne.s32.totalorder %s230, %s232
      %p236 = scmp.eq.s32.totalorder %s23, 0
      %p237 = por %p235, %p236
      %p238 = scmp.ne.s32.totalorder %s230, %s232
      %p239 = scmp.eq.s32.totalorder %s28, 1
      %p240 = por %p238, %p239
      %p241 = scmp.ne.s32.totalorder %s232, %s233
      %p242 = scmp.eq.s32.totalorder %s28, 0
      %p243 = por %p241, %p242
      %p244 = scmp.ne.s32.totalorder %s232, %s233
      %p245 = scmp.eq.s32.totalorder %s29, 1
      %p246 = por %p244, %p245
      %p248 = scmp.ne.s32.totalorder %s233, %s247
      %p249 = scmp.eq.s32.totalorder %s29, 0
      %p250 = por %p248, %p249
      %s252 = sadd.s32 %s251, 1
      %p255 = scmp.eq.s32.totalorder %s23, 1
      %p256 = scmp.ne.s32.totalorder %s251, %s253
      %p257 = scmp.eq.s32.totalorder %s23, 0
      %p258 = por %p256, %p257
      %p259 = scmp.ne.s32.totalorder %s251, %s253
      %p260 = scmp.eq.s32.totalorder %s28, 1
      %p261 = por %p259, %p260
      %p262 = scmp.ne.s32.totalorder %s253, %s254
      %p263 = scmp.eq.s32.totalorder %s28, 0
      %p264 = por %p262, %p263
      %p265 = scmp.ne.s32.totalorder %s253, %s254
      %p266 = scmp.eq.s32.totalorder %s29, 1
      %p267 = por %p265, %p266
      %p269 = scmp.ne.s32.totalorder %s254, %s268
      %p270 = scmp.eq.s32.totalorder %s29, 0
      %p271 = por %p269, %p270
      %s273 = sadd.s32 %s272, 1
      %p276 = scmp.eq.s32.totalorder %s23, 1
      %p277 = scmp.ne.s32.totalorder %s272, %s274
      %p278 = scmp.eq.s32.totalorder %s23, 0
      %p279 = por %p277, %p278
      %p280 = scmp.ne.s32.totalorder %s272, %s274
      %p281 = scmp.eq.s32.totalorder %s28, 1
      %p282 = por %p280, %p281
      %p283 = scmp.ne.s32.totalorder %s274, %s275
      %p284 = scmp.eq.s32.totalorder %s28, 0
      %p285 = por %p283, %p284
      %p286 = scmp.ne.s32.totalorder %s274, %s275
      %p287 = scmp.eq.s32.totalorder %s29, 1
      %p288 = por %p286, %p287
      %p290 = scmp.ne.s32.totalorder %s275, %s289
      %p291 = scmp.eq.s32.totalorder %s29, 0
      %p292 = por %p290, %p291
      %s294 = sadd.s32 %s293, 1
      %p297 = scmp.eq.s32.totalorder %s23, 1
      %p298 = scmp.ne.s32.totalorder %s293, %s295
      %p299 = scmp.eq.s32.totalorder %s23, 0
      %p300 = por %p298, %p299
      %p301 = scmp.ne.s32.totalorder %s293, %s295
      %p302 = scmp.eq.s32.totalorder %s28, 1
      %p303 = por %p301, %p302
      %p304 = scmp.ne.s32.totalorder %s295, %s296
      %p305 = scmp.eq.s32.totalorder %s28, 0
      %p306 = por %p304, %p305
      %p307 = scmp.ne.s32.totalorder %s295, %s296
      %p308 = scmp.eq.s32.totalorder %s29, 1
      %p309 = por %p307, %p308
      %p311 = scmp.ne.s32.totalorder %s296, %s310
      %p312 = scmp.eq.s32.totalorder %s29, 0
      %p313 = por %p311, %p312
      %s314 = ssub.s32 %s23, %s30
      %p315 = scmp.eq.s32.totalorder %s314, 0
      %s317 = sadd.s32 %s316, 1
      %s318 = scalar_select %p315, %s316, %s317
      %p321 = pneg %p315
      %p322 = scmp.eq.s32.totalorder %s23, 1
      %p323 = por %p321, %p322
      %p324 = scmp.ne.s32.totalorder %s316, %s319
      %p325 = scmp.eq.s32.totalorder %s23, 0
      %p326 = por %p324, %p325
      %p327 = scmp.ne.s32.totalorder %s316, %s319
      %p328 = scmp.eq.s32.totalorder %s28, 1
      %p329 = por %p327, %p328
      %p330 = scmp.ne.s32.totalorder %s319, %s320
      %p331 = scmp.eq.s32.totalorder %s28, 0
      %p332 = por %p330, %p331
      %p333 = scmp.ne.s32.totalorder %s319, %s320
      %p334 = scmp.eq.s32.totalorder %s29, 1
      %p335 = por %p333, %p334
      %p337 = scmp.ne.s32.totalorder %s320, %s336
      %p338 = scmp.eq.s32.totalorder %s29, 0
      %p339 = por %p337, %p338
      %s340 = ssub.s32 %s23, %s30
      %p341 = scmp.eq.s32.totalorder %s340, 0
      %s343 = sadd.s32 %s342, 1
      %s344 = scalar_select %p341, %s342, %s343
      %p347 = pneg %p341
      %p348 = scmp.eq.s32.totalorder %s23, 1
      %p349 = por %p347, %p348
      %p350 = scmp.ne.s32.totalorder %s342, %s345
      %p351 = scmp.eq.s32.totalorder %s23, 0
      %p352 = por %p350, %p351
      %p353 = scmp.ne.s32.totalorder %s342, %s345
      %p354 = scmp.eq.s32.totalorder %s28, 1
      %p355 = por %p353, %p354
      %p356 = scmp.ne.s32.totalorder %s345, %s346
      %p357 = scmp.eq.s32.totalorder %s28, 0
      %p358 = por %p356, %p357
      %p359 = scmp.ne.s32.totalorder %s345, %s346
      %p360 = scmp.eq.s32.totalorder %s29, 1
      %p361 = por %p359, %p360
      %p363 = scmp.ne.s32.totalorder %s346, %s362
      %p364 = scmp.eq.s32.totalorder %s29, 0
      %p365 = por %p363, %p364
      %p366 = scmp.le.s32.totalorder 1, %s23
      %p367 = scmp.lt.s32.totalorder %s23, 3
      %p368 = pnand %p366, %p367
      %p369 = pneg %p368
      // Predicated region
      $region9: #{_lambda_.15} parent=5 // pred_check
        _
      $region10: #{_lambda_.15} parent=5 // pred_check_branch
        %371 = sbr.rel (%p368) target = $region12
      $region11: #{_lambda_.15} parent=5 // pred_region
        %s372 = ssub.s32 %s23, 1
        // Predicated region
        $region13: #{_lambda_.15} parent=11 // pred_check
          %p373 = pneg %p96
        $region14: #{_lambda_.15} parent=11 // pred_check_branch
          %375 = sbr.rel (%p373) target = $region16
        $region15: #{_lambda_.15} parent=11 // pred_region
          _
        $region16: #{_lambda_.15} parent=11 // pred_fallthru
          _
        // Predicated region
        $region17: #{_lambda_.15} parent=11 // pred_check
          %p376 = pneg %p117
        $region18: #{_lambda_.15} parent=11 // pred_check_branch
          %378 = sbr.rel (%p376) target = $region20
        $region19: #{_lambda_.15} parent=11 // pred_region
          _
        $region20: #{_lambda_.15} parent=11 // pred_fallthru
          _
        // Predicated region
        $region21: #{_lambda_.15} parent=11 // pred_check
          %p379 = pneg %p138
        $region22: #{_lambda_.15} parent=11 // pred_check_branch
          %381 = sbr.rel (%p379) target = $region24
        $region23: #{_lambda_.15} parent=11 // pred_region
          _
        $region24: #{_lambda_.15} parent=11 // pred_fallthru
          _
        // Predicated region
        $region25: #{_lambda_.15} parent=11 // pred_check
          %p382 = pneg %p159
        $region26: #{_lambda_.15} parent=11 // pred_check_branch
          %384 = sbr.rel (%p382) target = $region28
        $region27: #{_lambda_.15} parent=11 // pred_region
          _
        $region28: #{_lambda_.15} parent=11 // pred_fallthru
          _
        // Predicated region
        $region29: #{_lambda_.15} parent=11 // pred_check
          %p385 = pneg %p180
        $region30: #{_lambda_.15} parent=11 // pred_check_branch
          %387 = sbr.rel (%p385) target = $region32
        $region31: #{_lambda_.15} parent=11 // pred_region
          _
        $region32: #{_lambda_.15} parent=11 // pred_fallthru
          _
        // Predicated region
        $region33: #{_lambda_.15} parent=11 // pred_check
          %p388 = pneg %p201
        $region34: #{_lambda_.15} parent=11 // pred_check_branch
          %390 = sbr.rel (%p388) target = $region36
        $region35: #{_lambda_.15} parent=11 // pred_region
          _
        $region36: #{_lambda_.15} parent=11 // pred_fallthru
          _
        // Predicated region
        $region37: #{_lambda_.15} parent=11 // pred_check
          %p391 = pneg %p222
        $region38: #{_lambda_.15} parent=11 // pred_check_branch
          %393 = sbr.rel (%p391) target = $region40
        $region39: #{_lambda_.15} parent=11 // pred_region
          _
        $region40: #{_lambda_.15} parent=11 // pred_fallthru
          _
        // Predicated region
        $region41: #{_lambda_.15} parent=11 // pred_check
          %p394 = pneg %p243
        $region42: #{_lambda_.15} parent=11 // pred_check_branch
          %396 = sbr.rel (%p394) target = $region44
        $region43: #{_lambda_.15} parent=11 // pred_region
          _
        $region44: #{_lambda_.15} parent=11 // pred_fallthru
          _
        // Predicated region
        $region45: #{_lambda_.15} parent=11 // pred_check
          %p397 = pneg %p264
        $region46: #{_lambda_.15} parent=11 // pred_check_branch
          %399 = sbr.rel (%p397) target = $region48
        $region47: #{_lambda_.15} parent=11 // pred_region
          _
        $region48: #{_lambda_.15} parent=11 // pred_fallthru
          _
        // Predicated region
        $region49: #{_lambda_.15} parent=11 // pred_check
          %p400 = pneg %p285
        $region50: #{_lambda_.15} parent=11 // pred_check_branch
          %402 = sbr.rel (%p400) target = $region52
        $region51: #{_lambda_.15} parent=11 // pred_region
          _
        $region52: #{_lambda_.15} parent=11 // pred_fallthru
          _
        // Predicated region
        $region53: #{_lambda_.15} parent=11 // pred_check
          %p403 = pneg %p306
        $region54: #{_lambda_.15} parent=11 // pred_check_branch
          %405 = sbr.rel (%p403) target = $region56
        $region55: #{_lambda_.15} parent=11 // pred_region
          _
        $region56: #{_lambda_.15} parent=11 // pred_fallthru
          _
      $region12: #{_lambda_.15} parent=5 // pred_fallthru
        _
      %p406 = scmp.lt.s32.totalorder %s23, 2
      // Predicated region
      $region57: #{_lambda_.15} parent=5 // pred_check
        %p407 = pneg %p406
      $region58: #{_lambda_.15} parent=5 // pred_check_branch
        %409 = sbr.rel (%p407) target = $region60
      $region59: #{_lambda_.15} parent=5 // pred_region
        // Predicated region
        $region61: #{_lambda_.15} parent=59 // pred_check
          %p410 = pneg %p43
        $region62: #{_lambda_.15} parent=59 // pred_check_branch
          %412 = sbr.rel (%p410) target = $region64
        $region63: #{_lambda_.15} parent=59 // pred_region
          %s413 = sand.u32 %s33, 1
          %s414 = sand.u32 %s33, 1
          %s415 = smul.addr %s414, 32
          %s416 = scalar_lea.vmem [#allocation2], %s415
          %s417 = smul.addr %s23, 8
          %s418 = scalar_lea.vmem %s1, %s417
          // Predicated region
          $region65: #{_lambda_.15} parent=63 // pred_check
            _
          $region66: #{_lambda_.15} parent=63 // pred_check_branch
            %420 = sbr.rel (0) target = $region68
          $region67: #{_lambda_.15} parent=63 // pred_region
            // Predicated region
            $region69: #{_lambda_.15} parent=67 // pred_check
              _
            $region70: #{_lambda_.15} parent=67 // pred_check_branch
              %422 = sbr.rel (0) target = $region72
            $region71: #{_lambda_.15} parent=67 // pred_region
              // Predicated region
              $region84: #{_lambda_.15} parent=71 // pred_check
                _
              $region85: #{_lambda_.15} parent=71 // pred_check_branch
                %444 = sbr.rel (0) target = $region87
              $region86: #{_lambda_.15} parent=71 // pred_region
                loop: start=0, step=1, limit=1
                $region88: #{_lambda_.15} parent=86 // loop_pre_header
                  _
                $region89: #{_lambda_.15} parent=86 // loop_header
                  %s446 = sphi 0, %s450
                  %p447 = scmp.ge.s32.totalorder %s446, 1
                  %s451 = sphi %s418, %s418
                  %s452 = sphi %s416, %s416
                $region90: #{_lambda_.15} parent=86 // loop_header_branch
                  %449 = sbr.rel (%p447) target = $region94
                $region91: #{_lambda_.15} parent=86 // loop_body
                  %v453 = vld [vmem:[%s451] sm:$0xff]
                  %454 = vst [vmem:[%s452] sm:$0xff] %v453
                  %v455 = vld [vmem:[%s451 + $0x10] sm:$0xff]
                  %456 = vst [vmem:[%s452 + $0x8] sm:$0xff] %v455
                  %v457 = vld [vmem:[%s451 + $0x20] sm:$0xff]
                  %458 = vst [vmem:[%s452 + $0x10] sm:$0xff] %v457
                  %v459 = vld [vmem:[%s451 + $0x30] sm:$0xff]
                  %460 = vst [vmem:[%s452 + $0x18] sm:$0xff] %v459
                $region92: #{_lambda_.15} parent=86 // loop_footer
                  %s450 = sadd.s32 1, %s446
                $region93: #{_lambda_.15} parent=86 // loop_footer_branch
                  %445 = sbr.rel target = $region89
                $region94: #{_lambda_.15} parent=86 // loop_exit
                  _
              $region87: #{_lambda_.15} parent=71 // pred_fallthru
                _
              // Predicated region
              $region95: #{_lambda_.15} parent=71 // pred_check
                _
              $region96: #{_lambda_.15} parent=71 // pred_check_branch
                %462 = sbr.rel target = $region98
              $region97: #{_lambda_.15} parent=71 // pred_region
                _
              $region98: #{_lambda_.15} parent=71 // pred_fallthru
                _
            $region72: #{_lambda_.15} parent=67 // pred_fallthru
              _
            // Predicated region
            $region73: #{_lambda_.15} parent=67 // pred_check
              _
            $region74: #{_lambda_.15} parent=67 // pred_check_branch
              %424 = sbr.rel target = $region76
            $region75: #{_lambda_.15} parent=67 // pred_region
              %s426 = ssub.s32 256, 1
              loop: start=0, step=1, limit=1
              $region77: #{_lambda_.15} parent=75 // loop_pre_header
                _
              $region78: #{_lambda_.15} parent=75 // loop_header
                %s428 = sphi 0, %s432
                %p429 = scmp.ge.s32.totalorder %s428, 1
                %s433 = sphi %s418, %s418
                %s434 = sphi %s416, %s416
              $region79: #{_lambda_.15} parent=75 // loop_header_branch
                %431 = sbr.rel (%p429) target = $region83
              $region80: #{_lambda_.15} parent=75 // loop_body
                %v435 = vld [vmem:[%s433] sm:%s426]
                %436 = vst [vmem:[%s434] sm:%s426] %v435
                %v437 = vld [vmem:[%s433 + $0x10] sm:%s426]
                %438 = vst [vmem:[%s434 + $0x8] sm:%s426] %v437
                %v439 = vld [vmem:[%s433 + $0x20] sm:%s426]
                %440 = vst [vmem:[%s434 + $0x10] sm:%s426] %v439
                %v441 = vld [vmem:[%s433 + $0x30] sm:%s426]
                %442 = vst [vmem:[%s434 + $0x18] sm:%s426] %v441
              $region81: #{_lambda_.15} parent=75 // loop_footer
                %s432 = sadd.s32 1, %s428
              $region82: #{_lambda_.15} parent=75 // loop_footer_branch
                %427 = sbr.rel target = $region78
              $region83: #{_lambda_.15} parent=75 // loop_exit
                _
            $region76: #{_lambda_.15} parent=67 // pred_fallthru
              _
          $region68: #{_lambda_.15} parent=63 // pred_fallthru
            _
          %463 = vnop
        $region64: #{_lambda_.15} parent=59 // pred_fallthru
          _
        // Predicated region
        $region99: #{_lambda_.15} parent=59 // pred_check
          %p464 = pneg %p69
        $region100: #{_lambda_.15} parent=59 // pred_check_branch
          %466 = sbr.rel (%p464) target = $region102
        $region101: #{_lambda_.15} parent=59 // pred_region
          %s467 = sand.u32 %s59, 1
          %s468 = sand.u32 %s59, 1
          %s469 = smul.addr %s468, 32
          %s470 = scalar_lea.vmem [#allocation3], %s469
          %s471 = smul.addr %s23, 8
          %s472 = scalar_lea.vmem %s2, %s471
          // Predicated region
          $region103: #{_lambda_.15} parent=101 // pred_check
            _
          $region104: #{_lambda_.15} parent=101 // pred_check_branch
            %474 = sbr.rel (0) target = $region106
          $region105: #{_lambda_.15} parent=101 // pred_region
            // Predicated region
            $region107: #{_lambda_.15} parent=105 // pred_check
              _
            $region108: #{_lambda_.15} parent=105 // pred_check_branch
              %476 = sbr.rel (0) target = $region110
            $region109: #{_lambda_.15} parent=105 // pred_region
              // Predicated region
              $region122: #{_lambda_.15} parent=109 // pred_check
                _
              $region123: #{_lambda_.15} parent=109 // pred_check_branch
                %498 = sbr.rel (0) target = $region125
              $region124: #{_lambda_.15} parent=109 // pred_region
                loop: start=0, step=1, limit=1
                $region126: #{_lambda_.15} parent=124 // loop_pre_header
                  _
                $region127: #{_lambda_.15} parent=124 // loop_header
                  %s500 = sphi 0, %s504
                  %p501 = scmp.ge.s32.totalorder %s500, 1
                  %s505 = sphi %s472, %s472
                  %s506 = sphi %s470, %s470
                $region128: #{_lambda_.15} parent=124 // loop_header_branch
                  %503 = sbr.rel (%p501) target = $region132
                $region129: #{_lambda_.15} parent=124 // loop_body
                  %v507 = vld [vmem:[%s505] sm:$0xff]
                  %508 = vst [vmem:[%s506] sm:$0xff] %v507
                  %v509 = vld [vmem:[%s505 + $0x10] sm:$0xff]
                  %510 = vst [vmem:[%s506 + $0x8] sm:$0xff] %v509
                  %v511 = vld [vmem:[%s505 + $0x20] sm:$0xff]
                  %512 = vst [vmem:[%s506 + $0x10] sm:$0xff] %v511
                  %v513 = vld [vmem:[%s505 + $0x30] sm:$0xff]
                  %514 = vst [vmem:[%s506 + $0x18] sm:$0xff] %v513
                $region130: #{_lambda_.15} parent=124 // loop_footer
                  %s504 = sadd.s32 1, %s500
                $region131: #{_lambda_.15} parent=124 // loop_footer_branch
                  %499 = sbr.rel target = $region127
                $region132: #{_lambda_.15} parent=124 // loop_exit
                  _
              $region125: #{_lambda_.15} parent=109 // pred_fallthru
                _
              // Predicated region
              $region133: #{_lambda_.15} parent=109 // pred_check
                _
              $region134: #{_lambda_.15} parent=109 // pred_check_branch
                %516 = sbr.rel target = $region136
              $region135: #{_lambda_.15} parent=109 // pred_region
                _
              $region136: #{_lambda_.15} parent=109 // pred_fallthru
                _
            $region110: #{_lambda_.15} parent=105 // pred_fallthru
              _
            // Predicated region
            $region111: #{_lambda_.15} parent=105 // pred_check
              _
            $region112: #{_lambda_.15} parent=105 // pred_check_branch
              %478 = sbr.rel target = $region114
            $region113: #{_lambda_.15} parent=105 // pred_region
              %s480 = ssub.s32 256, 1
              loop: start=0, step=1, limit=1
              $region115: #{_lambda_.15} parent=113 // loop_pre_header
                _
              $region116: #{_lambda_.15} parent=113 // loop_header
                %s482 = sphi 0, %s486
                %p483 = scmp.ge.s32.totalorder %s482, 1
                %s487 = sphi %s472, %s472
                %s488 = sphi %s470, %s470
              $region117: #{_lambda_.15} parent=113 // loop_header_branch
                %485 = sbr.rel (%p483) target = $region121
              $region118: #{_lambda_.15} parent=113 // loop_body
                %v489 = vld [vmem:[%s487] sm:%s480]
                %490 = vst [vmem:[%s488] sm:%s480] %v489
                %v491 = vld [vmem:[%s487 + $0x10] sm:%s480]
                %492 = vst [vmem:[%s488 + $0x8] sm:%s480] %v491
                %v493 = vld [vmem:[%s487 + $0x20] sm:%s480]
                %494 = vst [vmem:[%s488 + $0x10] sm:%s480] %v493
                %v495 = vld [vmem:[%s487 + $0x30] sm:%s480]
                %496 = vst [vmem:[%s488 + $0x18] sm:%s480] %v495
              $region119: #{_lambda_.15} parent=113 // loop_footer
                %s486 = sadd.s32 1, %s482
              $region120: #{_lambda_.15} parent=113 // loop_footer_branch
                %481 = sbr.rel target = $region116
              $region121: #{_lambda_.15} parent=113 // loop_exit
                _
            $region114: #{_lambda_.15} parent=105 // pred_fallthru
              _
          $region106: #{_lambda_.15} parent=101 // pred_fallthru
            _
          %517 = vnop
        $region102: #{_lambda_.15} parent=59 // pred_fallthru
          _
      $region60: #{_lambda_.15} parent=5 // pred_fallthru
        _
      %p518 = scmp.le.s32.totalorder 1, %s23
      %p519 = scmp.lt.s32.totalorder %s23, 3
      %p520 = pnand %p518, %p519
      %p521 = pneg %p520
      // Predicated region
      $region137: #{_lambda_.15} parent=5 // pred_check
        _
      $region138: #{_lambda_.15} parent=5 // pred_check_branch
        %523 = sbr.rel (%p520) target = $region140
      $region139: #{_lambda_.15} parent=5 // pred_region
        %s524 = ssub.s32 %s23, 1
        %s525 = sand.u32 %s36, 1
        %s526 = sand.u32 %s36, 1
        %s527 = smul.addr %s526, 32
        %s528 = scalar_lea.vmem [#allocation2], %s527
        // Predicated region
        $region141: #{_lambda_.15} parent=139 // pred_check
          %p529 = pneg %p49
        $region142: #{_lambda_.15} parent=139 // pred_check_branch
          %531 = sbr.rel (%p529) target = $region144
        $region143: #{_lambda_.15} parent=139 // pred_region
          _
        $region144: #{_lambda_.15} parent=139 // pred_fallthru
          _
        %s532 = sand.u32 %s62, 1
        %s533 = sand.u32 %s62, 1
        %s534 = smul.addr %s533, 32
        %s535 = scalar_lea.vmem [#allocation3], %s534
        // Predicated region
        $region145: #{_lambda_.15} parent=139 // pred_check
          %p536 = pneg %p75
        $region146: #{_lambda_.15} parent=139 // pred_check_branch
          %538 = sbr.rel (%p536) target = $region148
        $region147: #{_lambda_.15} parent=139 // pred_region
          _
        $region148: #{_lambda_.15} parent=139 // pred_fallthru
          _
        %s539 = sand.u32 %s36, 1
        %s540 = sand.u32 %s36, 1
        %s541 = smul.addr %s540, 32
        %s542 = scalar_lea.vmem [#allocation2], %s541
        %p543 = pneg %p49
        %p544 = pneg %p46
        %s545 = sand.u32 %s62, 1
        %s546 = sand.u32 %s62, 1
        %s547 = smul.addr %s546, 32
        %s548 = scalar_lea.vmem [#allocation3], %s547
        %p549 = pneg %p75
        %p550 = pneg %p72
        %p551 = pneg %p96
        %p552 = pneg %p93
        %p553 = pneg %p117
        %p554 = pneg %p114
        %p555 = pneg %p138
        %p556 = pneg %p135
        %p557 = pneg %p159
        %p558 = pneg %p156
        %p559 = pneg %p180
        %p560 = pneg %p177
        %p561 = pneg %p201
        %p562 = pneg %p198
        %p563 = pneg %p222
        %p564 = pneg %p219
        %p565 = pneg %p243
        %p566 = pneg %p240
        %p567 = pneg %p264
        %p568 = pneg %p261
        %p569 = pneg %p285
        %p570 = pneg %p282
        %p571 = pneg %p306
        %p572 = pneg %p303
        %p573 = pneg %p332
        %p574 = pneg %p329
        %s575 = sand.u32 %s319, 1
        %s576 = sand.u32 %s319, 1
        %s577 = smul.addr %s576, 8
        %s578 = scalar_lea.vmem [#allocation4], %s577
        %p579 = pneg %p358
        %p580 = pneg %p355
        %p581 = scmp.lt.s32.totalorder %s28, 1
        %s582 = scalar_select %p581, %s28, 1
        %s583 = smul.addr %s582, 8
        %s584 = scalar_lea.vmem %s15, %s583
        %p585 = scmp.lt.s32.totalorder %s28, 1
        %s586 = scalar_select %p585, %s28, 1
        %s587 = smul.addr %s586, 8
        %s588 = scalar_lea.vmem %s15, %s587
        %v590 = vld [vmem:[%s3] sm:$0x1]
        %v591 = vld [vmem:[%s528] sm:$0xff]
        %v593 = vperm.slane %v590, 0
        %v595 = vmul.f32 %v591, %v593
        %vm596 = vcmask 130048
        %v597 = vsel %vm596, %v595, 0.0
        %598 = vadd.xlane.f32.xlu0 %v597
        %v599 = vpop.xlane.xlu0 %598
        %v600 = vmul.f32 %v599, 0.25
        %s601 = scalar_lea.vmem %s528, 8 [#allocation2]
        %v602 = vld [vmem:[%s601] sm:$0xff]
        %v603 = vmul.f32 %v602, %v593
        %v604 = vsel %vm596, %v603, 0.0
        %605 = vadd.xlane.f32.xlu0 %v604
        %v606 = vpop.xlane.xlu0 %605
        %v607 = vmul.f32 %v606, 0.25
        %s608 = scalar_lea.vmem %s528, 16 [#allocation2]
        %v609 = vld [vmem:[%s608] sm:$0xff]
        %v610 = vmul.f32 %v609, %v593
        %v611 = vsel %vm596, %v610, 0.0
        %612 = vadd.xlane.f32.xlu0 %v611
        %v613 = vpop.xlane.xlu0 %612
        %v614 = vmul.f32 %v613, 0.25
        %s615 = scalar_lea.vmem %s528, 24 [#allocation2]
        %v616 = vld [vmem:[%s615] sm:$0xff]
        %v617 = vmul.f32 %v616, %v593
        %v618 = vsel %vm596, %v617, 0.0
        %619 = vadd.xlane.f32.xlu0 %v618
        %v620 = vpop.xlane.xlu0 %619
        %v621 = vmul.f32 %v620, 0.25
        %v622 = vmax.f32 %v600, %v607
        %v623 = vmax.f32 %v622, %v614
        %v624 = vmax.f32 %v623, %v621
        %v625 = vsub.f32 %v600, %v624
        %v626 = vmul.f32 %v625, 1.442695
        %v627 = vpow.pop %v626
        %v628 = vsub.f32 %v607, %v624
        %v629 = vmul.f32 %v628, 1.442695
        %v630 = vpow.pop %v629
        %v631 = vsub.f32 %v614, %v624
        %v632 = vmul.f32 %v631, 1.442695
        %v633 = vpow.pop %v632
        %v634 = vsub.f32 %v621, %v624
        %v635 = vmul.f32 %v634, 1.442695
        %v636 = vpow.pop %v635
        %v637 = vadd.f32 %v627, %v630
        %v638 = vadd.f32 %v637, %v633
        %v639 = vadd.f32 %v638, %v636
        %v640 = vrcp.pop %v639
        %v641 = vmul.f32 %v627, %v640
        %v642 = vld [vmem:[%s535] sm:$0xff]
        %v643 = vmul.f32 %v641, %v642
        %v644 = vmul.f32 %v630, %v640
        %s645 = scalar_lea.vmem %s535, 8 [#allocation3]
        %v646 = vld [vmem:[%s645] sm:$0xff]
        %v647 = vmul.f32 %v644, %v646
        %v648 = vadd.f32 %v643, %v647
        %v649 = vmul.f32 %v633, %v640
        %s650 = scalar_lea.vmem %s535, 16 [#allocation3]
        %v651 = vld [vmem:[%s650] sm:$0xff]
        %v652 = vmul.f32 %v649, %v651
        %v653 = vadd.f32 %v648, %v652
        %v654 = vmul.f32 %v636, %v640
        %s655 = scalar_lea.vmem %s535, 24 [#allocation3]
        %v656 = vld [vmem:[%s655] sm:$0xff]
        %v657 = vmul.f32 %v654, %v656
        %v658 = vadd.f32 %v653, %v657
        %v659 = vpack.c.bf16 %v658, %v658
        %v660 = vld [vmem:[%s4] sm:$0xf]
        %v661 = vld [vmem:[%s4 + $0x4] sm:$0xf]
        %v662 = vld [vmem:[%s4 + $0x8] sm:$0xf]
        %v663 = vld [vmem:[%s4 + $0xc] sm:$0xf]
        %v664 = vld [vmem:[%s5] sm:$0x1]
        %v666 = vperm.slane %v664, 0
        %v672 = vunpack.c.l.b16 %v660
        %v673 = vunpack.c.l.b16 %v661
        %v674 = vunpack.c.l.b16 %v662
        %v675 = vunpack.c.l.b16 %v663
        %v676 = vpack.c.b16 %v673, %v672
        %v677 = vpack.c.b16 %v675, %v674
        %vm680 = vcmask 261120
        %v682 = vsel %vm680, %v659, 0
        %684 = vmatpush.bf16.msra.mxu0 0
        %685 = vmatpush.bf16.msra.mxu0 0
        %686 = vmatpush.bf16.msra.mxu0 0
        %687 = vmatpush.bf16.msra.mxu0 0
        %688 = vmatpush.bf16.msra.mxu0 0
        %689 = vmatpush.bf16.msra.mxu0 0
        %690 = vmatpush.bf16.msra.mxu0 %v677
        %691 = vmatpush.bf16.msra.mxu0 %v676
        %692 = vmatmul.bf16.gmra.mxu0 %v682
        %v693 = vpop.f32.mrf.mxu0
        %v694 = vadd.f32 %v666, %v693
        %v695 = vpop.f32.mrf.mxu0
        %696 = vdwg.mxu0
        %v697 = vlaneseq
        %v698 = vand.u32 %v697, 127
        %vm699 = vcmp.lt.s32.totalorder %v698, 5
        %v700 = vsel %vm699, 0.0, -1e+30
        %v701 = vpack.c.bf16 %v694, %v694
        %703 = vrot.lane.b32.xlu0 %v701, 96
        %v704 = vpop.permute.xlu0 %703
        %vm705 = vcmask 64512
        %v707 = vsel %vm705, %v701, 0
        %v710 = vsel %vm705, %v704, 0
        %712 = vmatpush.bf16.xpose.msra.mxu0 0
        %713 = vmatpush.bf16.xpose.msra.mxu0 0
        %714 = vmatpush.bf16.xpose.msra.mxu0 0
        %715 = vmatpush.bf16.xpose.msra.mxu0 0
        %716 = vmatpush.bf16.xpose.msra.mxu0 0
        %717 = vmatpush.bf16.xpose.msra.mxu0 0
        %718 = vmatpush.bf16.xpose.msra.mxu0 0
        %719 = vmatpush.bf16.xpose.msra.mxu0 %v710
        %720 = vmatmul.bf16.gmra.mxu0 %v707
        %v721 = vpop.f32.mrf.mxu0
        %v722 = vadd.f32 0.0, %v721
        %v723 = vpop.f32.mrf.mxu0
        %724 = vdwg.mxu0
        %v725 = vmul.f32 %v722, 0.35355338
        %v726 = vadd.f32 %v725, %v700
        %v727 = vsel %vm705, %v726, -inf
        %728 = vmax.xlane.f32.xlu0 %v727
        %v729 = vpop.xlane.xlu0 %728
        %v730 = vsub.f32 %v726, %v729
        %v731 = vmul.f32 %v730, 1.442695
        %v732 = vpow.pop %v731
        %v733 = vsel %vm705, %v732, 0.0
        %734 = vadd.xlane.f32.xlu0 %v733
        %v735 = vpop.xlane.xlu0 %734
        %v736 = vrcp.pop %v735
        %v737 = vmul.f32 %v732, %v736
        %v738 = vpack.c.bf16 %v737, %v737
        %739 = vrot.lane.b32.xlu0 %v701, 64
        %v740 = vpop.permute.xlu0 %739
        %v742 = vsel %vm705, %v738, 0
        %vm744 = vcmask 1043456
        %v746 = vsel %vm744, %v740, 0
        %748 = vmatpush.bf16.msra.mxu0 0
        %749 = vmatpush.bf16.msra.mxu0 0
        %750 = vmatpush.bf16.msra.mxu0 0
        %751 = vmatpush.bf16.msra.mxu0 0
        %752 = vmatpush.bf16.msra.mxu0 0
        %753 = vmatpush.bf16.msra.mxu0 0
        %754 = vmatpush.bf16.msra.mxu0 0
        %755 = vmatpush.bf16.msra.mxu0 %v746
        %756 = vmatmul.bf16.gmra.mxu0 %v742
        %v757 = vpop.f32.mrf.mxu0
        %v758 = vadd.f32 0.0, %v757
        %v759 = vpop.f32.mrf.mxu0
        %760 = vdwg.mxu0
        %761 = vrot.lane.b32.xlu0 %v701, 120
        %v762 = vpop.permute.xlu0 %761
        %763 = vrot.lane.b32.xlu0 %v701, 88
        %v764 = vpop.permute.xlu0 %763
        %v766 = vsel %vm705, %v762, 0
        %v769 = vsel %vm705, %v764, 0
        %771 = vmatpush.bf16.xpose.msra.mxu0 0
        %772 = vmatpush.bf16.xpose.msra.mxu0 0
        %773 = vmatpush.bf16.xpose.msra.mxu0 0
        %774 = vmatpush.bf16.xpose.msra.mxu0 0
        %775 = vmatpush.bf16.xpose.msra.mxu0 0
        %776 = vmatpush.bf16.xpose.msra.mxu0 0
        %777 = vmatpush.bf16.xpose.msra.mxu0 0
        %778 = vmatpush.bf16.xpose.msra.mxu0 %v769
        %779 = vmatmul.bf16.gmra.mxu0 %v766
        %v780 = vpop.f32.mrf.mxu0
        %v781 = vadd.f32 0.0, %v780
        %v782 = vpop.f32.mrf.mxu0
        %783 = vdwg.mxu0
        %v784 = vmul.f32 %v781, 0.35355338
        %v785 = vadd.f32 %v784, %v700
        %v786 = vsel %vm705, %v785, -inf
        %787 = vmax.xlane.f32.xlu0 %v786
        %v788 = vpop.xlane.xlu0 %787
        %v789 = vsub.f32 %v785, %v788
        %v790 = vmul.f32 %v789, 1.442695
        %v791 = vpow.pop %v790
        %v792 = vsel %vm705, %v791, 0.0
        %793 = vadd.xlane.f32.xlu0 %v792
        %v794 = vpop.xlane.xlu0 %793
        %v795 = vrcp.pop %v794
        %v796 = vmul.f32 %v791, %v795
        %v797 = vpack.c.bf16 %v796, %v796
        %798 = vrot.lane.b32.xlu0 %v701, 56
        %v799 = vpop.permute.xlu0 %798
        %v801 = vsel %vm705, %v797, 0
        %v804 = vsel %vm744, %v799, 0
        %806 = vmatpush.bf16.msra.mxu0 0
        %807 = vmatpush.bf16.msra.mxu0 0
        %808 = vmatpush.bf16.msra.mxu0 0
        %809 = vmatpush.bf16.msra.mxu0 0
        %810 = vmatpush.bf16.msra.mxu0 0
        %811 = vmatpush.bf16.msra.mxu0 0
        %812 = vmatpush.bf16.msra.mxu0 0
        %813 = vmatpush.bf16.msra.mxu0 %v804
        %814 = vmatmul.bf16.gmra.mxu0 %v801
        %v815 = vpop.f32.mrf.mxu0
        %v816 = vadd.f32 0.0, %v815
        %v817 = vpop.f32.mrf.mxu0
        %818 = vdwg.mxu0
        %819 = vrot.lane.b32.xlu0 %v701, 112
        %v820 = vpop.permute.xlu0 %819
        %821 = vrot.lane.b32.xlu0 %v701, 80
        %v822 = vpop.permute.xlu0 %821
        %v824 = vsel %vm705, %v820, 0
        %v827 = vsel %vm705, %v822, 0
        %829 = vmatpush.bf16.xpose.msra.mxu0 0
        %830 = vmatpush.bf16.xpose.msra.mxu0 0
        %831 = vmatpush.bf16.xpose.msra.mxu0 0
        %832 = vmatpush.bf16.xpose.msra.mxu0 0
        %833 = vmatpush.bf16.xpose.msra.mxu0 0
        %834 = vmatpush.bf16.xpose.msra.mxu0 0
        %835 = vmatpush.bf16.xpose.msra.mxu0 0
        %836 = vmatpush.bf16.xpose.msra.mxu0 %v827
        %837 = vmatmul.bf16.gmra.mxu0 %v824
        %v838 = vpop.f32.mrf.mxu0
        %v839 = vadd.f32 0.0, %v838
        %v840 = vpop.f32.mrf.mxu0
        %841 = vdwg.mxu0
        %v842 = vmul.f32 %v839, 0.35355338
        %v843 = vadd.f32 %v842, %v700
        %v844 = vsel %vm705, %v843, -inf
        %845 = vmax.xlane.f32.xlu0 %v844
        %v846 = vpop.xlane.xlu0 %845
        %v847 = vsub.f32 %v843, %v846
        %v848 = vmul.f32 %v847, 1.442695
        %v849 = vpow.pop %v848
        %v850 = vsel %vm705, %v849, 0.0
        %851 = vadd.xlane.f32.xlu0 %v850
        %v852 = vpop.xlane.xlu0 %851
        %v853 = vrcp.pop %v852
        %v854 = vmul.f32 %v849, %v853
        %v855 = vpack.c.bf16 %v854, %v854
        %856 = vrot.lane.b32.xlu0 %v701, 48
        %v857 = vpop.permute.xlu0 %856
        %v859 = vsel %vm705, %v855, 0
        %v862 = vsel %vm744, %v857, 0
        %864 = vmatpush.bf16.msra.mxu0 0
        %865 = vmatpush.bf16.msra.mxu0 0
        %866 = vmatpush.bf16.msra.mxu0 0
        %867 = vmatpush.bf16.msra.mxu0 0
        %868 = vmatpush.bf16.msra.mxu0 0
        %869 = vmatpush.bf16.msra.mxu0 0
        %870 = vmatpush.bf16.msra.mxu0 0
        %871 = vmatpush.bf16.msra.mxu0 %v862
        %872 = vmatmul.bf16.gmra.mxu0 %v859
        %v873 = vpop.f32.mrf.mxu0
        %v874 = vadd.f32 0.0, %v873
        %v875 = vpop.f32.mrf.mxu0
        %876 = vdwg.mxu0
        %877 = vrot.lane.b32.xlu0 %v701, 104
        %v878 = vpop.permute.xlu0 %877
        %879 = vrot.lane.b32.xlu0 %v701, 72
        %v880 = vpop.permute.xlu0 %879
        %v882 = vsel %vm705, %v878, 0
        %v885 = vsel %vm705, %v880, 0
        %887 = vmatpush.bf16.xpose.msra.mxu0 0
        %888 = vmatpush.bf16.xpose.msra.mxu0 0
        %889 = vmatpush.bf16.xpose.msra.mxu0 0
        %890 = vmatpush.bf16.xpose.msra.mxu0 0
        %891 = vmatpush.bf16.xpose.msra.mxu0 0
        %892 = vmatpush.bf16.xpose.msra.mxu0 0
        %893 = vmatpush.bf16.xpose.msra.mxu0 0
        %894 = vmatpush.bf16.xpose.msra.mxu0 %v885
        %895 = vmatmul.bf16.gmra.mxu0 %v882
        %v896 = vpop.f32.mrf.mxu0
        %v897 = vadd.f32 0.0, %v896
        %v898 = vpop.f32.mrf.mxu0
        %899 = vdwg.mxu0
        %v900 = vmul.f32 %v897, 0.35355338
        %v901 = vadd.f32 %v900, %v700
        %v902 = vsel %vm705, %v901, -inf
        %903 = vmax.xlane.f32.xlu0 %v902
        %v904 = vpop.xlane.xlu0 %903
        %v905 = vsub.f32 %v901, %v904
        %v906 = vmul.f32 %v905, 1.442695
        %v907 = vpow.pop %v906
        %v908 = vsel %vm705, %v907, 0.0
        %909 = vadd.xlane.f32.xlu0 %v908
        %v910 = vpop.xlane.xlu0 %909
        %v911 = vrcp.pop %v910
        %v912 = vmul.f32 %v907, %v911
        %v913 = vpack.c.bf16 %v912, %v912
        %914 = vrot.lane.b32.xlu0 %v701, 40
        %v915 = vpop.permute.xlu0 %914
        %v917 = vsel %vm705, %v913, 0
        %v920 = vsel %vm744, %v915, 0
        %922 = vmatpush.bf16.msra.mxu0 0
        %923 = vmatpush.bf16.msra.mxu0 0
        %924 = vmatpush.bf16.msra.mxu0 0
        %925 = vmatpush.bf16.msra.mxu0 0
        %926 = vmatpush.bf16.msra.mxu0 0
        %927 = vmatpush.bf16.msra.mxu0 0
        %928 = vmatpush.bf16.msra.mxu0 0
        %929 = vmatpush.bf16.msra.mxu0 %v920
        %930 = vmatmul.bf16.gmra.mxu0 %v917
        %v931 = vpop.f32.mrf.mxu0
        %v932 = vadd.f32 0.0, %v931
        %v933 = vpop.f32.mrf.mxu0
        %934 = vdwg.mxu0
        %936 = vrot.lane.b32.xlu0 %v816, 8
        %v937 = vpop.permute.xlu0 %936
        %940 = vrot.lane.b32.xlu0 %v874, 16
        %v941 = vpop.permute.xlu0 %940
        %944 = vrot.lane.b32.xlu0 %v932, 24
        %v945 = vpop.permute.xlu0 %944
        %v947 = vsel %vm705, %v758, %v937
        %v948 = vsel %vm596, %v947, %v941
        %vm949 = vcmask 195584
        %v950 = vsel %vm949, %v948, %v945
        %v951 = vpack.c.bf16 %v950, %v950
        %v952 = vld [vmem:[%s6] sm:$0xf]
        %v953 = vld [vmem:[%s6 + $0x4] sm:$0xf]
        %v954 = vld [vmem:[%s6 + $0x8] sm:$0xf]
        %v955 = vld [vmem:[%s6 + $0xc] sm:$0xf]
        %v956 = vld [vmem:[%s7] sm:$0x1]
        %v958 = vperm.slane %v956, 0
        %v964 = vunpack.c.l.b16 %v952
        %v965 = vunpack.c.l.b16 %v953
        %v966 = vunpack.c.l.b16 %v954
        %v967 = vunpack.c.l.b16 %v955
        %v968 = vpack.c.b16 %v965, %v964
        %v969 = vpack.c.b16 %v967, %v966
        %v973 = vsel %vm680, %v951, 0
        %975 = vmatpush.bf16.msra.mxu0 0
        %976 = vmatpush.bf16.msra.mxu0 0
        %977 = vmatpush.bf16.msra.mxu0 0
        %978 = vmatpush.bf16.msra.mxu0 0
        %979 = vmatpush.bf16.msra.mxu0 0
        %980 = vmatpush.bf16.msra.mxu0 0
        %981 = vmatpush.bf16.msra.mxu0 %v969
        %982 = vmatpush.bf16.msra.mxu0 %v968
        %983 = vmatmul.bf16.gmra.mxu0 %v973
        %v984 = vpop.f32.mrf.mxu0
        %v985 = vadd.f32 %v958, %v984
        %v986 = vpop.f32.mrf.mxu0
        %987 = vdwg.mxu0
        %vm988 = vcmp.ge.f32.partialorder %v985, 0.0
        %v989 = vld [vmem:[%s8] sm:$0x1]
        %v991 = vperm.slane %v989, 0
        %v993 = vmul.f32 %v985, %v991
        %v994 = vsel %vm988, %v985, %v993
        %v995 = vld [vmem:[%s11] sm:$0x1]
        %v997 = vperm.slane %v995, 0
        %v999 = vmul.f32 %v985, %v997
        %v1000 = vsel %vm988, %v985, %v999
        %v1001 = vpack.c.bf16 %v994, %v994
        %v1002 = vld [vmem:[%s9] sm:$0xf]
        %v1003 = vld [vmem:[%s9 + $0x4] sm:$0xf]
        %v1004 = vld [vmem:[%s9 + $0x8] sm:$0xf]
        %v1005 = vld [vmem:[%s9 + $0xc] sm:$0xf]
        %v1006 = vld [vmem:[%s10] sm:$0x1]
        %v1008 = vperm.slane %v1006, 0
        %v1014 = vunpack.c.l.b16 %v1002
        %v1015 = vunpack.c.l.b16 %v1003
        %v1016 = vunpack.c.l.b16 %v1004
        %v1017 = vunpack.c.l.b16 %v1005
        %v1018 = vpack.c.b16 %v1015, %v1014
        %v1019 = vpack.c.b16 %v1017, %v1016
        %v1023 = vsel %vm680, %v1001, 0
        %1025 = vmatpush.bf16.msra.mxu0 0
        %1026 = vmatpush.bf16.msra.mxu0 0
        %1027 = vmatpush.bf16.msra.mxu0 0
        %1028 = vmatpush.bf16.msra.mxu0 0
        %1029 = vmatpush.bf16.msra.mxu0 0
        %1030 = vmatpush.bf16.msra.mxu0 0
        %1031 = vmatpush.bf16.msra.mxu0 %v1019
        %1032 = vmatpush.bf16.msra.mxu0 %v1018
        %1033 = vmatmul.bf16.gmra.mxu0 %v1023
        %v1034 = vpop.f32.mrf.mxu0
        %v1035 = vadd.f32 %v1008, %v1034
        %v1036 = vpop.f32.mrf.mxu0
        %1037 = vdwg.mxu0
        %1038 = vst.msk [vmem:[%s578] sm:$0xff] %vm596, %v1035
        %v1039 = vpack.c.bf16 %v1000, %v1000
        %v1040 = vld [vmem:[%s12] sm:$0xf]
        %v1041 = vld [vmem:[%s12 + $0x4] sm:$0xf]
        %v1042 = vld [vmem:[%s12 + $0x8] sm:$0xf]
        %v1043 = vld [vmem:[%s12 + $0xc] sm:$0xf]
        %v1044 = vld [vmem:[%s13] sm:$0x1]
        %v1046 = vperm.slane %v1044, 0
        %v1052 = vunpack.c.l.b16 %v1040
        %v1053 = vunpack.c.l.b16 %v1041
        %v1054 = vunpack.c.l.b16 %v1042
        %v1055 = vunpack.c.l.b16 %v1043
        %v1056 = vpack.c.b16 %v1053, %v1052
        %v1057 = vpack.c.b16 %v1055, %v1054
        %v1061 = vsel %vm680, %v1039, 0
        %1063 = vmatpush.bf16.msra.mxu0 0
        %1064 = vmatpush.bf16.msra.mxu0 0
        %1065 = vmatpush.bf16.msra.mxu0 0
        %1066 = vmatpush.bf16.msra.mxu0 0
        %1067 = vmatpush.bf16.msra.mxu0 0
        %1068 = vmatpush.bf16.msra.mxu0 0
        %1069 = vmatpush.bf16.msra.mxu0 %v1057
        %1070 = vmatpush.bf16.msra.mxu0 %v1056
        %1071 = vmatmul.bf16.gmra.mxu0 %v1061
        %v1072 = vpop.f32.mrf.mxu0
        %v1073 = vadd.f32 %v1046, %v1072
        %v1074 = vpop.f32.mrf.mxu0
        %1075 = vdwg.mxu0
        %1076 = vst.msk [vmem:[%s588] sm:$0xff] %vm680, %v1073
        %s1077 = sand.u32 %s319, 1
        %s1078 = sand.u32 %s319, 1
        %s1079 = smul.addr %s1078, 8
        %s1080 = scalar_lea.vmem [#allocation4], %s1079
        %p1081 = scmp.lt.s32.totalorder %s28, 1
        %s1082 = scalar_select %p1081, %s28, 1
        %s1083 = smul.addr %s1082, 8
        %s1084 = scalar_lea.vmem %s15, %s1083
        // Predicated region
        $region149: #{_lambda_.15} parent=139 // pred_check
          %p1085 = pneg %p329
        $region150: #{_lambda_.15} parent=139 // pred_check_branch
          %1087 = sbr.rel (%p1085) target = $region152
        $region151: #{_lambda_.15} parent=139 // pred_region
          %s1088 = smul.addr %s28, 8
          %s1089 = scalar_lea.vmem %s17, %s1088
          // Predicated region
          $region153: #{_lambda_.15} parent=151 // pred_check
            _
          $region154: #{_lambda_.15} parent=151 // pred_check_branch
            %1091 = sbr.rel (0) target = $region156
          $region155: #{_lambda_.15} parent=151 // pred_region
            // Predicated region
            $region157: #{_lambda_.15} parent=155 // pred_check
              _
            $region158: #{_lambda_.15} parent=155 // pred_check_branch
              %1093 = sbr.rel (0) target = $region160
            $region159: #{_lambda_.15} parent=155 // pred_region
              // Predicated region
              $region172: #{_lambda_.15} parent=159 // pred_check
                _
              $region173: #{_lambda_.15} parent=159 // pred_check_branch
                %1109 = sbr.rel (0) target = $region175
              $region174: #{_lambda_.15} parent=159 // pred_region
                loop: start=0, step=1, limit=1
                $region176: #{_lambda_.15} parent=174 // loop_pre_header
                  _
                $region177: #{_lambda_.15} parent=174 // loop_header
                  %s1111 = sphi 0, %s1115
                  %p1112 = scmp.ge.s32.totalorder %s1111, 1
                  %s1116 = sphi %s1080, %s1080
                  %s1117 = sphi %s1089, %s1089
                $region178: #{_lambda_.15} parent=174 // loop_header_branch
                  %1114 = sbr.rel (%p1112) target = $region182
                $region179: #{_lambda_.15} parent=174 // loop_body
                  %v1118 = vld [vmem:[%s1116] sm:$0xff]
                  %1119 = vst [vmem:[%s1117] sm:$0xff] %v1118
                $region180: #{_lambda_.15} parent=174 // loop_footer
                  %s1115 = sadd.s32 1, %s1111
                $region181: #{_lambda_.15} parent=174 // loop_footer_branch
                  %1110 = sbr.rel target = $region177
                $region182: #{_lambda_.15} parent=174 // loop_exit
                  _
              $region175: #{_lambda_.15} parent=159 // pred_fallthru
                _
              // Predicated region
              $region183: #{_lambda_.15} parent=159 // pred_check
                _
              $region184: #{_lambda_.15} parent=159 // pred_check_branch
                %1121 = sbr.rel target = $region186
              $region185: #{_lambda_.15} parent=159 // pred_region
                _
              $region186: #{_lambda_.15} parent=159 // pred_fallthru
                _
            $region160: #{_lambda_.15} parent=155 // pred_fallthru
              _
            // Predicated region
            $region161: #{_lambda_.15} parent=155 // pred_check
              _
            $region162: #{_lambda_.15} parent=155 // pred_check_branch
              %1095 = sbr.rel target = $region164
            $region163: #{_lambda_.15} parent=155 // pred_region
              %s1097 = ssub.s32 256, 1
              loop: start=0, step=1, limit=1
              $region165: #{_lambda_.15} parent=163 // loop_pre_header
                _
              $region166: #{_lambda_.15} parent=163 // loop_header
                %s1099 = sphi 0, %s1103
                %p1100 = scmp.ge.s32.totalorder %s1099, 1
                %s1104 = sphi %s1080, %s1080
                %s1105 = sphi %s1089, %s1089
              $region167: #{_lambda_.15} parent=163 // loop_header_branch
                %1102 = sbr.rel (%p1100) target = $region171
              $region168: #{_lambda_.15} parent=163 // loop_body
                %v1106 = vld [vmem:[%s1104] sm:%s1097]
                %1107 = vst [vmem:[%s1105] sm:%s1097] %v1106
              $region169: #{_lambda_.15} parent=163 // loop_footer
                %s1103 = sadd.s32 1, %s1099
              $region170: #{_lambda_.15} parent=163 // loop_footer_branch
                %1098 = sbr.rel target = $region166
              $region171: #{_lambda_.15} parent=163 // loop_exit
                _
            $region164: #{_lambda_.15} parent=155 // pred_fallthru
              _
          $region156: #{_lambda_.15} parent=151 // pred_fallthru
            _
          %1122 = vnop
        $region152: #{_lambda_.15} parent=139 // pred_fallthru
          _
        // Predicated region
        $region187: #{_lambda_.15} parent=139 // pred_check
          %p1123 = pneg %p355
        $region188: #{_lambda_.15} parent=139 // pred_check_branch
          %1125 = sbr.rel (%p1123) target = $region190
        $region189: #{_lambda_.15} parent=139 // pred_region
          _
        $region190: #{_lambda_.15} parent=139 // pred_fallthru
          _
      $region140: #{_lambda_.15} parent=5 // pred_fallthru
        _
      %p1126 = scmp.le.s32.totalorder 2, %s23
      // Predicated region
      $region191: #{_lambda_.15} parent=5 // pred_check
        %p1127 = pneg %p1126
      $region192: #{_lambda_.15} parent=5 // pred_check_branch
        %1129 = sbr.rel (%p1127) target = $region194
      $region193: #{_lambda_.15} parent=5 // pred_region
        %s1130 = ssub.s32 %s23, 2
        // Predicated region
        $region195: #{_lambda_.15} parent=193 // pred_check
          %p1131 = pneg %p335
        $region196: #{_lambda_.15} parent=193 // pred_check_branch
          %1133 = sbr.rel (%p1131) target = $region198
        $region197: #{_lambda_.15} parent=193 // pred_region
          %s1134 = sand.u32 %s320, 1
          %s1135 = sand.u32 %s320, 1
          %s1136 = smul.addr %s1135, 8
          %s1137 = scalar_lea.vmem [#allocation4], %s1136
        $region198: #{_lambda_.15} parent=193 // pred_fallthru
          _
        // Predicated region
        $region199: #{_lambda_.15} parent=193 // pred_check
          %p1138 = pneg %p361
        $region200: #{_lambda_.15} parent=193 // pred_check_branch
          %1140 = sbr.rel (%p1138) target = $region202
        $region201: #{_lambda_.15} parent=193 // pred_region
          %p1141 = scmp.lt.s32.totalorder %s29, 1
          %s1142 = scalar_select %p1141, %s29, 1
          %s1143 = smul.addr %s1142, 8
          %s1144 = scalar_lea.vmem %s15, %s1143
        $region202: #{_lambda_.15} parent=193 // pred_fallthru
          _
      $region194: #{_lambda_.15} parent=5 // pred_fallthru
        _
    $region6: #{_lambda_.15} parent=1 // loop_footer
      %s27 = sadd.s32 1, %s23
    $region7: #{_lambda_.15} parent=1 // loop_footer_branch
      %22 = sbr.rel target = $region3
    $region8: #{_lambda_.15} parent=1 // loop_exit
      _

// kernel: _lambda_.14
$region0: #{_lambda_.14}
  #allocation0 [shape = 'u32[]', space=smem, size = 0x4, offset = 0x4, fixed_abs, tag = 'smem constant byte address 0x4 - core index']
  #allocation1 [shape = 'u32[72,128]{1,0:T(1,128)}', space=vmem, size = 0x9000, scoped, tag = 'internal scratch']
  %s0 = inlined_call_operand.vmem [shape: f32[6,16,16], index: 0, kind: input, shape index: {}, may-alias: {0,13}]
  %s1 = inlined_call_operand.vmem [shape: f32[6,16,32], index: 1, kind: input, shape index: {}]
  %s2 = inlined_call_operand.vmem [shape: f32[1,16], index: 2, kind: input, shape index: {}]
  %s3 = inlined_call_operand.vmem [shape: bf16[32,64], index: 3, kind: input, shape index: {}]
  %s4 = inlined_call_operand.vmem [shape: f32[1,64], index: 4, kind: input, shape index: {}]
  %s5 = inlined_call_operand.vmem [shape: f32[1,64], index: 5, kind: input, shape index: {}]
  %s6 = inlined_call_operand.vmem [shape: f32[1,64], index: 6, kind: input, shape index: {}]
  %s7 = inlined_call_operand.vmem [shape: f32[1,64], index: 7, kind: input, shape index: {}]
  %s8 = inlined_call_operand.vmem [shape: f32[1,64], index: 8, kind: input, shape index: {}]
  %s9 = inlined_call_operand.vmem [shape: bf16[64,32], index: 9, kind: input, shape index: {}]
  %s10 = inlined_call_operand.vmem [shape: f32[1,32], index: 10, kind: input, shape index: {}]
  %s11 = inlined_call_operand.vmem [shape: bf16[64,16], index: 11, kind: input, shape index: {}]
  %s12 = inlined_call_operand.vmem [shape: f32[1,16], index: 12, kind: input, shape index: {}]
  %s13 = inlined_call_operand.vmem [shape: f32[6,16,16], index: 13, kind: output, shape index: {0}, may-alias: {0,13}]
  %s14 = inlined_call_operand.vmem [shape: f32[16,32], index: 14, kind: output, shape index: {1}]
  %15 = xla_tuple %s13, %s14
  %s16 = scalar_lea.vmem %s13, 80
  %s17 = sld [smem:[#allocation0]]
  $region104: #{_lambda_.14} parent=0
    _
  %s19 = ssub.s32 1, %s17
  %s20 = scalar_select 0, %s19, %s17
  $region1: #{_lambda_.14} parent=0
    #allocation2 [shape = 'u8[8192]{0}', space=vmem, size = 0x2000, scoped, tag = 'output window, operand 0, single buffered']
    // Predicated region
    $region2: #{_lambda_.14} parent=1 // pred_check
      _
    $region3: #{_lambda_.14} parent=1 // pred_check_branch
      %22 = sbr.rel (0) target = $region5
    $region4: #{_lambda_.14} parent=1 // pred_region
      _
    $region5: #{_lambda_.14} parent=1 // pred_fallthru
      _
    // Predicated region
    $region6: #{_lambda_.14} parent=1 // pred_check
      _
    $region7: #{_lambda_.14} parent=1 // pred_check_branch
      %24 = sbr.rel (0) target = $region9
    $region8: #{_lambda_.14} parent=1 // pred_region
      _
    $region9: #{_lambda_.14} parent=1 // pred_fallthru
      _
    // Predicated region
    $region10: #{_lambda_.14} parent=1 // pred_check
      _
    $region11: #{_lambda_.14} parent=1 // pred_check_branch
      %26 = sbr.rel (0) target = $region13
    $region12: #{_lambda_.14} parent=1 // pred_region
      _
    $region13: #{_lambda_.14} parent=1 // pred_fallthru
      _
    // Predicated region
    $region14: #{_lambda_.14} parent=1 // pred_check
      _
    $region15: #{_lambda_.14} parent=1 // pred_check_branch
      %28 = sbr.rel (0) target = $region17
    $region16: #{_lambda_.14} parent=1 // pred_region
      _
    $region17: #{_lambda_.14} parent=1 // pred_fallthru
      _
    // Predicated region
    $region18: #{_lambda_.14} parent=1 // pred_check
      _
    $region19: #{_lambda_.14} parent=1 // pred_check_branch
      %30 = sbr.rel (0) target = $region21
    $region20: #{_lambda_.14} parent=1 // pred_region
      _
    $region21: #{_lambda_.14} parent=1 // pred_fallthru
      _
    // Predicated region
    $region22: #{_lambda_.14} parent=1 // pred_check
      _
    $region23: #{_lambda_.14} parent=1 // pred_check_branch
      %32 = sbr.rel (0) target = $region25
    $region24: #{_lambda_.14} parent=1 // pred_region
      _
    $region25: #{_lambda_.14} parent=1 // pred_fallthru
      _
    // Predicated region
    $region26: #{_lambda_.14} parent=1 // pred_check
      _
    $region27: #{_lambda_.14} parent=1 // pred_check_branch
      %34 = sbr.rel (0) target = $region29
    $region28: #{_lambda_.14} parent=1 // pred_region
      _
    $region29: #{_lambda_.14} parent=1 // pred_fallthru
      _
    // Predicated region
    $region30: #{_lambda_.14} parent=1 // pred_check
      _
    $region31: #{_lambda_.14} parent=1 // pred_check_branch
      %36 = sbr.rel (0) target = $region33
    $region32: #{_lambda_.14} parent=1 // pred_region
      _
    $region33: #{_lambda_.14} parent=1 // pred_fallthru
      _
    // Predicated region
    $region34: #{_lambda_.14} parent=1 // pred_check
      _
    $region35: #{_lambda_.14} parent=1 // pred_check_branch
      %38 = sbr.rel (0) target = $region37
    $region36: #{_lambda_.14} parent=1 // pred_region
      _
    $region37: #{_lambda_.14} parent=1 // pred_fallthru
      _
    // Predicated region
    $region38: #{_lambda_.14} parent=1 // pred_check
      _
    $region39: #{_lambda_.14} parent=1 // pred_check_branch
      %40 = sbr.rel (0) target = $region41
    $region40: #{_lambda_.14} parent=1 // pred_region
      _
    $region41: #{_lambda_.14} parent=1 // pred_fallthru
      _
    // Predicated region
    $region42: #{_lambda_.14} parent=1 // pred_check
      _
    $region43: #{_lambda_.14} parent=1 // pred_check_branch
      %42 = sbr.rel (0) target = $region45
    $region44: #{_lambda_.14} parent=1 // pred_region
      _
    $region45: #{_lambda_.14} parent=1 // pred_fallthru
      _
    // Predicated region
    $region46: #{_lambda_.14} parent=1 // pred_check
      _
    $region47: #{_lambda_.14} parent=1 // pred_check_branch
      %44 = sbr.rel (0) target = $region49
    $region48: #{_lambda_.14} parent=1 // pred_region
      _
    $region49: #{_lambda_.14} parent=1 // pred_fallthru
      _
    // Predicated region
    $region50: #{_lambda_.14} parent=1 // pred_check
      _
    $region51: #{_lambda_.14} parent=1 // pred_check_branch
      %46 = sbr.rel (0) target = $region53
    $region52: #{_lambda_.14} parent=1 // pred_region
      _
    $region53: #{_lambda_.14} parent=1 // pred_fallthru
      _
    %v48 = vld [vmem:[%s2] sm:$0x1]
    %v49 = vld [vmem:[%s0] sm:$0xff]
    %v50 = vld [vmem:[%s0 + $0x8] sm:$0xff]
    %v52 = vperm.slane %v48, 0
    %v54 = vmul.f32 %v49, %v52
    %v55 = vmul.f32 %v50, %v52
    %vm56 = vcmask 130048
    %v57 = vsel %vm56, %v54, 0.0
    %58 = vadd.xlane.f32.xlu0 %v57
    %v59 = vpop.xlane.xlu0 %58
    %v60 = vsel %vm56, %v55, 0.0
    %61 = vadd.xlane.f32.xlu0 %v60
    %v62 = vpop.xlane.xlu0 %61
    %v63 = vmul.f32 %v59, 0.25
    %v64 = vmul.f32 %v62, 0.25
    %s65 = scalar_lea.vmem %s0, 16
    %v66 = vld [vmem:[%s65] sm:$0xff]
    %v67 = vld [vmem:[%s65 + $0x8] sm:$0xff]
    %v68 = vmul.f32 %v66, %v52
    %v69 = vmul.f32 %v67, %v52
    %v70 = vsel %vm56, %v68, 0.0
    %71 = vadd.xlane.f32.xlu0 %v70
    %v72 = vpop.xlane.xlu0 %71
    %v73 = vsel %vm56, %v69, 0.0
    %74 = vadd.xlane.f32.xlu0 %v73
    %v75 = vpop.xlane.xlu0 %74
    %v76 = vmul.f32 %v72, 0.25
    %v77 = vmul.f32 %v75, 0.25
    %s78 = scalar_lea.vmem %s0, 32
    %v79 = vld [vmem:[%s78] sm:$0xff]
    %v80 = vld [vmem:[%s78 + $0x8] sm:$0xff]
    %v81 = vmul.f32 %v79, %v52
    %v82 = vmul.f32 %v80, %v52
    %v83 = vsel %vm56, %v81, 0.0
    %84 = vadd.xlane.f32.xlu0 %v83
    %v85 = vpop.xlane.xlu0 %84
    %v86 = vsel %vm56, %v82, 0.0
    %87 = vadd.xlane.f32.xlu0 %v86
    %v88 = vpop.xlane.xlu0 %87
    %v89 = vmul.f32 %v85, 0.25
    %v90 = vmul.f32 %v88, 0.25
    %s91 = scalar_lea.vmem %s0, 48
    %v92 = vld [vmem:[%s91] sm:$0xff]
    %v93 = vld [vmem:[%s91 + $0x8] sm:$0xff]
    %v94 = vmul.f32 %v92, %v52
    %v95 = vmul.f32 %v93, %v52
    %v96 = vsel %vm56, %v94, 0.0
    %97 = vadd.xlane.f32.xlu0 %v96
    %v98 = vpop.xlane.xlu0 %97
    %v99 = vsel %vm56, %v95, 0.0
    %100 = vadd.xlane.f32.xlu0 %v99
    %v101 = vpop.xlane.xlu0 %100
    %v102 = vmul.f32 %v98, 0.25
    %v103 = vmul.f32 %v101, 0.25
    %s104 = scalar_lea.vmem %s0, 64
    %v105 = vld [vmem:[%s104] sm:$0xff]
    %v106 = vld [vmem:[%s104 + $0x8] sm:$0xff]
    %v107 = vmul.f32 %v105, %v52
    %v108 = vmul.f32 %v106, %v52
    %v109 = vsel %vm56, %v107, 0.0
    %110 = vadd.xlane.f32.xlu0 %v109
    %v111 = vpop.xlane.xlu0 %110
    %v112 = vsel %vm56, %v108, 0.0
    %113 = vadd.xlane.f32.xlu0 %v112
    %v114 = vpop.xlane.xlu0 %113
    %v115 = vmul.f32 %v111, 0.25
    %v116 = vmul.f32 %v114, 0.25
    %v117 = vmax.f32 %v63, %v76
    %v118 = vmax.f32 %v64, %v77
    %v119 = vmax.f32 %v117, %v89
    %v120 = vmax.f32 %v118, %v90
    %v121 = vmax.f32 %v119, %v102
    %v122 = vmax.f32 %v120, %v103
    %v123 = vmax.f32 %v121, %v115
    %v124 = vmax.f32 %v122, %v116
    %v125 = vsub.f32 %v63, %v123
    %v126 = vsub.f32 %v64, %v124
    %v127 = vmul.f32 %v125, 1.442695
    %v128 = vpow.pop %v127
    %v129 = vmul.f32 %v126, 1.442695
    %v130 = vpow.pop %v129
    %v131 = vsub.f32 %v76, %v123
    %v132 = vsub.f32 %v77, %v124
    %v133 = vmul.f32 %v131, 1.442695
    %v134 = vpow.pop %v133
    %v135 = vmul.f32 %v132, 1.442695
    %v136 = vpow.pop %v135
    %v137 = vsub.f32 %v89, %v123
    %v138 = vsub.f32 %v90, %v124
    %v139 = vmul.f32 %v137, 1.442695
    %v140 = vpow.pop %v139
    %v141 = vmul.f32 %v138, 1.442695
    %v142 = vpow.pop %v141
    %v143 = vsub.f32 %v102, %v123
    %v144 = vsub.f32 %v103, %v124
    %v145 = vmul.f32 %v143, 1.442695
    %v146 = vpow.pop %v145
    %v147 = vmul.f32 %v144, 1.442695
    %v148 = vpow.pop %v147
    %v149 = vsub.f32 %v115, %v123
    %v150 = vsub.f32 %v116, %v124
    %v151 = vmul.f32 %v149, 1.442695
    %v152 = vpow.pop %v151
    %v153 = vmul.f32 %v150, 1.442695
    %v154 = vpow.pop %v153
    %v155 = vadd.f32 %v128, %v134
    %v156 = vadd.f32 %v130, %v136
    %v157 = vadd.f32 %v155, %v140
    %v158 = vadd.f32 %v156, %v142
    %v159 = vadd.f32 %v157, %v146
    %v160 = vadd.f32 %v158, %v148
    %v161 = vadd.f32 %v159, %v152
    %v162 = vadd.f32 %v160, %v154
    %v163 = vrcp.pop %v161
    %v164 = vrcp.pop %v162
    %v165 = vmul.f32 %v128, %v163
    %v166 = vmul.f32 %v130, %v164
    %v167 = vld [vmem:[%s1] sm:$0xff]
    %v168 = vld [vmem:[%s1 + $0x8] sm:$0xff]
    %v169 = vmul.f32 %v165, %v167
    %v170 = vmul.f32 %v166, %v168
    %v171 = vmul.f32 %v134, %v163
    %v172 = vmul.f32 %v136, %v164
    %s173 = scalar_lea.vmem %s1, 16
    %v174 = vld [vmem:[%s173] sm:$0xff]
    %v175 = vld [vmem:[%s173 + $0x8] sm:$0xff]
    %v176 = vmul.f32 %v171, %v174
    %v177 = vmul.f32 %v172, %v175
    %v178 = vadd.f32 %v169, %v176
    %v179 = vadd.f32 %v170, %v177
    %v180 = vmul.f32 %v140, %v163
    %v181 = vmul.f32 %v142, %v164
    %s182 = scalar_lea.vmem %s1, 32
    %v183 = vld [vmem:[%s182] sm:$0xff]
    %v184 = vld [vmem:[%s182 + $0x8] sm:$0xff]
    %v185 = vmul.f32 %v180, %v183
    %v186 = vmul.f32 %v181, %v184
    %v187 = vadd.f32 %v178, %v185
    %v188 = vadd.f32 %v179, %v186
    %v189 = vmul.f32 %v146, %v163
    %v190 = vmul.f32 %v148, %v164
    %s191 = scalar_lea.vmem %s1, 48
    %v192 = vld [vmem:[%s191] sm:$0xff]
    %v193 = vld [vmem:[%s191 + $0x8] sm:$0xff]
    %v194 = vmul.f32 %v189, %v192
    %v195 = vmul.f32 %v190, %v193
    %v196 = vadd.f32 %v187, %v194
    %v197 = vadd.f32 %v188, %v195
    %v198 = vmul.f32 %v152, %v163
    %v199 = vmul.f32 %v154, %v164
    %s200 = scalar_lea.vmem %s1, 64
    %v201 = vld [vmem:[%s200] sm:$0xff]
    %v202 = vld [vmem:[%s200 + $0x8] sm:$0xff]
    %v203 = vmul.f32 %v198, %v201
    %v204 = vmul.f32 %v199, %v202
    %v205 = vadd.f32 %v196, %v203
    %v206 = vadd.f32 %v197, %v204
    %v207 = vpack.c.bf16 %v206, %v205
    %v208 = vld [vmem:[%s3] sm:$0xf]
    %v209 = vld [vmem:[%s3 + $0x4] sm:$0xf]
    %v210 = vld [vmem:[%s3 + $0x8] sm:$0xf]
    %v211 = vld [vmem:[%s3 + $0xc] sm:$0xf]
    %v212 = vld [vmem:[%s4] sm:$0x1]
    %v214 = vperm.slane %v212, 0
    %v220 = vunpack.c.l.b16 %v208
    %v221 = vunpack.c.l.b16 %v209
    %v222 = vunpack.c.l.b16 %v210
    %v223 = vunpack.c.l.b16 %v211
    %v224 = vpack.c.b16 %v221, %v220
    %v225 = vpack.c.b16 %v223, %v222
    %vm228 = vcmask 261120
    %v230 = vsel %vm228, %v207, 0
    %232 = vmatpush.bf16.msra.mxu0 0
    %233 = vmatpush.bf16.msra.mxu0 0
    %234 = vmatpush.bf16.msra.mxu0 0
    %235 = vmatpush.bf16.msra.mxu0 0
    %236 = vmatpush.bf16.msra.mxu0 0
    %237 = vmatpush.bf16.msra.mxu0 0
    %238 = vmatpush.bf16.msra.mxu0 %v225
    %239 = vmatpush.bf16.msra.mxu0 %v224
    %240 = vmatmul.bf16.gmra.mxu0 %v230
    %v241 = vpop.f32.mrf.mxu0
    %v242 = vadd.f32 %v214, %v241
    %v243 = vpop.f32.mrf.mxu0
    %v244 = vadd.f32 %v214, %v243
    %245 = vdwg.mxu0
    %v246 = vld [vmem:[%s5] sm:$0x1]
    %v248 = vperm.slane %v246, 0
    %v250 = vmul.f32 %v242, %v248
    %v251 = vmul.f32 %v244, %v248
    %v252 = vld [vmem:[%s6] sm:$0x1]
    %v254 = vperm.slane %v252, 0
    %v256 = vadd.f32 %v250, %v254
    %v257 = vadd.f32 %v251, %v254
    %v258 = vxor.u32 %v256, 2147483648
    %v259 = vxor.u32 %v257, 2147483648
    %v260 = vmul.f32 %v258, 1.442695
    %v261 = vpow.pop %v260
    %v262 = vmul.f32 %v259, 1.442695
    %v263 = vpow.pop %v262
    %v264 = vadd.f32 %v261, 1.0
    %v265 = vadd.f32 %v263, 1.0
    %v266 = vrcp.pop %v264
    %v267 = vmul.f32 %v264, %v266
    %v268 = vsub.f32 1.0, %v267
    %v269 = vmul.f32 %v266, %v268
    %v270 = vadd.f32 %v266, %v269
    %vm271 = vweird.f32 %v264
    %vm272 = vweird.f32 %v266
    %vm273 = vmor %vm271, %vm272
    %v274 = vsel %vm273, %v266, %v270
    %v275 = vand.u32 2147483647, %v264
    %vm276 = vcmp.eq.f32.partialorder %v275, 8.507059e+37
    %v277 = vand.u32 %v264, 2147483648
    %v278 = vor.u32 1.1754944e-38, %v277
    %v279 = vsel %vm276, %v278, %v274
    %v280 = vmul.f32 1.0, %v279
    %v281 = vrcp.pop %v265
    %v282 = vmul.f32 %v265, %v281
    %v283 = vsub.f32 1.0, %v282
    %v284 = vmul.f32 %v281, %v283
    %v285 = vadd.f32 %v281, %v284
    %vm286 = vweird.f32 %v265
    %vm287 = vweird.f32 %v281
    %vm288 = vmor %vm286, %vm287
    %v289 = vsel %vm288, %v281, %v285
    %v290 = vand.u32 2147483647, %v265
    %vm291 = vcmp.eq.f32.partialorder %v290, 8.507059e+37
    %v292 = vand.u32 %v265, 2147483648
    %v293 = vor.u32 1.1754944e-38, %v292
    %v294 = vsel %vm291, %v293, %v289
    %v295 = vmul.f32 1.0, %v294
    %v296 = vmul.f32 %v280, %v242
    %v297 = vmul.f32 %v295, %v244
    %v298 = vld [vmem:[%s7] sm:$0x1]
    %v300 = vperm.slane %v298, 0
    %v302 = vmul.f32 %v242, %v300
    %v303 = vmul.f32 %v244, %v300
    %v304 = vld [vmem:[%s8] sm:$0x1]
    %v306 = vperm.slane %v304, 0
    %v308 = vadd.f32 %v302, %v306
    %v309 = vadd.f32 %v303, %v306
    %v310 = vxor.u32 %v308, 2147483648
    %v311 = vxor.u32 %v309, 2147483648
    %v312 = vmul.f32 %v310, 1.442695
    %v313 = vpow.pop %v312
    %v314 = vmul.f32 %v311, 1.442695
    %v315 = vpow.pop %v314
    %v316 = vadd.f32 %v313, 1.0
    %v317 = vadd.f32 %v315, 1.0
    %v318 = vrcp.pop %v316
    %v319 = vmul.f32 %v316, %v318
    %v320 = vsub.f32 1.0, %v319
    %v321 = vmul.f32 %v318, %v320
    %v322 = vadd.f32 %v318, %v321
    %vm323 = vweird.f32 %v316
    %vm324 = vweird.f32 %v318
    %vm325 = vmor %vm323, %vm324
    %v326 = vsel %vm325, %v318, %v322
    %v327 = vand.u32 2147483647, %v316
    %vm328 = vcmp.eq.f32.partialorder %v327, 8.507059e+37
    %v329 = vand.u32 %v316, 2147483648
    %v330 = vor.u32 1.1754944e-38, %v329
    %v331 = vsel %vm328, %v330, %v326
    %v332 = vmul.f32 1.0, %v331
    %v333 = vrcp.pop %v317
    %v334 = vmul.f32 %v317, %v333
    %v335 = vsub.f32 1.0, %v334
    %v336 = vmul.f32 %v333, %v335
    %v337 = vadd.f32 %v333, %v336
    %vm338 = vweird.f32 %v317
    %vm339 = vweird.f32 %v333
    %vm340 = vmor %vm338, %vm339
    %v341 = vsel %vm340, %v333, %v337
    %v342 = vand.u32 2147483647, %v317
    %vm343 = vcmp.eq.f32.partialorder %v342, 8.507059e+37
    %v344 = vand.u32 %v317, 2147483648
    %v345 = vor.u32 1.1754944e-38, %v344
    %v346 = vsel %vm343, %v345, %v341
    %v347 = vmul.f32 1.0, %v346
    %v348 = vmul.f32 %v332, %v242
    %v349 = vmul.f32 %v347, %v244
    %v350 = vpack.c.bf16 %v297, %v296
    %v351 = vld [vmem:[%s9] sm:$0xf]
    %v352 = vld [vmem:[%s9 + $0x4] sm:$0xf]
    %v353 = vld [vmem:[%s9 + $0x8] sm:$0xf]
    %v354 = vld [vmem:[%s9 + $0xc] sm:$0xf]
    %v355 = vld [vmem:[%s9 + $0x10] sm:$0xf]
    %v356 = vld [vmem:[%s9 + $0x14] sm:$0xf]
    %v357 = vld [vmem:[%s9 + $0x18] sm:$0xf]
    %v358 = vld [vmem:[%s9 + $0x1c] sm:$0xf]
    %v359 = vld [vmem:[%s10] sm:$0x1]
    %v361 = vperm.slane %v359, 0
    %v371 = vunpack.c.l.b16 %v351
    %v372 = vunpack.c.l.b16 %v352
    %v373 = vunpack.c.l.b16 %v353
    %v374 = vunpack.c.l.b16 %v354
    %v375 = vunpack.c.l.b16 %v355
    %v376 = vunpack.c.l.b16 %v356
    %v377 = vunpack.c.l.b16 %v357
    %v378 = vunpack.c.l.b16 %v358
    %v379 = vpack.c.b16 %v372, %v371
    %v380 = vpack.c.b16 %v374, %v373
    %v381 = vpack.c.b16 %v376, %v375
    %v382 = vpack.c.b16 %v378, %v377
    %vm387 = vcmask 523264
    %v389 = vsel %vm387, %v350, 0
    %391 = vmatpush.bf16.msra.mxu0 0
    %392 = vmatpush.bf16.msra.mxu0 0
    %393 = vmatpush.bf16.msra.mxu0 0
    %394 = vmatpush.bf16.msra.mxu0 0
    %395 = vmatpush.bf16.msra.mxu0 %v382
    %396 = vmatpush.bf16.msra.mxu0 %v381
    %397 = vmatpush.bf16.msra.mxu0 %v380
    %398 = vmatpush.bf16.msra.mxu0 %v379
    %399 = vmatmul.bf16.gmra.mxu0 %v389
    %v400 = vpop.f32.mrf.mxu0
    %v401 = vadd.f32 %v361, %v400
    %v402 = vpop.f32.mrf.mxu0
    %v403 = vadd.f32 %v361, %v402
    %404 = vdwg.mxu0
    %405 = vst.msk [vmem:[%s14] sm:$0xff] %vm228, %v401
    %406 = vst.msk [vmem:[%s14 + $0x8] sm:$0xff] %vm228, %v403
    %v407 = vpack.c.bf16 %v349, %v348
    %v408 = vld [vmem:[%s11] sm:$0xf]
    %v409 = vld [vmem:[%s11 + $0x4] sm:$0xf]
    %v410 = vld [vmem:[%s11 + $0x8] sm:$0xf]
    %v411 = vld [vmem:[%s11 + $0xc] sm:$0xf]
    %v412 = vld [vmem:[%s11 + $0x10] sm:$0xf]
    %v413 = vld [vmem:[%s11 + $0x14] sm:$0xf]
    %v414 = vld [vmem:[%s11 + $0x18] sm:$0xf]
    %v415 = vld [vmem:[%s11 + $0x1c] sm:$0xf]
    %v416 = vld [vmem:[%s12] sm:$0x1]
    %v418 = vperm.slane %v416, 0
    %v428 = vunpack.c.l.b16 %v408
    %v429 = vunpack.c.l.b16 %v409
    %v430 = vunpack.c.l.b16 %v410
    %v431 = vunpack.c.l.b16 %v411
    %v432 = vunpack.c.l.b16 %v412
    %v433 = vunpack.c.l.b16 %v413
    %v434 = vunpack.c.l.b16 %v414
    %v435 = vunpack.c.l.b16 %v415
    %v436 = vpack.c.b16 %v429, %v428
    %v437 = vpack.c.b16 %v431, %v430
    %v438 = vpack.c.b16 %v433, %v432
    %v439 = vpack.c.b16 %v435, %v434
    %v445 = vsel %vm387, %v407, 0
    %447 = vmatpush.bf16.msra.mxu0 0
    %448 = vmatpush.bf16.msra.mxu0 0
    %449 = vmatpush.bf16.msra.mxu0 0
    %450 = vmatpush.bf16.msra.mxu0 0
    %451 = vmatpush.bf16.msra.mxu0 %v439
    %452 = vmatpush.bf16.msra.mxu0 %v438
    %453 = vmatpush.bf16.msra.mxu0 %v437
    %454 = vmatpush.bf16.msra.mxu0 %v436
    %455 = vmatmul.bf16.gmra.mxu0 %v445
    %v456 = vpop.f32.mrf.mxu0
    %v457 = vadd.f32 %v418, %v456
    %v458 = vpop.f32.mrf.mxu0
    %v459 = vadd.f32 %v418, %v458
    %460 = vdwg.mxu0
    %461 = vst.msk [vmem:[#allocation2] sm:$0xff] %vm56, %v457
    %462 = vst.msk [vmem:[#allocation2 + $0x8] sm:$0xff] %vm56, %v459
    // Predicated region
    $region54: #{_lambda_.14} parent=1 // pred_check
      _
    $region55: #{_lambda_.14} parent=1 // pred_check_branch
      %464 = sbr.rel (0) target = $region57
    $region56: #{_lambda_.14} parent=1 // pred_region
      // Predicated region
      $region58: #{_lambda_.14} parent=56 // pred_check
        _
      $region59: #{_lambda_.14} parent=56 // pred_check_branch
        %466 = sbr.rel (0) target = $region61
      $region60: #{_lambda_.14} parent=56 // pred_region
        // Predicated region
        $region62: #{_lambda_.14} parent=60 // pred_check
          _
        $region63: #{_lambda_.14} parent=60 // pred_check_branch
          %468 = sbr.rel (0) target = $region65
        $region64: #{_lambda_.14} parent=60 // pred_region
          // Predicated region
          $region77: #{_lambda_.14} parent=64 // pred_check
            _
          $region78: #{_lambda_.14} parent=64 // pred_check_branch
            %486 = sbr.rel (0) target = $region80
          $region79: #{_lambda_.14} parent=64 // pred_region
            loop: start=0, step=1, limit=1
            $region81: #{_lambda_.14} parent=79 // loop_pre_header
              _
            $region82: #{_lambda_.14} parent=79 // loop_header
              %s488 = sphi 0, %s492
              %p489 = scmp.ge.s32.totalorder %s488, 1
              %s493 = sphi [#allocation2], [#allocation2]
              %s494 = sphi %s16, %s16
            $region83: #{_lambda_.14} parent=79 // loop_header_branch
              %491 = sbr.rel (%p489) target = $region87
            $region84: #{_lambda_.14} parent=79 // loop_body
              %v495 = vld [vmem:[%s493] sm:$0xff]
              %496 = vst [vmem:[%s494] sm:$0xff] %v495
              %v497 = vld [vmem:[%s493 + $0x8] sm:$0xff]
              %498 = vst [vmem:[%s494 + $0x8] sm:$0xff] %v497
            $region85: #{_lambda_.14} parent=79 // loop_footer
              %s492 = sadd.s32 1, %s488
            $region86: #{_lambda_.14} parent=79 // loop_footer_branch
              %487 = sbr.rel target = $region82
            $region87: #{_lambda_.14} parent=79 // loop_exit
              _
          $region80: #{_lambda_.14} parent=64 // pred_fallthru
            _
          // Predicated region
          $region88: #{_lambda_.14} parent=64 // pred_check
            _
          $region89: #{_lambda_.14} parent=64 // pred_check_branch
            %500 = sbr.rel target = $region91
          $region90: #{_lambda_.14} parent=64 // pred_region
            _
          $region91: #{_lambda_.14} parent=64 // pred_fallthru
            _
        $region65: #{_lambda_.14} parent=60 // pred_fallthru
          _
        // Predicated region
        $region66: #{_lambda_.14} parent=60 // pred_check
          _
        $region67: #{_lambda_.14} parent=60 // pred_check_branch
          %470 = sbr.rel target = $region69
        $region68: #{_lambda_.14} parent=60 // pred_region
          %s472 = ssub.s32 256, 1
          loop: start=0, step=1, limit=1
          $region70: #{_lambda_.14} parent=68 // loop_pre_header
            _
          $region71: #{_lambda_.14} parent=68 // loop_header
            %s474 = sphi 0, %s478
            %p475 = scmp.ge.s32.totalorder %s474, 1
            %s479 = sphi [#allocation2], [#allocation2]
            %s480 = sphi %s16, %s16
          $region72: #{_lambda_.14} parent=68 // loop_header_branch
            %477 = sbr.rel (%p475) target = $region76
          $region73: #{_lambda_.14} parent=68 // loop_body
            %v481 = vld [vmem:[%s479] sm:%s472]
            %482 = vst [vmem:[%s480] sm:%s472] %v481
            %v483 = vld [vmem:[%s479 + $0x8] sm:%s472]
            %484 = vst [vmem:[%s480 + $0x8] sm:%s472] %v483
          $region74: #{_lambda_.14} parent=68 // loop_footer
            %s478 = sadd.s32 1, %s474
          $region75: #{_lambda_.14} parent=68 // loop_footer_branch
            %473 = sbr.rel target = $region71
          $region76: #{_lambda_.14} parent=68 // loop_exit
            _
        $region69: #{_lambda_.14} parent=60 // pred_fallthru
          _
      $region61: #{_lambda_.14} parent=56 // pred_fallthru
        _
      %501 = vnop
    $region57: #{_lambda_.14} parent=1 // pred_fallthru
      _
    // Predicated region
    $region92: #{_lambda_.14} parent=1 // pred_check
      _
    $region93: #{_lambda_.14} parent=1 // pred_check_branch
      %503 = sbr.rel (0) target = $region95
    $region94: #{_lambda_.14} parent=1 // pred_region
      _
    $region95: #{_lambda_.14} parent=1 // pred_fallthru
      _
    // Predicated region
    $region96: #{_lambda_.14} parent=1 // pred_check
      _
    $region97: #{_lambda_.14} parent=1 // pred_check_branch
      %505 = sbr.rel (0) target = $region99
    $region98: #{_lambda_.14} parent=1 // pred_region
      _
    $region99: #{_lambda_.14} parent=1 // pred_fallthru
      _
    // Predicated region
    $region100: #{_lambda_.14} parent=1 // pred_check
      _
    $region101: #{_lambda_.14} parent=1 // pred_check_branch
      %507 = sbr.rel (0) target = $region103
    $region102: #{_lambda_.14} parent=1 // pred_region
      _
    $region103: #{_lambda_.14} parent=1 // pred_fallthru
      _

// kernel: _lambda_.13
$region0: #{_lambda_.13}
  #allocation0 [shape = 'u32[]', space=smem, size = 0x4, offset = 0x4, fixed_abs, tag = 'smem constant byte address 0x4 - core index']
  #allocation1 [shape = 'u32[72,128]{1,0:T(1,128)}', space=vmem, size = 0x9000, scoped, tag = 'internal scratch']
  %s0 = inlined_call_operand.vmem [shape: f32[2,64], index: 0, kind: input, shape index: {}]
  %s1 = inlined_call_operand.vmem [shape: bf16[64,10], index: 1, kind: input, shape index: {}]
  %s2 = inlined_call_operand.vmem [shape: f32[1,10], index: 2, kind: input, shape index: {}]
  %s3 = inlined_call_operand.hbm [shape: f32[2,10], index: 3, kind: output, shape index: {}]
  %s4 = sld [smem:[#allocation0]]
  $region22: #{_lambda_.13} parent=0
    _
  %s6 = ssub.s32 1, %s4
  %s7 = scalar_select 0, %s6, %s4
  $region1: #{_lambda_.13} parent=0
    #allocation2 [shape = 'u8[1024]{0}', space=vmem, size = 0x400, scoped, tag = 'output window, operand 0, single buffered']
    #allocation3 [shape = 's32[1]{0}', space=sflag, size = 0x4, scoped, tag = 'scoped memory for _lambda_.13']
    %8 = vsyncpa [#allocation3], 0
    // Predicated region
    $region2: #{_lambda_.13} parent=1 // pred_check
      _
    $region3: #{_lambda_.13} parent=1 // pred_check_branch
      %10 = sbr.rel (0) target = $region5
    $region4: #{_lambda_.13} parent=1 // pred_region
      _
    $region5: #{_lambda_.13} parent=1 // pred_fallthru
      _
    // Predicated region
    $region6: #{_lambda_.13} parent=1 // pred_check
      _
    $region7: #{_lambda_.13} parent=1 // pred_check_branch
      %12 = sbr.rel (0) target = $region9
    $region8: #{_lambda_.13} parent=1 // pred_region
      _
    $region9: #{_lambda_.13} parent=1 // pred_fallthru
      _
    // Predicated region
    $region10: #{_lambda_.13} parent=1 // pred_check
      _
    $region11: #{_lambda_.13} parent=1 // pred_check_branch
      %14 = sbr.rel (0) target = $region13
    $region12: #{_lambda_.13} parent=1 // pred_region
      _
    $region13: #{_lambda_.13} parent=1 // pred_fallthru
      _
    %v16 = vld [vmem:[%s0] sm:$0x3]
    %v17 = vpack.c.bf16 %v16, %v16
    %v18 = vld [vmem:[%s1] sm:$0xf]
    %v19 = vld [vmem:[%s1 + $0x4] sm:$0xf]
    %v20 = vld [vmem:[%s1 + $0x8] sm:$0xf]
    %v21 = vld [vmem:[%s1 + $0xc] sm:$0xf]
    %v22 = vld [vmem:[%s1 + $0x10] sm:$0xf]
    %v23 = vld [vmem:[%s1 + $0x14] sm:$0xf]
    %v24 = vld [vmem:[%s1 + $0x18] sm:$0xf]
    %v25 = vld [vmem:[%s1 + $0x1c] sm:$0xf]
    %v26 = vld [vmem:[%s2] sm:$0x1]
    %v28 = vperm.slane %v26, 0
    %v38 = vunpack.c.l.b16 %v18
    %v39 = vunpack.c.l.b16 %v19
    %v40 = vunpack.c.l.b16 %v20
    %v41 = vunpack.c.l.b16 %v21
    %v42 = vunpack.c.l.b16 %v22
    %v43 = vunpack.c.l.b16 %v23
    %v44 = vunpack.c.l.b16 %v24
    %v45 = vunpack.c.l.b16 %v25
    %v46 = vpack.c.b16 %v39, %v38
    %v47 = vpack.c.b16 %v41, %v40
    %v48 = vpack.c.b16 %v43, %v42
    %v49 = vpack.c.b16 %v45, %v44
    %vm54 = vcmask 523264
    %v56 = vsel %vm54, %v17, 0
    %58 = vmatpush.bf16.msra.mxu0 0
    %59 = vmatpush.bf16.msra.mxu0 0
    %60 = vmatpush.bf16.msra.mxu0 0
    %61 = vmatpush.bf16.msra.mxu0 0
    %62 = vmatpush.bf16.msra.mxu0 %v49
    %63 = vmatpush.bf16.msra.mxu0 %v48
    %64 = vmatpush.bf16.msra.mxu0 %v47
    %65 = vmatpush.bf16.msra.mxu0 %v46
    %66 = vmatmul.bf16.gmra.mxu0 %v56
    %v67 = vpop.f32.mrf.mxu0
    %v68 = vadd.f32 %v28, %v67
    %v69 = vpop.f32.mrf.mxu0
    %70 = vdwg.mxu0
    %vm71 = vcmask 74752
    %72 = vst.msk [vmem:[#allocation2] sm:$0x3] %vm71, %v68
    // Predicated region
    $region14: #{_lambda_.13} parent=1 // pred_check
      _
    $region15: #{_lambda_.13} parent=1 // pred_check_branch
      %74 = sbr.rel (0) target = $region17
    $region16: #{_lambda_.13} parent=1 // pred_region
      %76 = vsyncadd [#allocation3], 0
      %s78 = sshll.u32 [#allocation2], 4
      %s79 = int_to_ptr.vmem [resolvable:$true] %s78
      %s80 = sshll.u32 %s3, 4
      %s81 = int_to_ptr.hbm [resolvable:$true] %s80
      %83 = dma.vmem_to_hbm [thread:$0]  %s79, 32, %s81, [#allocation3]
    $region17: #{_lambda_.13} parent=1 // pred_fallthru
      _
    // Predicated region
    $region18: #{_lambda_.13} parent=1 // pred_check
      _
    $region19: #{_lambda_.13} parent=1 // pred_check_branch
      %85 = sbr.rel (0) target = $region21
    $region20: #{_lambda_.13} parent=1 // pred_region
      %87 = dma.done [#allocation3], 32
    $region21: #{_lambda_.13} parent=1 // pred_fallthru
      _
    %88 = vsyncpa [#allocation3], 1

// kernel: _lambda_.12
$region0: #{_lambda_.12}
  #allocation0 [shape = 'u32[]', space=smem, size = 0x4, offset = 0x4, fixed_abs, tag = 'smem constant byte address 0x4 - core index']
  #allocation1 [shape = 'u32[72,128]{1,0:T(1,128)}', space=vmem, size = 0x9000, scoped, tag = 'internal scratch']
  %s0 = inlined_call_operand.vmem [shape: f32[6,2,16], index: 0, kind: input, shape index: {}]
  %s1 = inlined_call_operand.vmem [shape: f32[6,2,32], index: 1, kind: input, shape index: {}]
  %s2 = inlined_call_operand.vmem [shape: f32[1,16], index: 2, kind: input, shape index: {}]
  %s3 = inlined_call_operand.vmem [shape: bf16[32,64], index: 3, kind: input, shape index: {}]
  %s4 = inlined_call_operand.vmem [shape: f32[1,64], index: 4, kind: input, shape index: {}]
  %s5 = inlined_call_operand.vmem [shape: f32[2,64], index: 5, kind: output, shape index: {}]
  %s6 = sld [smem:[#allocation0]]
  $region30: #{_lambda_.12} parent=0
    _
  %s8 = ssub.s32 1, %s6
  %s9 = scalar_select 0, %s8, %s6
  // Predicated region
  $region2: #{_lambda_.12} parent=0 // pred_check
    _
  $region3: #{_lambda_.12} parent=0 // pred_check_branch
    %11 = sbr.rel (0) target = $region5
  $region4: #{_lambda_.12} parent=0 // pred_region
    _
  $region5: #{_lambda_.12} parent=0 // pred_fallthru
    _
  // Predicated region
  $region6: #{_lambda_.12} parent=0 // pred_check
    _
  $region7: #{_lambda_.12} parent=0 // pred_check_branch
    %13 = sbr.rel (0) target = $region9
  $region8: #{_lambda_.12} parent=0 // pred_region
    _
  $region9: #{_lambda_.12} parent=0 // pred_fallthru
    _
  // Predicated region
  $region10: #{_lambda_.12} parent=0 // pred_check
    _
  $region11: #{_lambda_.12} parent=0 // pred_check_branch
    %15 = sbr.rel (0) target = $region13
  $region12: #{_lambda_.12} parent=0 // pred_region
    _
  $region13: #{_lambda_.12} parent=0 // pred_fallthru
    _
  // Predicated region
  $region14: #{_lambda_.12} parent=0 // pred_check
    _
  $region15: #{_lambda_.12} parent=0 // pred_check_branch
    %17 = sbr.rel (0) target = $region17
  $region16: #{_lambda_.12} parent=0 // pred_region
    _
  $region17: #{_lambda_.12} parent=0 // pred_fallthru
    _
  // Predicated region
  $region18: #{_lambda_.12} parent=0 // pred_check
    _
  $region19: #{_lambda_.12} parent=0 // pred_check_branch
    %19 = sbr.rel (0) target = $region21
  $region20: #{_lambda_.12} parent=0 // pred_region
    _
  $region21: #{_lambda_.12} parent=0 // pred_fallthru
    _
  %v21 = vld [vmem:[%s2] sm:$0x1]
  %v22 = vld [vmem:[%s0] sm:$0x3]
  %v24 = vperm.slane %v21, 0
  %v26 = vmul.f32 %v22, %v24
  %vm27 = vcmask 123904
  %v28 = vsel %vm27, %v26, 0.0
  %29 = vadd.xlane.f32.xlu0 %v28
  %v30 = vpop.xlane.xlu0 %29
  %v31 = vmul.f32 %v30, 0.25
  %s32 = scalar_lea.vmem %s0, 2
  %v33 = vld [vmem:[%s32] sm:$0x3]
  %v34 = vmul.f32 %v33, %v24
  %v35 = vsel %vm27, %v34, 0.0
  %36 = vadd.xlane.f32.xlu0 %v35
  %v37 = vpop.xlane.xlu0 %36
  %v38 = vmul.f32 %v37, 0.25
  %s39 = scalar_lea.vmem %s0, 4
  %v40 = vld [vmem:[%s39] sm:$0x3]
  %v41 = vmul.f32 %v40, %v24
  %v42 = vsel %vm27, %v41, 0.0
  %43 = vadd.xlane.f32.xlu0 %v42
  %v44 = vpop.xlane.xlu0 %43
  %v45 = vmul.f32 %v44, 0.25
  %s46 = scalar_lea.vmem %s0, 6
  %v47 = vld [vmem:[%s46] sm:$0x3]
  %v48 = vmul.f32 %v47, %v24
  %v49 = vsel %vm27, %v48, 0.0
  %50 = vadd.xlane.f32.xlu0 %v49
  %v51 = vpop.xlane.xlu0 %50
  %v52 = vmul.f32 %v51, 0.25
  %s53 = scalar_lea.vmem %s0, 8
  %v54 = vld [vmem:[%s53] sm:$0x3]
  %v55 = vmul.f32 %v54, %v24
  %v56 = vsel %vm27, %v55, 0.0
  %57 = vadd.xlane.f32.xlu0 %v56
  %v58 = vpop.xlane.xlu0 %57
  %v59 = vmul.f32 %v58, 0.25
  %s60 = scalar_lea.vmem %s0, 10
  %v61 = vld [vmem:[%s60] sm:$0x3]
  %v62 = vmul.f32 %v61, %v24
  %v63 = vsel %vm27, %v62, 0.0
  %64 = vadd.xlane.f32.xlu0 %v63
  %v65 = vpop.xlane.xlu0 %64
  %v66 = vmul.f32 %v65, 0.25
  %v67 = vmax.f32 %v31, %v38
  %v68 = vmax.f32 %v67, %v45
  %v69 = vmax.f32 %v68, %v52
  %v70 = vmax.f32 %v69, %v59
  %v71 = vmax.f32 %v70, %v66
  %v72 = vsub.f32 %v31, %v71
  %v73 = vmul.f32 %v72, 1.442695
  %v74 = vpow.pop %v73
  %v75 = vsub.f32 %v38, %v71
  %v76 = vmul.f32 %v75, 1.442695
  %v77 = vpow.pop %v76
  %v78 = vsub.f32 %v45, %v71
  %v79 = vmul.f32 %v78, 1.442695
  %v80 = vpow.pop %v79
  %v81 = vsub.f32 %v52, %v71
  %v82 = vmul.f32 %v81, 1.442695
  %v83 = vpow.pop %v82
  %v84 = vsub.f32 %v59, %v71
  %v85 = vmul.f32 %v84, 1.442695
  %v86 = vpow.pop %v85
  %v87 = vsub.f32 %v66, %v71
  %v88 = vmul.f32 %v87, 1.442695
  %v89 = vpow.pop %v88
  %v90 = vadd.f32 %v74, %v77
  %v91 = vadd.f32 %v90, %v80
  %v92 = vadd.f32 %v91, %v83
  %v93 = vadd.f32 %v92, %v86
  %v94 = vadd.f32 %v93, %v89
  %v95 = vrcp.pop %v94
  %v96 = vmul.f32 %v74, %v95
  %v97 = vld [vmem:[%s1] sm:$0x3]
  %v98 = vmul.f32 %v96, %v97
  %v99 = vmul.f32 %v77, %v95
  %s100 = scalar_lea.vmem %s1, 2
  %v101 = vld [vmem:[%s100] sm:$0x3]
  %v102 = vmul.f32 %v99, %v101
  %v103 = vadd.f32 %v98, %v102
  %v104 = vmul.f32 %v80, %v95
  %s105 = scalar_lea.vmem %s1, 4
  %v106 = vld [vmem:[%s105] sm:$0x3]
  %v107 = vmul.f32 %v104, %v106
  %v108 = vadd.f32 %v103, %v107
  %v109 = vmul.f32 %v83, %v95
  %s110 = scalar_lea.vmem %s1, 6
  %v111 = vld [vmem:[%s110] sm:$0x3]
  %v112 = vmul.f32 %v109, %v111
  %v113 = vadd.f32 %v108, %v112
  %v114 = vmul.f32 %v86, %v95
  %s115 = scalar_lea.vmem %s1, 8
  %v116 = vld [vmem:[%s115] sm:$0x3]
  %v117 = vmul.f32 %v114, %v116
  %v118 = vadd.f32 %v113, %v117
  %v119 = vmul.f32 %v89, %v95
  %s120 = scalar_lea.vmem %s1, 10
  %v121 = vld [vmem:[%s120] sm:$0x3]
  %v122 = vmul.f32 %v119, %v121
  %v123 = vadd.f32 %v118, %v122
  %v124 = vpack.c.bf16 %v123, %v123
  %v125 = vld [vmem:[%s3] sm:$0xf]
  %v126 = vld [vmem:[%s3 + $0x4] sm:$0xf]
  %v127 = vld [vmem:[%s3 + $0x8] sm:$0xf]
  %v128 = vld [vmem:[%s3 + $0xc] sm:$0xf]
  %v129 = vld [vmem:[%s4] sm:$0x1]
  %v131 = vperm.slane %v129, 0
  %v137 = vunpack.c.l.b16 %v125
  %v138 = vunpack.c.l.b16 %v126
  %v139 = vunpack.c.l.b16 %v127
  %v140 = vunpack.c.l.b16 %v128
  %v141 = vpack.c.b16 %v138, %v137
  %v142 = vpack.c.b16 %v140, %v139
  %vm145 = vcmask 261120
  %v147 = vsel %vm145, %v124, 0
  %149 = vmatpush.bf16.msra.mxu0 0
  %150 = vmatpush.bf16.msra.mxu0 0
  %151 = vmatpush.bf16.msra.mxu0 0
  %152 = vmatpush.bf16.msra.mxu0 0
  %153 = vmatpush.bf16.msra.mxu0 0
  %154 = vmatpush.bf16.msra.mxu0 0
  %155 = vmatpush.bf16.msra.mxu0 %v142
  %156 = vmatpush.bf16.msra.mxu0 %v141
  %157 = vmatmul.bf16.gmra.mxu0 %v147
  %v158 = vpop.f32.mrf.mxu0
  %v159 = vadd.f32 %v131, %v158
  %v160 = vpop.f32.mrf.mxu0
  %161 = vdwg.mxu0
  %vm162 = vcmask 517120
  %163 = vst.msk [vmem:[%s5] sm:$0x3] %vm162, %v159
  // Predicated region
  $region22: #{_lambda_.12} parent=0 // pred_check
    _
  $region23: #{_lambda_.12} parent=0 // pred_check_branch
    %165 = sbr.rel (0) target = $region25
  $region24: #{_lambda_.12} parent=0 // pred_region
    _
  $region25: #{_lambda_.12} parent=0 // pred_fallthru
    _
  // Predicated region
  $region26: #{_lambda_.12} parent=0 // pred_check
    _
  $region27: #{_lambda_.12} parent=0 // pred_check_branch
    %167 = sbr.rel (0) target = $region29
  $region28: #{_lambda_.12} parent=0 // pred_region
    _
  $region29: #{_lambda_.12} parent=0 // pred_fallthru
    _

</llo_original>
